<compile_context>
chip_gen: v7x
topology: tpu7x:2x2x1
jax: 0.10.0
libtpu: 0.0.40
codegen_flags: <defaults>
</compile_context>

<pallas_src>
import functools
import numpy as np
import jax
import jax.numpy as jnp
from jax.experimental import pallas as pl
from jax.experimental.pallas import tpu as pltpu


def _round_up(x, m):
    return ((x + m - 1) // m) * m


# ----------------------------------------------------------------------------
# Parameter / mask construction (plain JAX glue, mirrors the PyTorch __init__)
# ----------------------------------------------------------------------------
def make_conv_mask(c_out, c_in, kh, kw, mask_type):
    mask = np.ones((c_out, c_in, kh, kw), dtype=np.float32)
    cy, cx = kh // 2, kw // 2
    mask[:, :, cy + 1:, :] = 0
    mask[:, :, :, cx + 1:] = 0
    if mask_type == 'A':
        if c_in // 3:
            cic, coc = c_in // 3, c_out // 3
            mask[:, :, cy, cx] = 0
            mask[coc:2 * coc, :cic, cy, cx] = 1
            mask[2 * coc:3 * coc, :2 * cic, cy, cx] = 1
        if c_in == 1:
            mask[:, :, cy, cx] = 0
    elif c_in // 3:
        cic, coc = c_in // 3, c_out // 3
        mask[:, :, cy, cx] = 0
        mask[:coc, :cic, cy, cx] = 1
        mask[coc:2 * coc, :2 * cic, cy, cx] = 1
        mask[2 * coc:3 * coc, :, cy, cx] = 1
    return mask


def init_conv(key, c_out, c_in, kh, kw):
    fan_in = c_in * kh * kw
    bound = 1.0 / np.sqrt(fan_in)
    k1, k2 = jax.random.split(key)
    w = jax.random.uniform(k1, (c_out, c_in, kh, kw), jnp.float32, -bound, bound)
    b = jax.random.uniform(k2, (c_out,), jnp.float32, -bound, bound)
    return w, b


def init_pixel_rnn(key, in_channels, out_channels, hidden_dim, n_layers):
    F = hidden_dim
    Fp = _round_up(F, 128)                     # lane-aligned hidden width
    rgb = (in_channels == 3)

    # Gate permutation reproducing the torch.split / torch.cat regrouping:
    # conv output channels -> contiguous [f | i | o | g] (each r,g,b inside).
    if rgb:
        F3 = F // 3
        perm = np.zeros(4 * F, np.int32)
        for t in range(4):
            for k in range(3):
                perm[t * F + k * F3: t * F + (k + 1) * F3] = np.arange(
                    k * 4 * F3 + t * F3, k * 4 * F3 + (t + 1) * F3)
    else:
        perm = np.arange(4 * F, dtype=np.int32)
    perm = jnp.asarray(perm)

    def pad_gate_cols(m):
        """(..., 4F) in [f|i|o|g] order -> (..., 4*Fp), zero pad per gate."""
        parts = []
        for t in range(4):
            p = m[..., t * F:(t + 1) * F]
            pad = [(0, 0)] * (p.ndim - 1) + [(0, Fp - F)]
            parts.append(jnp.pad(p, pad))
        return jnp.concatenate(parts, axis=-1)

    keys = jax.random.split(key, 2 + 2 * n_layers)

    # ---- input conv: masked 7x7, type A, padding 3 -------------------------
    w_in, b_in = init_conv(keys[0], F, in_channels, 7, 7)
    w_in = w_in * jnp.asarray(make_conv_mask(F, in_channels, 7, 7, 'A'))
    w_in = jnp.pad(w_in, ((0, Fp - F), (0, 0), (0, 0), (0, 0)))     # (Fp,Cin,7,7)
    w_in_hwio = jnp.transpose(w_in, (2, 3, 1, 0))                   # (7,7,Cin,Fp)
    b_in_p = jnp.pad(b_in, (0, Fp - F))                             # (Fp,)
    # padded-lane invariant: padded output channels carry exactly zero
    assert not np.asarray(w_in_hwio)[..., F:].any()
    assert not np.asarray(b_in_p)[F:].any()
    input_conv = (w_in_hwio.astype(jnp.bfloat16), b_in_p)

    # ---- RowLSTM layers -----------------------------------------------------
    layers = []
    for l in range(n_layers):
        wi, bi = init_conv(keys[1 + 2 * l], 4 * F, F, 1, 3)   # input_to_state
        wi = wi * jnp.asarray(make_conv_mask(4 * F, F, 1, 3, 'B'))
        wi, bi = wi[perm], bi[perm]
        ws, bs = init_conv(keys[2 + 2 * l], 4 * F, F, 3, 1)   # state_to_state
        ws = ws[..., 0]                                       # Conv1d (4F, F, 3)
        ws, bs = ws[perm], bs[perm]

        # Per-tap (in, out) matrices; the masked 1x3 conv's k=2 tap is zero and
        # is pruned (bit-identical semantics).
        mats = [wi[:, :, 0, 0].T, wi[:, :, 0, 1].T,           # x[w-1], x[w]
                ws[:, :, 0].T, ws[:, :, 1].T, ws[:, :, 2].T]  # h[w-1], h[w], h[w+1]
        mats = [jnp.pad(pad_gate_cols(m), ((0, Fp - F), (0, 0))) for m in mats]
        w_big = jnp.concatenate(mats, axis=0)                 # (5Fp, 4Fp) f32
        bias = pad_gate_cols(bi + bs).reshape(1, 4 * Fp)      # (1, 4Fp) f32

        # padded-lane invariant: per-gate padded weight columns / bias entries
        # must be exactly zero (keeps padded lanes of the residual stream at 0).
        wb_np, b_np = np.asarray(w_big), np.asarray(bias)
        for t in range(4):
            assert not wb_np[:, t * Fp + F:(t + 1) * Fp].any()
            assert not b_np[0, t * Fp + F:(t + 1) * Fp].any()

        layers.append((w_big.astype(jnp.bfloat16), bias))

    # ---- output conv: masked 1x1, type B ------------------------------------
    w_out, b_out = init_conv(keys[1 + 2 * n_layers], out_channels, F, 1, 1)
    w_out = w_out * jnp.asarray(make_conv_mask(out_channels, F, 1, 1, 'B'))
    Np = _round_up(out_channels, 128)
    wmat_out = jnp.pad(w_out[:, :, 0, 0].T,
                       ((0, Fp - F), (0, Np - out_channels))).astype(jnp.bfloat16)
    bmat_out = jnp.pad(b_out, (0, Np - out_channels)).reshape(1, Np)

    params = {'input_conv': input_conv,
              'layers': layers,
              'output_conv': (wmat_out, bmat_out)}
    cfg = {'F': F, 'Fp': Fp, 'out_channels': out_channels}
    return params, cfg


# ----------------------------------------------------------------------------
# Pallas matmul kernel (output 1x1 conv)
# ----------------------------------------------------------------------------
def _matmul_bias_kernel(x_ref, w_ref, b_ref, o_ref):
    o_ref[...] = jnp.dot(x_ref[...], w_ref[...],
                         preferred_element_type=jnp.float32) + b_ref[...]


def pallas_matmul_bias(x, w, b, tile_m=512):
    """(M,K)bf16 @ (K,N)bf16 + (1,N)f32 -> (M,N)f32; K,N multiples of 128."""
    M, K = x.shape
    N = w.shape[1]
    # Prefer a tile that divides M exactly (no pad copy of the activations).
    tm = 0
    for t in range(8, min(tile_m, M) + 1, 8):
        if M % t == 0:
            tm = t
    if tm:
        Mp = M
    else:
        tm = min(tile_m, _round_up(M, 8))
        Mp = _round_up(M, tm)
        x = jnp.pad(x, ((0, Mp - M), (0, 0)))
    out = pl.pallas_call(
        _matmul_bias_kernel,
        out_shape=jax.ShapeDtypeStruct((Mp, N), jnp.float32),
        grid=(Mp // tm,),
        in_specs=[pl.BlockSpec((tm, K), lambda i: (i, 0)),
                  pl.BlockSpec((K, N), lambda i: (0, 0)),
                  pl.BlockSpec((1, N), lambda i: (0, 0))],
        out_specs=pl.BlockSpec((tm, N), lambda i: (i, 0)),
        compiler_params=pltpu.CompilerParams(
            dimension_semantics=("parallel",),
            vmem_limit_bytes=32 * 2 ** 20),
    )(x, w, b)
    return out[:M]


# ----------------------------------------------------------------------------
# Fused [masked 1x3 conv + RowLSTM + residual] kernel, grid = (B//Bb, H)
# Activations live in an (H, B*W, Fp) bf16 layout between layers.
# ----------------------------------------------------------------------------
def _rnn_vmem_bytes(M, Fp):
    io = 2 * 2 * M * Fp * 2                          # x + out, double-buffered bf16
    wgt = 2 * (5 * Fp * 4 * Fp * 2 + 4 * Fp * 4)     # weights + bias (2 bufs)
    scr = 4 * M * Fp * 4                             # h, c, ml, mr f32 scratch
    tmp = M * 5 * Fp * 2 + M * 4 * Fp * 4 + 6 * M * Fp * 4   # lhs/gates/temps
    return io + wgt + scr + tmp


def _pick_batch_block(B, W, Fp, target_rows=256, vmem_budget=20 * 2 ** 20,
                      num_cores=1):
    """Largest per-block batch Bb (divisor of B) within the VMEM budget; stop
    once Bb*W reaches target_rows.  On v7x (2 TensorCores/chip) pass
    num_cores=2 so the 'parallel' batch-block axis keeps >=1 block per core."""
    cap = max(1, B // max(1, num_cores))
    best = 1
    for bb in range(1, cap + 1):
        if B % bb:
            continue
        if (bb * W) % 8 and bb != B:      # keep the block second-minor dim tiled
            continue
        if _rnn_vmem_bytes(bb * W, Fp) > vmem_budget:
            break
        best = bb
        if bb * W >= target_rows:
            break
    if (best * W) % 8 and best != B:      # safety fallback for odd widths
        best = B
    return best


def _rnn_row_kernel(x_ref, w_ref, b_ref, o_ref, h_ref, c_ref, ml_ref, mr_ref,
                    *, W, M, Fp):
    # x_ref/o_ref: (1, M, Fp) bf16 — one image-row for each of Bb=M//W images
    #              (also the residual input).
    # w_ref: (5Fp,4Fp) bf16 — [Wi(x[w-1]); Wi(x[w]); Ws(h[w-1]); Ws(h); Ws(h[w+1])]
    # b_ref: (1,4Fp)  f32   — combined input/state bias, gate-padded
    # h_ref/c_ref: (M,Fp) f32 LSTM state; ml_ref/mr_ref: width-boundary masks.
    @pl.when(pl.program_id(1) == 0)       # first row of this batch block
    def _():
        h_ref[...] = jnp.zeros_like(h_ref)
        c_ref[...] = jnp.zeros_like(c_ref)
        r = jax.lax.broadcasted_iota(jnp.int32, (M, Fp), 0)
        left = (r == 0)
        right = (r == W - 1)
        for b in range(1, M // W):        # static unroll, no vector int div/mod
            left = jnp.logical_or(left, r == b * W)
            right = jnp.logical_or(right, r == b * W + W - 1)
        ml_ref[...] = jnp.where(left, 0.0, 1.0)
        mr_ref[...] = jnp.where(right, 0.0, 1.0)

    x_bf = x_ref[0]                       # (M, Fp) bf16
    x32 = x_bf.astype(jnp.float32)        # needed for the residual add anyway
    h32 = h_ref[...]
    ml = ml_ref[...]
    mr = mr_ref[...]

    # Width-shifted taps.  Conv zero-padding and cross-image leakage (rows of
    # different images are stacked in the block) are removed by the masks.
    # Taps are cast to bf16 *before* the concat so the LHS slab is half-width.
    x_l = (pltpu.roll(x32, shift=1, axis=0) * ml).astype(jnp.bfloat16)
    h_l = (pltpu.roll(h32, shift=1, axis=0) * ml).astype(jnp.bfloat16)
    h_r = (pltpu.roll(h32, shift=M - 1, axis=0) * mr).astype(jnp.bfloat16)

    # one fused MXU matmul: input_to_state (2 live taps) + state_to_state (3)
    lhs = jnp.concatenate([x_l, x_bf, h_l, h32.astype(jnp.bfloat16), h_r],
                          axis=-1)                                   # (M, 5Fp)
    gates = jnp.dot(lhs, w_ref[...], preferred_element_type=jnp.float32)
    gates = gates + b_ref[...]

    # sigmoid(x) == 0.5*(tanh(x/2)+1): one EUP op per gate instead of two
    f = 0.5 * (jnp.tanh(0.5 * gates[:, 0:Fp]) + 1.0)
    i = 0.5 * (jnp.tanh(0.5 * gates[:, Fp:2 * Fp]) + 1.0)
    o = 0.5 * (jnp.tanh(0.5 * gates[:, 2 * Fp:3 * Fp]) + 1.0)
    g = jnp.tanh(gates[:, 3 * Fp:4 * Fp])

    c_new = f * c_ref[...] + i * g
    h_new = o * jnp.tanh(c_new)
    c_ref[...] = c_new
    h_ref[...] = h_new
    o_ref[0] = (h_new + x32).astype(jnp.bfloat16)    # residual add fused in


def rnn_layer_fused(x, w_big, bias, *, Bb, W, Fp):
    """x: (H, B*W, Fp) bf16 -> (H, B*W, Fp) bf16."""
    H, BW, _ = x.shape
    M = Bb * W
    assert BW % M == 0
    nb = BW // M
    vmem_limit = int(min(64 * 2 ** 20, max(32 * 2 ** 20, 2 * _rnn_vmem_bytes(M, Fp))))
    # TODO(synk): on v7x, single-buffer the constant w_big/bias blocks with
    # pipeline_mode=pl.Buffered(1) to reclaim ~640 KiB VMEM per layer.
    return pl.pallas_call(
        functools.partial(_rnn_row_kernel, W=W, M=M, Fp=Fp),
        out_shape=jax.ShapeDtypeStruct((H, BW, Fp), jnp.bfloat16),
        grid=(nb, H),
        in_specs=[pl.BlockSpec((1, M, Fp), lambda b, r: (r, b, 0)),
                  pl.BlockSpec((5 * Fp, 4 * Fp), lambda b, r: (0, 0)),
                  pl.BlockSpec((1, 4 * Fp), lambda b, r: (0, 0))],
        out_specs=pl.BlockSpec((1, M, Fp), lambda b, r: (r, b, 0)),
        scratch_shapes=[pltpu.VMEM((M, Fp), jnp.float32),   # h state
                        pltpu.VMEM((M, Fp), jnp.float32),   # c state
                        pltpu.VMEM((M, Fp), jnp.float32),   # left-boundary mask
                        pltpu.VMEM((M, Fp), jnp.float32)],  # right-boundary mask
        compiler_params=pltpu.CompilerParams(
            dimension_semantics=("parallel", "arbitrary"),
            vmem_limit_bytes=vmem_limit),
    )(x, w_big, bias)


# ----------------------------------------------------------------------------
# Full PixelRNN forward
# ----------------------------------------------------------------------------
def pixel_rnn_forward(cfg, params, x_nchw, *, batch_block=None):
    F, Fp, Cout = cfg['F'], cfg['Fp'], cfg['out_channels']
    B, Cin, H, Wd = x_nchw.shape

    x = jnp.transpose(x_nchw, (0, 2, 3, 1))                    # NCHW -> NHWC

    # masked 7x7 conv (mask A, padding 3) + bias + relu, channels padded to Fp.
    # TODO(synk): done via lax.conv_general_dilated (no HBM im2col blow-up); a
    # fully-Pallas streamed-tap version would need overlapping-window blocks.
    w_in, b_in = params['input_conv']
    h0 = jax.lax.conv_general_dilated(
        x.astype(jnp.bfloat16), w_in, window_strides=(1, 1),
        padding=((3, 3), (3, 3)),
        dimension_numbers=('NHWC', 'HWIO', 'NHWC'),
        preferred_element_type=jnp.float32)
    h0 = jnp.maximum(h0 + b_in, 0.0).astype(jnp.bfloat16)      # (B,H,W,Fp) bf16

    # rows-major layout for the batch-blocked fused RowLSTM: (H, B*W, Fp)
    h = jnp.transpose(h0, (1, 0, 2, 3)).reshape(H, B * Wd, Fp)

    Bb = batch_block if batch_block is not None else _pick_batch_block(B, Wd, Fp)
    for (w_big, bias) in params['layers']:
        h = rnn_layer_fused(h, w_big, bias, Bb=Bb, W=Wd, Fp=Fp)

    # masked 1x1 conv (mask B); last layer already emits bf16 so no extra cast.
    w_out, b_out = params['output_conv']
    y = pallas_matmul_bias(h.reshape(H * B * Wd, Fp), w_out, b_out)
    y = y[:, :Cout].reshape(H, B, Wd, Cout)
    return jnp.transpose(y, (1, 3, 0, 2))                      # -> (B, Cout, H, W)


if __name__ == "__main__":
    key = jax.random.PRNGKey(0)
    kp, kx = jax.random.split(key)

    B, C, H, W = 2, 3, 8, 8
    hidden_dim = 96            # 3 * 32, divisible by 3 as the module requires
    n_layers = 2
    out_channels = 48          # 3 * 16

    params, cfg = init_pixel_rnn(kp, in_channels=C, out_channels=out_channels,
                                 hidden_dim=hidden_dim, n_layers=n_layers)
    x = jax.random.normal(kx, (B, C, H, W), jnp.float32)

    forward = jax.jit(functools.partial(pixel_rnn_forward, cfg))
    y = jax.block_until_ready(forward(params, x))

    assert y.shape == (B, out_channels, H, W), y.shape
    assert bool(jnp.all(jnp.isfinite(y)))
    print("KERNEL_OK")
</pallas_src>

<mosaic_0001>
module attributes {stable_mosaic.version = 11 : i64} {
  func.func @_rnn_row_kernel(%arg0: i32, %arg1: i32, %arg2: memref<1x16x128xbf16, #tpu.memory_space<vmem>>, %arg3: memref<640x512xbf16, #tpu.memory_space<vmem>>, %arg4: memref<1x512xf32, #tpu.memory_space<vmem>>, %arg5: memref<1x16x128xbf16, #tpu.memory_space<vmem>>, %arg6: memref<16x128xf32, #tpu.memory_space<vmem>>, %arg7: memref<16x128xf32, #tpu.memory_space<vmem>>, %arg8: memref<16x128xf32, #tpu.memory_space<vmem>>, %arg9: memref<16x128xf32, #tpu.memory_space<vmem>>) attributes {dimension_semantics = [#tpu.dimension_semantics<parallel>, #tpu.dimension_semantics<arbitrary>], iteration_bounds = array<i64: 1, 8>, scalar_prefetch = 0 : i64, scratch_operands = 4 : i64, tpu.core_type = #tpu.core_type<tc>, window_params = [{transform_indices = @transform_0, window_bounds = array<i64: 1, 16, 128>}, {pipeline_mode = #tpu.pipeline_mode<synchronous>, transform_indices = @transform_1, window_bounds = array<i64: 640, 512>}, {pipeline_mode = #tpu.pipeline_mode<synchronous>, transform_indices = @transform_2, window_bounds = array<i64: 1, 512>}, {transform_indices = @transform_3, window_bounds = array<i64: 1, 16, 128>}]} {
    %c0_i32 = arith.constant 0 : i32
    %0 = arith.cmpi eq, %arg1, %c0_i32 : i32
    %1 = arith.extui %0 : i1 to i32
    %c0_i32_0 = arith.constant 0 : i32
    %2 = arith.cmpi ne, %1, %c0_i32_0 : i32
    scf.if %2 {
      %cst_32 = arith.constant 0.000000e+00 : f32
      %64 = vector.broadcast %cst_32 : f32 to vector<16x128xf32>
      %c0_33 = arith.constant 0 : index
      %c0_34 = arith.constant 0 : index
      %65 = vector.load %arg6[%c0_33, %c0_34] : memref<16x128xf32, #tpu.memory_space<vmem>>, vector<16x128xf32>
      tpu.vector_store %arg6[%c0_33, %c0_34], %64 {strides = array<i32>} : memref<16x128xf32, #tpu.memory_space<vmem>>, vector<16x128xf32>,
      %cst_35 = arith.constant 0.000000e+00 : f32
      %66 = vector.broadcast %cst_35 : f32 to vector<16x128xf32>
      %c0_36 = arith.constant 0 : index
      %c0_37 = arith.constant 0 : index
      %67 = vector.load %arg7[%c0_36, %c0_37] : memref<16x128xf32, #tpu.memory_space<vmem>>, vector<16x128xf32>
      tpu.vector_store %arg7[%c0_36, %c0_37], %66 {strides = array<i32>} : memref<16x128xf32, #tpu.memory_space<vmem>>, vector<16x128xf32>,
      %68 = tpu.iota {dimensions = array<i32: 0>} : vector<16x128xi32>
      %c0_i32_38 = arith.constant 0 : i32
      %69 = vector.broadcast %c0_i32_38 : i32 to vector<16x128xi32>
      %70 = arith.cmpi eq, %68, %69 : vector<16x128xi32>
      %c7_i32 = arith.constant 7 : i32
      %71 = vector.broadcast %c7_i32 : i32 to vector<16x128xi32>
      %72 = arith.cmpi eq, %68, %71 : vector<16x128xi32>
      %c8_i32 = arith.constant 8 : i32
      %73 = vector.broadcast %c8_i32 : i32 to vector<16x128xi32>
      %74 = arith.cmpi eq, %68, %73 : vector<16x128xi32>
      %75 = arith.ori %70, %74 : vector<16x128xi1>
      %c15_i32_39 = arith.constant 15 : i32
      %76 = vector.broadcast %c15_i32_39 : i32 to vector<16x128xi32>
      %77 = arith.cmpi eq, %68, %76 : vector<16x128xi32>
      %78 = arith.ori %72, %77 : vector<16x128xi1>
      %cst_40 = arith.constant 0.000000e+00 : f32
      %cst_41 = arith.constant 1.000000e+00 : f32
      %79 = vector.broadcast %cst_40 : f32 to vector<16x128xf32>
      %80 = vector.broadcast %cst_41 : f32 to vector<16x128xf32>
      %81 = arith.select %75, %79, %80 : vector<16x128xi1>, vector<16x128xf32>
      %c0_42 = arith.constant 0 : index
      %c0_43 = arith.constant 0 : index
      %82 = vector.load %arg8[%c0_42, %c0_43] : memref<16x128xf32, #tpu.memory_space<vmem>>, vector<16x128xf32>
      tpu.vector_store %arg8[%c0_42, %c0_43], %81 {strides = array<i32>} : memref<16x128xf32, #tpu.memory_space<vmem>>, vector<16x128xf32>,
      %cst_44 = arith.constant 0.000000e+00 : f32
      %cst_45 = arith.constant 1.000000e+00 : f32
      %83 = vector.broadcast %cst_44 : f32 to vector<16x128xf32>
      %84 = vector.broadcast %cst_45 : f32 to vector<16x128xf32>
      %85 = arith.select %78, %83, %84 : vector<16x128xi1>, vector<16x128xf32>
      %c0_46 = arith.constant 0 : index
      %c0_47 = arith.constant 0 : index
      %86 = vector.load %arg9[%c0_46, %c0_47] : memref<16x128xf32, #tpu.memory_space<vmem>>, vector<16x128xf32>
      tpu.vector_store %arg9[%c0_46, %c0_47], %85 {strides = array<i32>} : memref<16x128xf32, #tpu.memory_space<vmem>>, vector<16x128xf32>,
    } else {
    }
    %c0 = arith.constant 0 : index
    %c0_1 = arith.constant 0 : index
    %c0_2 = arith.constant 0 : index
    %3 = vector.load %arg2[%c0, %c0_1, %c0_2] : memref<1x16x128xbf16, #tpu.memory_space<vmem>>, vector<1x16x128xbf16>
    %4 = vector.shape_cast %3 : vector<1x16x128xbf16> to vector<16x128xbf16>
    %5 = arith.extf %4 : vector<16x128xbf16> to vector<16x128xf32>
    %c0_3 = arith.constant 0 : index
    %c0_4 = arith.constant 0 : index
    %6 = vector.load %arg6[%c0_3, %c0_4] : memref<16x128xf32, #tpu.memory_space<vmem>>, vector<16x128xf32>
    %c0_5 = arith.constant 0 : index
    %c0_6 = arith.constant 0 : index
    %7 = vector.load %arg8[%c0_5, %c0_6] : memref<16x128xf32, #tpu.memory_space<vmem>>, vector<16x128xf32>
    %c0_7 = arith.constant 0 : index
    %c0_8 = arith.constant 0 : index
    %8 = vector.load %arg9[%c0_7, %c0_8] : memref<16x128xf32, #tpu.memory_space<vmem>>, vector<16x128xf32>
    %c1_i32 = arith.constant 1 : i32
    %9 = tpu.dynamic_rotate %5 by %c1_i32 dim 0 : vector<16x128xf32>, i32 -> vector<16x128xf32>
    %10 = arith.mulf %9, %7 : vector<16x128xf32>
    %11 = arith.truncf %10 : vector<16x128xf32> to vector<16x128xbf16>
    %c1_i32_9 = arith.constant 1 : i32
    %12 = tpu.dynamic_rotate %6 by %c1_i32_9 dim 0 : vector<16x128xf32>, i32 -> vector<16x128xf32>
    %13 = arith.mulf %12, %7 : vector<16x128xf32>
    %14 = arith.truncf %13 : vector<16x128xf32> to vector<16x128xbf16>
    %c15_i32 = arith.constant 15 : i32
    %15 = tpu.dynamic_rotate %6 by %c15_i32 dim 0 : vector<16x128xf32>, i32 -> vector<16x128xf32>
    %16 = arith.mulf %15, %8 : vector<16x128xf32>
    %17 = arith.truncf %16 : vector<16x128xf32> to vector<16x128xbf16>
    %18 = arith.truncf %6 : vector<16x128xf32> to vector<16x128xbf16>
    %19 = tpu.concatenate %11, %4, %14, %18, %17 in 1 : vector<16x128xbf16>, vector<16x128xbf16>, vector<16x128xbf16>, vector<16x128xbf16>, vector<16x128xbf16> -> vector<16x640xbf16>
    %c0_10 = arith.constant 0 : index
    %c0_11 = arith.constant 0 : index
    %20 = vector.load %arg3[%c0_10, %c0_11] : memref<640x512xbf16, #tpu.memory_space<vmem>>, vector<640x512xbf16>
    %cst = arith.constant dense<0.000000e+00> : vector<16x512xf32>
    %21 = tpu.matmul %19, %20, %cst {dimension_numbers = #tpu.dot_dimension_numbers<[1], [0], [0], [1], [0, 0, 1, 1], [], []>} : vector<16x640xbf16>, vector<640x512xbf16>, vector<16x512xf32> -> vector<16x512xf32>
    %c0_12 = arith.constant 0 : index
    %c0_13 = arith.constant 0 : index
    %22 = vector.load %arg4[%c0_12, %c0_13] : memref<1x512xf32, #tpu.memory_space<vmem>>, vector<1x512xf32>
    %23 = vector.broadcast %22 : vector<1x512xf32> to vector<16x512xf32>
    %24 = arith.addf %21, %23 : vector<16x512xf32>
    %25 = vector.extract_strided_slice %24 {offsets = [0, 0], sizes = [16, 128], strides = [1, 1]} : vector<16x512xf32> to vector<16x128xf32>
    %cst_14 = arith.constant 5.000000e-01 : f32
    %26 = vector.broadcast %cst_14 : f32 to vector<16x128xf32>
    %27 = arith.mulf %26, %25 : vector<16x128xf32>
    %28 = math.tanh %27 : vector<16x128xf32>
    %cst_15 = arith.constant 1.000000e+00 : f32
    %29 = vector.broadcast %cst_15 : f32 to vector<16x128xf32>
    %30 = arith.addf %28, %29 : vector<16x128xf32>
    %cst_16 = arith.constant 5.000000e-01 : f32
    %31 = vector.broadcast %cst_16 : f32 to vector<16x128xf32>
    %32 = arith.mulf %31, %30 : vector<16x128xf32>
    %33 = vector.extract_strided_slice %24 {offsets = [0, 128], sizes = [16, 128], strides = [1, 1]} : vector<16x512xf32> to vector<16x128xf32>
    %cst_17 = arith.constant 5.000000e-01 : f32
    %34 = vector.broadcast %cst_17 : f32 to vector<16x128xf32>
    %35 = arith.mulf %34, %33 : vector<16x128xf32>
    %36 = math.tanh %35 : vector<16x128xf32>
    %cst_18 = arith.constant 1.000000e+00 : f32
    %37 = vector.broadcast %cst_18 : f32 to vector<16x128xf32>
    %38 = arith.addf %36, %37 : vector<16x128xf32>
    %cst_19 = arith.constant 5.000000e-01 : f32
    %39 = vector.broadcast %cst_19 : f32 to vector<16x128xf32>
    %40 = arith.mulf %39, %38 : vector<16x128xf32>
    %41 = vector.extract_strided_slice %24 {offsets = [0, 256], sizes = [16, 128], strides = [1, 1]} : vector<16x512xf32> to vector<16x128xf32>
    %cst_20 = arith.constant 5.000000e-01 : f32
    %42 = vector.broadcast %cst_20 : f32 to vector<16x128xf32>
    %43 = arith.mulf %42, %41 : vector<16x128xf32>
    %44 = math.tanh %43 : vector<16x128xf32>
    %cst_21 = arith.constant 1.000000e+00 : f32
    %45 = vector.broadcast %cst_21 : f32 to vector<16x128xf32>
    %46 = arith.addf %44, %45 : vector<16x128xf32>
    %cst_22 = arith.constant 5.000000e-01 : f32
    %47 = vector.broadcast %cst_22 : f32 to vector<16x128xf32>
    %48 = arith.mulf %47, %46 : vector<16x128xf32>
    %49 = vector.extract_strided_slice %24 {offsets = [0, 384], sizes = [16, 128], strides = [1, 1]} : vector<16x512xf32> to vector<16x128xf32>
    %50 = math.tanh %49 : vector<16x128xf32>
    %c0_23 = arith.constant 0 : index
    %c0_24 = arith.constant 0 : index
    %51 = vector.load %arg7[%c0_23, %c0_24] : memref<16x128xf32, #tpu.memory_space<vmem>>, vector<16x128xf32>
    %52 = arith.mulf %32, %51 : vector<16x128xf32>
    %53 = arith.mulf %40, %50 : vector<16x128xf32>
    %54 = arith.addf %52, %53 : vector<16x128xf32>
    %55 = math.tanh %54 : vector<16x128xf32>
    %56 = arith.mulf %48, %55 : vector<16x128xf32>
    %c0_25 = arith.constant 0 : index
    %c0_26 = arith.constant 0 : index
    %57 = vector.load %arg7[%c0_25, %c0_26] : memref<16x128xf32, #tpu.memory_space<vmem>>, vector<16x128xf32>
    tpu.vector_store %arg7[%c0_25, %c0_26], %54 {strides = array<i32>} : memref<16x128xf32, #tpu.memory_space<vmem>>, vector<16x128xf32>,
    %c0_27 = arith.constant 0 : index
    %c0_28 = arith.constant 0 : index
    %58 = vector.load %arg6[%c0_27, %c0_28] : memref<16x128xf32, #tpu.memory_space<vmem>>, vector<16x128xf32>
    tpu.vector_store %arg6[%c0_27, %c0_28], %56 {strides = array<i32>} : memref<16x128xf32, #tpu.memory_space<vmem>>, vector<16x128xf32>,
    %59 = arith.addf %56, %5 : vector<16x128xf32>
    %60 = arith.truncf %59 : vector<16x128xf32> to vector<16x128xbf16>
    %c0_29 = arith.constant 0 : index
    %c0_30 = arith.constant 0 : index
    %c0_31 = arith.constant 0 : index
    %61 = vector.load %arg5[%c0_29, %c0_30, %c0_31] : memref<1x16x128xbf16, #tpu.memory_space<vmem>>, vector<1x16x128xbf16>
    %62 = vector.shape_cast %61 : vector<1x16x128xbf16> to vector<16x128xbf16>
    %63 = vector.shape_cast %60 : vector<16x128xbf16> to vector<1x16x128xbf16>
    tpu.vector_store %arg5[%c0_29, %c0_30, %c0_31], %63 {strides = array<i32>} : memref<1x16x128xbf16, #tpu.memory_space<vmem>>, vector<1x16x128xbf16>,
    return
  }
  func.func @transform_0(%arg0: i32, %arg1: i32) -> (i32, i32, i32) {
    %c0_i32 = arith.constant 0 : i32
    %c0_i32_0 = arith.constant 0 : i32
    return %arg1, %arg0, %c0_i32 : i32, i32, i32
  }
  func.func @transform_1(%arg0: i32, %arg1: i32) -> (i32, i32) {
    %c0_i32 = arith.constant 0 : i32
    %c0_i32_0 = arith.constant 0 : i32
    %c0_i32_1 = arith.constant 0 : i32
    return %c0_i32, %c0_i32_0 : i32, i32
  }
  func.func @transform_2(%arg0: i32, %arg1: i32) -> (i32, i32) {
    %c0_i32 = arith.constant 0 : i32
    %c0_i32_0 = arith.constant 0 : i32
    %c0_i32_1 = arith.constant 0 : i32
    return %c0_i32, %c0_i32_0 : i32, i32
  }
  func.func @transform_3(%arg0: i32, %arg1: i32) -> (i32, i32, i32) {
    %c0_i32 = arith.constant 0 : i32
    %c0_i32_0 = arith.constant 0 : i32
    return %arg1, %arg0, %c0_i32 : i32, i32, i32
  }
}

module attributes {stable_mosaic.version = 11 : i64} {
  func.func @_rnn_row_kernel(%arg0: i32, %arg1: i32, %arg2: memref<1x16x128xbf16, #tpu.memory_space<vmem>>, %arg3: memref<640x512xbf16, #tpu.memory_space<vmem>>, %arg4: memref<1x512xf32, #tpu.memory_space<vmem>>, %arg5: memref<1x16x128xbf16, #tpu.memory_space<vmem>>, %arg6: memref<16x128xf32, #tpu.memory_space<vmem>>, %arg7: memref<16x128xf32, #tpu.memory_space<vmem>>, %arg8: memref<16x128xf32, #tpu.memory_space<vmem>>, %arg9: memref<16x128xf32, #tpu.memory_space<vmem>>) attributes {dimension_semantics = [#tpu.dimension_semantics<parallel>, #tpu.dimension_semantics<arbitrary>], iteration_bounds = array<i64: 1, 8>, scalar_prefetch = 0 : i64, scratch_operands = 4 : i64, tpu.core_type = #tpu.core_type<tc>, window_params = [{transform_indices = @transform_0, window_bounds = array<i64: 1, 16, 128>}, {pipeline_mode = #tpu.pipeline_mode<synchronous>, transform_indices = @transform_1, window_bounds = array<i64: 640, 512>}, {pipeline_mode = #tpu.pipeline_mode<synchronous>, transform_indices = @transform_2, window_bounds = array<i64: 1, 512>}, {transform_indices = @transform_3, window_bounds = array<i64: 1, 16, 128>}]} {
    %c0_i32 = arith.constant 0 : i32
    %0 = arith.cmpi eq, %arg1, %c0_i32 : i32
    %1 = arith.extui %0 : i1 to i32
    %c0_i32_0 = arith.constant 0 : i32
    %2 = arith.cmpi ne, %1, %c0_i32_0 : i32
    scf.if %2 {
      %cst_32 = arith.constant 0.000000e+00 : f32
      %64 = vector.broadcast %cst_32 : f32 to vector<16x128xf32>
      %c0_33 = arith.constant 0 : index
      %c0_34 = arith.constant 0 : index
      %65 = vector.load %arg6[%c0_33, %c0_34] : memref<16x128xf32, #tpu.memory_space<vmem>>, vector<16x128xf32>
      tpu.vector_store %arg6[%c0_33, %c0_34], %64 {strides = array<i32>} : memref<16x128xf32, #tpu.memory_space<vmem>>, vector<16x128xf32>,
      %cst_35 = arith.constant 0.000000e+00 : f32
      %66 = vector.broadcast %cst_35 : f32 to vector<16x128xf32>
      %c0_36 = arith.constant 0 : index
      %c0_37 = arith.constant 0 : index
      %67 = vector.load %arg7[%c0_36, %c0_37] : memref<16x128xf32, #tpu.memory_space<vmem>>, vector<16x128xf32>
      tpu.vector_store %arg7[%c0_36, %c0_37], %66 {strides = array<i32>} : memref<16x128xf32, #tpu.memory_space<vmem>>, vector<16x128xf32>,
      %68 = tpu.iota {dimensions = array<i32: 0>} : vector<16x128xi32>
      %c0_i32_38 = arith.constant 0 : i32
      %69 = vector.broadcast %c0_i32_38 : i32 to vector<16x128xi32>
      %70 = arith.cmpi eq, %68, %69 : vector<16x128xi32>
      %c7_i32 = arith.constant 7 : i32
      %71 = vector.broadcast %c7_i32 : i32 to vector<16x128xi32>
      %72 = arith.cmpi eq, %68, %71 : vector<16x128xi32>
      %c8_i32 = arith.constant 8 : i32
      %73 = vector.broadcast %c8_i32 : i32 to vector<16x128xi32>
      %74 = arith.cmpi eq, %68, %73 : vector<16x128xi32>
      %75 = arith.ori %70, %74 : vector<16x128xi1>
      %c15_i32_39 = arith.constant 15 : i32
      %76 = vector.broadcast %c15_i32_39 : i32 to vector<16x128xi32>
      %77 = arith.cmpi eq, %68, %76 : vector<16x128xi32>
      %78 = arith.ori %72, %77 : vector<16x128xi1>
      %cst_40 = arith.constant 0.000000e+00 : f32
      %cst_41 = arith.constant 1.000000e+00 : f32
      %79 = vector.broadcast %cst_40 : f32 to vector<16x128xf32>
      %80 = vector.broadcast %cst_41 : f32 to vector<16x128xf32>
      %81 = arith.select %75, %79, %80 : vector<16x128xi1>, vector<16x128xf32>
      %c0_42 = arith.constant 0 : index
      %c0_43 = arith.constant 0 : index
      %82 = vector.load %arg8[%c0_42, %c0_43] : memref<16x128xf32, #tpu.memory_space<vmem>>, vector<16x128xf32>
      tpu.vector_store %arg8[%c0_42, %c0_43], %81 {strides = array<i32>} : memref<16x128xf32, #tpu.memory_space<vmem>>, vector<16x128xf32>,
      %cst_44 = arith.constant 0.000000e+00 : f32
      %cst_45 = arith.constant 1.000000e+00 : f32
      %83 = vector.broadcast %cst_44 : f32 to vector<16x128xf32>
      %84 = vector.broadcast %cst_45 : f32 to vector<16x128xf32>
      %85 = arith.select %78, %83, %84 : vector<16x128xi1>, vector<16x128xf32>
      %c0_46 = arith.constant 0 : index
      %c0_47 = arith.constant 0 : index
      %86 = vector.load %arg9[%c0_46, %c0_47] : memref<16x128xf32, #tpu.memory_space<vmem>>, vector<16x128xf32>
      tpu.vector_store %arg9[%c0_46, %c0_47], %85 {strides = array<i32>} : memref<16x128xf32, #tpu.memory_space<vmem>>, vector<16x128xf32>,
    } else {
    }
    %c0 = arith.constant 0 : index
    %c0_1 = arith.constant 0 : index
    %c0_2 = arith.constant 0 : index
    %3 = vector.load %arg2[%c0, %c0_1, %c0_2] : memref<1x16x128xbf16, #tpu.memory_space<vmem>>, vector<1x16x128xbf16>
    %4 = vector.shape_cast %3 : vector<1x16x128xbf16> to vector<16x128xbf16>
    %5 = arith.extf %4 : vector<16x128xbf16> to vector<16x128xf32>
    %c0_3 = arith.constant 0 : index
    %c0_4 = arith.constant 0 : index
    %6 = vector.load %arg6[%c0_3, %c0_4] : memref<16x128xf32, #tpu.memory_space<vmem>>, vector<16x128xf32>
    %c0_5 = arith.constant 0 : index
    %c0_6 = arith.constant 0 : index
    %7 = vector.load %arg8[%c0_5, %c0_6] : memref<16x128xf32, #tpu.memory_space<vmem>>, vector<16x128xf32>
    %c0_7 = arith.constant 0 : index
    %c0_8 = arith.constant 0 : index
    %8 = vector.load %arg9[%c0_7, %c0_8] : memref<16x128xf32, #tpu.memory_space<vmem>>, vector<16x128xf32>
    %c1_i32 = arith.constant 1 : i32
    %9 = tpu.dynamic_rotate %5 by %c1_i32 dim 0 : vector<16x128xf32>, i32 -> vector<16x128xf32>
    %10 = arith.mulf %9, %7 : vector<16x128xf32>
    %11 = arith.truncf %10 : vector<16x128xf32> to vector<16x128xbf16>
    %c1_i32_9 = arith.constant 1 : i32
    %12 = tpu.dynamic_rotate %6 by %c1_i32_9 dim 0 : vector<16x128xf32>, i32 -> vector<16x128xf32>
    %13 = arith.mulf %12, %7 : vector<16x128xf32>
    %14 = arith.truncf %13 : vector<16x128xf32> to vector<16x128xbf16>
    %c15_i32 = arith.constant 15 : i32
    %15 = tpu.dynamic_rotate %6 by %c15_i32 dim 0 : vector<16x128xf32>, i32 -> vector<16x128xf32>
    %16 = arith.mulf %15, %8 : vector<16x128xf32>
    %17 = arith.truncf %16 : vector<16x128xf32> to vector<16x128xbf16>
    %18 = arith.truncf %6 : vector<16x128xf32> to vector<16x128xbf16>
    %19 = tpu.concatenate %11, %4, %14, %18, %17 in 1 : vector<16x128xbf16>, vector<16x128xbf16>, vector<16x128xbf16>, vector<16x128xbf16>, vector<16x128xbf16> -> vector<16x640xbf16>
    %c0_10 = arith.constant 0 : index
    %c0_11 = arith.constant 0 : index
    %20 = vector.load %arg3[%c0_10, %c0_11] : memref<640x512xbf16, #tpu.memory_space<vmem>>, vector<640x512xbf16>
    %cst = arith.constant dense<0.000000e+00> : vector<16x512xf32>
    %21 = tpu.matmul %19, %20, %cst {dimension_numbers = #tpu.dot_dimension_numbers<[1], [0], [0], [1], [0, 0, 1, 1], [], []>} : vector<16x640xbf16>, vector<640x512xbf16>, vector<16x512xf32> -> vector<16x512xf32>
    %c0_12 = arith.constant 0 : index
    %c0_13 = arith.constant 0 : index
    %22 = vector.load %arg4[%c0_12, %c0_13] : memref<1x512xf32, #tpu.memory_space<vmem>>, vector<1x512xf32>
    %23 = vector.broadcast %22 : vector<1x512xf32> to vector<16x512xf32>
    %24 = arith.addf %21, %23 : vector<16x512xf32>
    %25 = vector.extract_strided_slice %24 {offsets = [0, 0], sizes = [16, 128], strides = [1, 1]} : vector<16x512xf32> to vector<16x128xf32>
    %cst_14 = arith.constant 5.000000e-01 : f32
    %26 = vector.broadcast %cst_14 : f32 to vector<16x128xf32>
    %27 = arith.mulf %26, %25 : vector<16x128xf32>
    %28 = math.tanh %27 : vector<16x128xf32>
    %cst_15 = arith.constant 1.000000e+00 : f32
    %29 = vector.broadcast %cst_15 : f32 to vector<16x128xf32>
    %30 = arith.addf %28, %29 : vector<16x128xf32>
    %cst_16 = arith.constant 5.000000e-01 : f32
    %31 = vector.broadcast %cst_16 : f32 to vector<16x128xf32>
    %32 = arith.mulf %31, %30 : vector<16x128xf32>
    %33 = vector.extract_strided_slice %24 {offsets = [0, 128], sizes = [16, 128], strides = [1, 1]} : vector<16x512xf32> to vector<16x128xf32>
    %cst_17 = arith.constant 5.000000e-01 : f32
    %34 = vector.broadcast %cst_17 : f32 to vector<16x128xf32>
    %35 = arith.mulf %34, %33 : vector<16x128xf32>
    %36 = math.tanh %35 : vector<16x128xf32>
    %cst_18 = arith.constant 1.000000e+00 : f32
    %37 = vector.broadcast %cst_18 : f32 to vector<16x128xf32>
    %38 = arith.addf %36, %37 : vector<16x128xf32>
    %cst_19 = arith.constant 5.000000e-01 : f32
    %39 = vector.broadcast %cst_19 : f32 to vector<16x128xf32>
    %40 = arith.mulf %39, %38 : vector<16x128xf32>
    %41 = vector.extract_strided_slice %24 {offsets = [0, 256], sizes = [16, 128], strides = [1, 1]} : vector<16x512xf32> to vector<16x128xf32>
    %cst_20 = arith.constant 5.000000e-01 : f32
    %42 = vector.broadcast %cst_20 : f32 to vector<16x128xf32>
    %43 = arith.mulf %42, %41 : vector<16x128xf32>
    %44 = math.tanh %43 : vector<16x128xf32>
    %cst_21 = arith.constant 1.000000e+00 : f32
    %45 = vector.broadcast %cst_21 : f32 to vector<16x128xf32>
    %46 = arith.addf %44, %45 : vector<16x128xf32>
    %cst_22 = arith.constant 5.000000e-01 : f32
    %47 = vector.broadcast %cst_22 : f32 to vector<16x128xf32>
    %48 = arith.mulf %47, %46 : vector<16x128xf32>
    %49 = vector.extract_strided_slice %24 {offsets = [0, 384], sizes = [16, 128], strides = [1, 1]} : vector<16x512xf32> to vector<16x128xf32>
    %50 = math.tanh %49 : vector<16x128xf32>
    %c0_23 = arith.constant 0 : index
    %c0_24 = arith.constant 0 : index
    %51 = vector.load %arg7[%c0_23, %c0_24] : memref<16x128xf32, #tpu.memory_space<vmem>>, vector<16x128xf32>
    %52 = arith.mulf %32, %51 : vector<16x128xf32>
    %53 = arith.mulf %40, %50 : vector<16x128xf32>
    %54 = arith.addf %52, %53 : vector<16x128xf32>
    %55 = math.tanh %54 : vector<16x128xf32>
    %56 = arith.mulf %48, %55 : vector<16x128xf32>
    %c0_25 = arith.constant 0 : index
    %c0_26 = arith.constant 0 : index
    %57 = vector.load %arg7[%c0_25, %c0_26] : memref<16x128xf32, #tpu.memory_space<vmem>>, vector<16x128xf32>
    tpu.vector_store %arg7[%c0_25, %c0_26], %54 {strides = array<i32>} : memref<16x128xf32, #tpu.memory_space<vmem>>, vector<16x128xf32>,
    %c0_27 = arith.constant 0 : index
    %c0_28 = arith.constant 0 : index
    %58 = vector.load %arg6[%c0_27, %c0_28] : memref<16x128xf32, #tpu.memory_space<vmem>>, vector<16x128xf32>
    tpu.vector_store %arg6[%c0_27, %c0_28], %56 {strides = array<i32>} : memref<16x128xf32, #tpu.memory_space<vmem>>, vector<16x128xf32>,
    %59 = arith.addf %56, %5 : vector<16x128xf32>
    %60 = arith.truncf %59 : vector<16x128xf32> to vector<16x128xbf16>
    %c0_29 = arith.constant 0 : index
    %c0_30 = arith.constant 0 : index
    %c0_31 = arith.constant 0 : index
    %61 = vector.load %arg5[%c0_29, %c0_30, %c0_31] : memref<1x16x128xbf16, #tpu.memory_space<vmem>>, vector<1x16x128xbf16>
    %62 = vector.shape_cast %61 : vector<1x16x128xbf16> to vector<16x128xbf16>
    %63 = vector.shape_cast %60 : vector<16x128xbf16> to vector<1x16x128xbf16>
    tpu.vector_store %arg5[%c0_29, %c0_30, %c0_31], %63 {strides = array<i32>} : memref<1x16x128xbf16, #tpu.memory_space<vmem>>, vector<1x16x128xbf16>,
    return
  }
  func.func @transform_0(%arg0: i32, %arg1: i32) -> (i32, i32, i32) {
    %c0_i32 = arith.constant 0 : i32
    %c0_i32_0 = arith.constant 0 : i32
    return %arg1, %arg0, %c0_i32 : i32, i32, i32
  }
  func.func @transform_1(%arg0: i32, %arg1: i32) -> (i32, i32) {
    %c0_i32 = arith.constant 0 : i32
    %c0_i32_0 = arith.constant 0 : i32
    %c0_i32_1 = arith.constant 0 : i32
    return %c0_i32, %c0_i32_0 : i32, i32
  }
  func.func @transform_2(%arg0: i32, %arg1: i32) -> (i32, i32) {
    %c0_i32 = arith.constant 0 : i32
    %c0_i32_0 = arith.constant 0 : i32
    %c0_i32_1 = arith.constant 0 : i32
    return %c0_i32, %c0_i32_0 : i32, i32
  }
  func.func @transform_3(%arg0: i32, %arg1: i32) -> (i32, i32, i32) {
    %c0_i32 = arith.constant 0 : i32
    %c0_i32_0 = arith.constant 0 : i32
    return %arg1, %arg0, %c0_i32 : i32, i32, i32
  }
}

module attributes {stable_mosaic.version = 11 : i64} {
  func.func @_matmul_bias_kernel(%arg0: i32, %arg1: memref<128x128xbf16, #tpu.memory_space<vmem>>, %arg2: memref<128x128xbf16, #tpu.memory_space<vmem>>, %arg3: memref<1x128xf32, #tpu.memory_space<vmem>>, %arg4: memref<128x128xf32, #tpu.memory_space<vmem>>) attributes {dimension_semantics = [#tpu.dimension_semantics<parallel>], iteration_bounds = array<i64: 1>, scalar_prefetch = 0 : i64, scratch_operands = 0 : i64, tpu.core_type = #tpu.core_type<tc>, window_params = [{transform_indices = @transform_0, window_bounds = array<i64: 128, 128>}, {pipeline_mode = #tpu.pipeline_mode<synchronous>, transform_indices = @transform_1, window_bounds = array<i64: 128, 128>}, {pipeline_mode = #tpu.pipeline_mode<synchronous>, transform_indices = @transform_2, window_bounds = array<i64: 1, 128>}, {transform_indices = @transform_3, window_bounds = array<i64: 128, 128>}]} {
    %c0 = arith.constant 0 : index
    %c0_0 = arith.constant 0 : index
    %0 = vector.load %arg1[%c0, %c0_0] : memref<128x128xbf16, #tpu.memory_space<vmem>>, vector<128x128xbf16>
    %c0_1 = arith.constant 0 : index
    %c0_2 = arith.constant 0 : index
    %1 = vector.load %arg2[%c0_1, %c0_2] : memref<128x128xbf16, #tpu.memory_space<vmem>>, vector<128x128xbf16>
    %cst = arith.constant dense<0.000000e+00> : vector<128x128xf32>
    %2 = tpu.matmul %0, %1, %cst {dimension_numbers = #tpu.dot_dimension_numbers<[1], [0], [0], [1], [0, 0, 1, 1], [], []>} : vector<128x128xbf16>, vector<128x128xbf16>, vector<128x128xf32> -> vector<128x128xf32>
    %c0_3 = arith.constant 0 : index
    %c0_4 = arith.constant 0 : index
    %3 = vector.load %arg3[%c0_3, %c0_4] : memref<1x128xf32, #tpu.memory_space<vmem>>, vector<1x128xf32>
    %4 = vector.broadcast %3 : vector<1x128xf32> to vector<128x128xf32>
    %5 = arith.addf %2, %4 : vector<128x128xf32>
    %c0_5 = arith.constant 0 : index
    %c0_6 = arith.constant 0 : index
    %6 = vector.load %arg4[%c0_5, %c0_6] : memref<128x128xf32, #tpu.memory_space<vmem>>, vector<128x128xf32>
    tpu.vector_store %arg4[%c0_5, %c0_6], %5 {strides = array<i32>} : memref<128x128xf32, #tpu.memory_space<vmem>>, vector<128x128xf32>,
    return
  }
  func.func @transform_0(%arg0: i32) -> (i32, i32) {
    %c0_i32 = arith.constant 0 : i32
    %c0_i32_0 = arith.constant 0 : i32
    return %arg0, %c0_i32 : i32, i32
  }
  func.func @transform_1(%arg0: i32) -> (i32, i32) {
    %c0_i32 = arith.constant 0 : i32
    %c0_i32_0 = arith.constant 0 : i32
    %c0_i32_1 = arith.constant 0 : i32
    return %c0_i32, %c0_i32_0 : i32, i32
  }
  func.func @transform_2(%arg0: i32) -> (i32, i32) {
    %c0_i32 = arith.constant 0 : i32
    %c0_i32_0 = arith.constant 0 : i32
    %c0_i32_1 = arith.constant 0 : i32
    return %c0_i32, %c0_i32_0 : i32, i32
  }
  func.func @transform_3(%arg0: i32) -> (i32, i32) {
    %c0_i32 = arith.constant 0 : i32
    %c0_i32_0 = arith.constant 0 : i32
    return %arg0, %c0_i32 : i32, i32
  }
}

</mosaic_0001>

<llo_original>
// kernel: pixel_rnn_forward.5
$region0: #{pixel_rnn_forward.5}
  #allocation0 [shape = 'u32[]', space=smem, size = 0x4, offset = 0x4, fixed_abs, tag = 'smem constant byte address 0x4 - core index']
  #allocation1 [shape = 'u32[144,128]{1,0:T(1,128)}', space=vmem, size = 0x12000, scoped, tag = 'internal scratch']
  %s0 = inlined_call_operand.vmem [shape: bf16[128,128], index: 0, kind: input, shape index: {}]
  %s1 = inlined_call_operand.vmem [shape: bf16[128,128], index: 1, kind: input, shape index: {}]
  %s2 = inlined_call_operand.vmem [shape: f32[1,128], index: 2, kind: input, shape index: {}]
  %s3 = inlined_call_operand.vmem [shape: f32[128,128], index: 3, kind: output, shape index: {}]
  %s4 = sld [smem:[#allocation0]]
  $region22: #{pixel_rnn_forward.5} parent=0
    _
  %s6 = ssub.s32 1, %s4
  %s7 = scalar_select 0, %s6, %s4
  // Predicated region
  $region2: #{pixel_rnn_forward.5} parent=0 // pred_check
    _
  $region3: #{pixel_rnn_forward.5} parent=0 // pred_check_branch
    %9 = sbr.rel (0) target = $region5
  $region4: #{pixel_rnn_forward.5} parent=0 // pred_region
    _
  $region5: #{pixel_rnn_forward.5} parent=0 // pred_fallthru
    _
  // Predicated region
  $region6: #{pixel_rnn_forward.5} parent=0 // pred_check
    _
  $region7: #{pixel_rnn_forward.5} parent=0 // pred_check_branch
    %11 = sbr.rel (0) target = $region9
  $region8: #{pixel_rnn_forward.5} parent=0 // pred_region
    _
  $region9: #{pixel_rnn_forward.5} parent=0 // pred_fallthru
    _
  // Predicated region
  $region10: #{pixel_rnn_forward.5} parent=0 // pred_check
    _
  $region11: #{pixel_rnn_forward.5} parent=0 // pred_check_branch
    %13 = sbr.rel (0) target = $region13
  $region12: #{pixel_rnn_forward.5} parent=0 // pred_region
    _
  $region13: #{pixel_rnn_forward.5} parent=0 // pred_fallthru
    _
  %v15 = vld [vmem:[%s0] sm:$0xf]
  %v16 = vld [vmem:[%s0 + $0x4] sm:$0xf]
  %v17 = vld [vmem:[%s0 + $0x8] sm:$0xf]
  %v18 = vld [vmem:[%s0 + $0xc] sm:$0xf]
  %v19 = vld [vmem:[%s0 + $0x10] sm:$0xf]
  %v20 = vld [vmem:[%s0 + $0x14] sm:$0xf]
  %v21 = vld [vmem:[%s0 + $0x18] sm:$0xf]
  %v22 = vld [vmem:[%s0 + $0x1c] sm:$0xf]
  %v23 = vld [vmem:[%s0 + $0x20] sm:$0xf]
  %v24 = vld [vmem:[%s0 + $0x24] sm:$0xf]
  %v25 = vld [vmem:[%s0 + $0x28] sm:$0xf]
  %v26 = vld [vmem:[%s0 + $0x2c] sm:$0xf]
  %v27 = vld [vmem:[%s0 + $0x30] sm:$0xf]
  %v28 = vld [vmem:[%s0 + $0x34] sm:$0xf]
  %v29 = vld [vmem:[%s0 + $0x38] sm:$0xf]
  %v30 = vld [vmem:[%s0 + $0x3c] sm:$0xf]
  %v31 = vld [vmem:[%s1] sm:$0xf]
  %v32 = vld [vmem:[%s1 + $0x4] sm:$0xf]
  %v33 = vld [vmem:[%s1 + $0x8] sm:$0xf]
  %v34 = vld [vmem:[%s1 + $0xc] sm:$0xf]
  %v35 = vld [vmem:[%s1 + $0x10] sm:$0xf]
  %v36 = vld [vmem:[%s1 + $0x14] sm:$0xf]
  %v37 = vld [vmem:[%s1 + $0x18] sm:$0xf]
  %v38 = vld [vmem:[%s1 + $0x1c] sm:$0xf]
  %v39 = vld [vmem:[%s1 + $0x20] sm:$0xf]
  %v40 = vld [vmem:[%s1 + $0x24] sm:$0xf]
  %v41 = vld [vmem:[%s1 + $0x28] sm:$0xf]
  %v42 = vld [vmem:[%s1 + $0x2c] sm:$0xf]
  %v43 = vld [vmem:[%s1 + $0x30] sm:$0xf]
  %v44 = vld [vmem:[%s1 + $0x34] sm:$0xf]
  %v45 = vld [vmem:[%s1 + $0x38] sm:$0xf]
  %v46 = vld [vmem:[%s1 + $0x3c] sm:$0xf]
  %v47 = vld [vmem:[%s2] sm:$0x1]
  %v49 = vlaneseq
  %v50 = vshrl.u32 %v49, 7
  %v51 = vsub.s32 0, %v50
  %v52 = vrot.slane %v47, %v51
  %v70 = vunpack.c.l.b16 %v15
  %v71 = vunpack.c.l.b16 %v16
  %v72 = vunpack.c.l.b16 %v17
  %v73 = vunpack.c.l.b16 %v18
  %v74 = vunpack.c.l.b16 %v19
  %v75 = vunpack.c.l.b16 %v20
  %v76 = vunpack.c.l.b16 %v21
  %v77 = vunpack.c.l.b16 %v22
  %v78 = vunpack.c.l.b16 %v23
  %v79 = vunpack.c.l.b16 %v24
  %v80 = vunpack.c.l.b16 %v25
  %v81 = vunpack.c.l.b16 %v26
  %v82 = vunpack.c.l.b16 %v27
  %v83 = vunpack.c.l.b16 %v28
  %v84 = vunpack.c.l.b16 %v29
  %v85 = vunpack.c.l.b16 %v30
  %v86 = vpack.c.b16 %v71, %v70
  %v87 = vpack.c.b16 %v73, %v72
  %v88 = vpack.c.b16 %v75, %v74
  %v89 = vpack.c.b16 %v77, %v76
  %v90 = vpack.c.b16 %v79, %v78
  %v91 = vpack.c.b16 %v81, %v80
  %v92 = vpack.c.b16 %v83, %v82
  %v93 = vpack.c.b16 %v85, %v84
  %v118 = vunpack.c.l.b16 %v31
  %v119 = vunpack.c.l.b16 %v32
  %v120 = vunpack.c.l.b16 %v33
  %v121 = vunpack.c.l.b16 %v34
  %v122 = vunpack.c.l.b16 %v35
  %v123 = vunpack.c.l.b16 %v36
  %v124 = vunpack.c.l.b16 %v37
  %v125 = vunpack.c.l.b16 %v38
  %v126 = vunpack.c.l.b16 %v39
  %v127 = vunpack.c.l.b16 %v40
  %v128 = vunpack.c.l.b16 %v41
  %v129 = vunpack.c.l.b16 %v42
  %v130 = vunpack.c.l.b16 %v43
  %v131 = vunpack.c.l.b16 %v44
  %v132 = vunpack.c.l.b16 %v45
  %v133 = vunpack.c.l.b16 %v46
  %v134 = vpack.c.b16 %v119, %v118
  %v135 = vpack.c.b16 %v121, %v120
  %v136 = vpack.c.b16 %v123, %v122
  %v137 = vpack.c.b16 %v125, %v124
  %v138 = vpack.c.b16 %v127, %v126
  %v139 = vpack.c.b16 %v129, %v128
  %v140 = vpack.c.b16 %v131, %v130
  %v141 = vpack.c.b16 %v133, %v132
  %150 = vmatprep.subr.bf16.mxu0 0
  %151 = vmatpush1.bf16.msra.mxu0 %v134
  %152 = vmatprep.subr.bf16.mxu0 0
  %153 = vmatpush1.bf16.msra.mxu0 %v135
  %154 = vmatprep.subr.bf16.mxu0 0
  %155 = vmatpush1.bf16.msra.mxu0 %v136
  %156 = vmatprep.subr.bf16.mxu0 0
  %157 = vmatpush1.bf16.msra.mxu0 %v137
  %158 = vmatprep.subr.bf16.mxu0 0
  %159 = vmatpush1.bf16.msra.mxu0 %v138
  %160 = vmatprep.subr.bf16.mxu0 0
  %161 = vmatpush1.bf16.msra.mxu0 %v139
  %162 = vmatprep.subr.bf16.mxu0 0
  %163 = vmatpush1.bf16.msra.mxu0 %v140
  %164 = vmatprep.subr.bf16.mxu0 0
  %165 = vmatpush1.bf16.msra.mxu0 %v141
  %166 = vmatprep.subr.bf16.mxu0 0
  %167 = vmatpush1.bf16.msra.mxu0 0
  %168 = vmatprep.subr.bf16.mxu0 0
  %169 = vmatpush1.bf16.msra.mxu0 0
  %170 = vmatprep.subr.bf16.mxu0 0
  %171 = vmatpush1.bf16.msra.mxu0 0
  %172 = vmatprep.subr.bf16.mxu0 0
  %173 = vmatpush1.bf16.msra.mxu0 0
  %174 = vmatprep.subr.bf16.mxu0 0
  %175 = vmatpush1.bf16.msra.mxu0 0
  %176 = vmatprep.subr.bf16.mxu0 0
  %177 = vmatpush1.bf16.msra.mxu0 0
  %178 = vmatprep.subr.bf16.mxu0 0
  %179 = vmatpush1.bf16.msra.mxu0 0
  %180 = vmatprep.subr.bf16.mxu0 0
  %181 = vmatpush1.bf16.msra.mxu0 0
  %182 = vmatprep.mubr.bf16.mxu0 0
  %183 = vmatmul.mubr.bf16.gmra.mrb[0].mxu0 %v86
  %v184 = vpop.f32.mrb[0].mxu0
  %v185 = vadd.f32 %v52, %v184
  %v186 = vpop.f32.mrb[0].mxu0
  %v187 = vpop.f32.mrb[0].mxu0
  %v188 = vadd.f32 %v52, %v187
  %v189 = vpop.f32.mrb[0].mxu0
  %190 = vmatprep.mubr.bf16.mxu0 0
  %191 = vmatmul.mubr.bf16.gmra.mrb[0].mxu0 %v87
  %v192 = vpop.f32.mrb[0].mxu0
  %v193 = vadd.f32 %v52, %v192
  %v194 = vpop.f32.mrb[0].mxu0
  %v195 = vpop.f32.mrb[0].mxu0
  %v196 = vadd.f32 %v52, %v195
  %v197 = vpop.f32.mrb[0].mxu0
  %198 = vmatprep.mubr.bf16.mxu0 0
  %199 = vmatmul.mubr.bf16.gmra.mrb[0].mxu0 %v88
  %v200 = vpop.f32.mrb[0].mxu0
  %v201 = vadd.f32 %v52, %v200
  %v202 = vpop.f32.mrb[0].mxu0
  %v203 = vpop.f32.mrb[0].mxu0
  %v204 = vadd.f32 %v52, %v203
  %v205 = vpop.f32.mrb[0].mxu0
  %206 = vmatprep.mubr.bf16.mxu0 0
  %207 = vmatmul.mubr.bf16.gmra.mrb[0].mxu0 %v89
  %v208 = vpop.f32.mrb[0].mxu0
  %v209 = vadd.f32 %v52, %v208
  %v210 = vpop.f32.mrb[0].mxu0
  %v211 = vpop.f32.mrb[0].mxu0
  %v212 = vadd.f32 %v52, %v211
  %v213 = vpop.f32.mrb[0].mxu0
  %214 = vmatprep.mubr.bf16.mxu0 0
  %215 = vmatmul.mubr.bf16.gmra.mrb[0].mxu0 %v90
  %v216 = vpop.f32.mrb[0].mxu0
  %v217 = vadd.f32 %v52, %v216
  %v218 = vpop.f32.mrb[0].mxu0
  %v219 = vpop.f32.mrb[0].mxu0
  %v220 = vadd.f32 %v52, %v219
  %v221 = vpop.f32.mrb[0].mxu0
  %222 = vmatprep.mubr.bf16.mxu0 0
  %223 = vmatmul.mubr.bf16.gmra.mrb[0].mxu0 %v91
  %v224 = vpop.f32.mrb[0].mxu0
  %v225 = vadd.f32 %v52, %v224
  %v226 = vpop.f32.mrb[0].mxu0
  %v227 = vpop.f32.mrb[0].mxu0
  %v228 = vadd.f32 %v52, %v227
  %v229 = vpop.f32.mrb[0].mxu0
  %230 = vmatprep.mubr.bf16.mxu0 0
  %231 = vmatmul.mubr.bf16.gmra.mrb[0].mxu0 %v92
  %v232 = vpop.f32.mrb[0].mxu0
  %v233 = vadd.f32 %v52, %v232
  %v234 = vpop.f32.mrb[0].mxu0
  %v235 = vpop.f32.mrb[0].mxu0
  %v236 = vadd.f32 %v52, %v235
  %v237 = vpop.f32.mrb[0].mxu0
  %238 = vmatprep.mubr.bf16.mxu0 0
  %239 = vmatmul.mubr.bf16.gmra.mrb[0].mxu0 %v93
  %v240 = vpop.f32.mrb[0].mxu0
  %v241 = vadd.f32 %v52, %v240
  %v242 = vpop.f32.mrb[0].mxu0
  %v243 = vpop.f32.mrb[0].mxu0
  %v244 = vadd.f32 %v52, %v243
  %v245 = vpop.f32.mrb[0].mxu0
  %246 = vdwg.mxu0
  %247 = vst [vmem:[%s3] sm:$0xff] %v185
  %248 = vst [vmem:[%s3 + $0x8] sm:$0xff] %v188
  %249 = vst [vmem:[%s3 + $0x10] sm:$0xff] %v193
  %250 = vst [vmem:[%s3 + $0x18] sm:$0xff] %v196
  %251 = vst [vmem:[%s3 + $0x20] sm:$0xff] %v201
  %252 = vst [vmem:[%s3 + $0x28] sm:$0xff] %v204
  %253 = vst [vmem:[%s3 + $0x30] sm:$0xff] %v209
  %254 = vst [vmem:[%s3 + $0x38] sm:$0xff] %v212
  %255 = vst [vmem:[%s3 + $0x40] sm:$0xff] %v217
  %256 = vst [vmem:[%s3 + $0x48] sm:$0xff] %v220
  %257 = vst [vmem:[%s3 + $0x50] sm:$0xff] %v225
  %258 = vst [vmem:[%s3 + $0x58] sm:$0xff] %v228
  %259 = vst [vmem:[%s3 + $0x60] sm:$0xff] %v233
  %260 = vst [vmem:[%s3 + $0x68] sm:$0xff] %v236
  %261 = vst [vmem:[%s3 + $0x70] sm:$0xff] %v241
  %262 = vst [vmem:[%s3 + $0x78] sm:$0xff] %v244
  // Predicated region
  $region14: #{pixel_rnn_forward.5} parent=0 // pred_check
    _
  $region15: #{pixel_rnn_forward.5} parent=0 // pred_check_branch
    %264 = sbr.rel (0) target = $region17
  $region16: #{pixel_rnn_forward.5} parent=0 // pred_region
    _
  $region17: #{pixel_rnn_forward.5} parent=0 // pred_fallthru
    _
  // Predicated region
  $region18: #{pixel_rnn_forward.5} parent=0 // pred_check
    _
  $region19: #{pixel_rnn_forward.5} parent=0 // pred_check_branch
    %266 = sbr.rel (0) target = $region21
  $region20: #{pixel_rnn_forward.5} parent=0 // pred_region
    _
  $region21: #{pixel_rnn_forward.5} parent=0 // pred_fallthru
    _

// kernel: pixel_rnn_forward.3
$region0: #{pixel_rnn_forward.3}
  #allocation0 [shape = 'u32[]', space=smem, size = 0x4, offset = 0x4, fixed_abs, tag = 'smem constant byte address 0x4 - core index']
  #allocation1 [shape = 'u32[144,128]{1,0:T(1,128)}', space=vmem, size = 0x12000, scoped, tag = 'internal scratch']
  #allocation2 [shape = 'f32[16,128]{1,0:T(8,128)}', space=vmem, size = 0x2000, scoped, tag = 'scratch operand']
  #allocation3 [shape = 'f32[16,128]{1,0:T(8,128)}', space=vmem, size = 0x2000, scoped, tag = 'scratch operand']
  #allocation4 [shape = 'f32[16,128]{1,0:T(8,128)}', space=vmem, size = 0x2000, scoped, tag = 'scratch operand']
  #allocation5 [shape = 'f32[16,128]{1,0:T(8,128)}', space=vmem, size = 0x2000, scoped, tag = 'scratch operand']
  %s0 = inlined_call_operand.vmem [shape: bf16[8,16,128], index: 0, kind: input, shape index: {}]
  %s1 = inlined_call_operand.hbm [shape: bf16[640,512], index: 1, kind: input, shape index: {}]
  %s2 = inlined_call_operand.hbm [shape: f32[1,512], index: 2, kind: input, shape index: {}]
  %s3 = inlined_call_operand.vmem [shape: bf16[8,16,128], index: 3, kind: output, shape index: {}]
  %s4 = sld [smem:[#allocation0]]
  $region57: #{pixel_rnn_forward.3} parent=0
    _
  %s6 = ssub.s32 1, %s4
  %s7 = scalar_select 0, %s6, %s4
  $region1: #{pixel_rnn_forward.3} parent=0
    #allocation6 [shape = 'u8[655360]{0}', space=vmem, size = 0xa0000, scoped, tag = 'input window, operand 1, single buffered']
    #allocation7 [shape = 's32[2]{0}', space=sflag, size = 0x8, scoped, tag = 'scoped memory for pixel_rnn_forward.3']
    #allocation8 [shape = 'u8[2048]{0}', space=vmem, size = 0x800, scoped, tag = 'input window, operand 2, single buffered']
    #allocation9 [shape = 's32[1]{0}', space=sflag, size = 0x4, scoped, tag = 'scoped memory for pixel_rnn_forward.3']
    %8 = vsyncpa [#allocation7], 0
    %9 = vsyncpa [#allocation9], 0
    loop: start=0, step=1, limit=10
    $region2: #{pixel_rnn_forward.3} parent=1 // loop_pre_header
      _
    $region3: #{pixel_rnn_forward.3} parent=1 // loop_header
      %s11 = sphi 0, %s15
      %p12 = scmp.ge.s32.totalorder %s11, 10
      %s18 = sphi 0, %s30
      %s19 = sphi 0, %s26
      %s20 = sphi 0, %s18
      %s21 = sphi 0, %s19
      %s22 = sphi 0, %s20
      %s23 = sphi 0, %s21
      %s35 = sphi 0, %s37
      %s38 = sphi 0, %s35
      %s39 = sphi 0, %s38
      %s55 = sphi 0, %s39
      %s59 = sphi 0, %s59
      %s61 = sphi 0, %s59
      %s62 = sphi 0, %s61
      %s76 = sphi 0, %s62
      %s80 = sphi 0, %s80
      %s82 = sphi 0, %s80
      %s83 = sphi 0, %s82
      %s97 = sphi 0, %s83
      %s105 = sphi 0, %s107
      %s108 = sphi 0, %s105
      %s109 = sphi 0, %s108
      %s125 = sphi 0, %s109
    $region4: #{pixel_rnn_forward.3} parent=1 // loop_header_branch
      %14 = sbr.rel (%p12) target = $region8
    $region5: #{pixel_rnn_forward.3} parent=1 // loop_body
      %s16 = ssub.s32 %s11, 1
      %s17 = ssub.s32 %s11, 2
      %s24 = sadd.s32 1, %s19
      %p25 = scmp.ge.s32.totalorder %s24, 8
      %s26 = scalar_select %p25, 0, %s24
      %s27 = sadd.s32 1, %s18
      %s28 = scalar_select %p25, %s27, %s18
      %p29 = scmp.ge.s32.totalorder %s28, 1
      %s30 = scalar_select %p29, 0, %s28
      %s31 = ssub.s32 %s19, %s26
      %s32 = ssub.s32 %s18, %s30
      %s33 = sor.u32 %s31, %s32
      %p34 = scmp.eq.s32.totalorder %s33, 0
      %s36 = sadd.s32 %s35, 1
      %s37 = scalar_select %p34, %s35, %s36
      %p40 = pneg %p34
      %p41 = scmp.eq.s32.totalorder %s11, 7
      %p42 = por %p40, %p41
      %p43 = scmp.ne.s32.totalorder %s35, %s38
      %p44 = scmp.eq.s32.totalorder %s11, 0
      %p45 = por %p43, %p44
      %p46 = scmp.ne.s32.totalorder %s35, %s38
      %p47 = scmp.eq.s32.totalorder %s16, 7
      %p48 = por %p46, %p47
      %p49 = scmp.ne.s32.totalorder %s38, %s39
      %p50 = scmp.eq.s32.totalorder %s16, 0
      %p51 = por %p49, %p50
      %p52 = scmp.ne.s32.totalorder %s38, %s39
      %p53 = scmp.eq.s32.totalorder %s17, 7
      %p54 = por %p52, %p53
      %p56 = scmp.ne.s32.totalorder %s39, %s55
      %p57 = scmp.eq.s32.totalorder %s17, 0
      %p58 = por %p56, %p57
      %s60 = sadd.s32 %s59, 1
      %p63 = scmp.eq.s32.totalorder %s11, 7
      %p64 = scmp.ne.s32.totalorder %s59, %s61
      %p65 = scmp.eq.s32.totalorder %s11, 0
      %p66 = por %p64, %p65
      %p67 = scmp.ne.s32.totalorder %s59, %s61
      %p68 = scmp.eq.s32.totalorder %s16, 7
      %p69 = por %p67, %p68
      %p70 = scmp.ne.s32.totalorder %s61, %s62
      %p71 = scmp.eq.s32.totalorder %s16, 0
      %p72 = por %p70, %p71
      %p73 = scmp.ne.s32.totalorder %s61, %s62
      %p74 = scmp.eq.s32.totalorder %s17, 7
      %p75 = por %p73, %p74
      %p77 = scmp.ne.s32.totalorder %s62, %s76
      %p78 = scmp.eq.s32.totalorder %s17, 0
      %p79 = por %p77, %p78
      %s81 = sadd.s32 %s80, 1
      %p84 = scmp.eq.s32.totalorder %s11, 7
      %p85 = scmp.ne.s32.totalorder %s80, %s82
      %p86 = scmp.eq.s32.totalorder %s11, 0
      %p87 = por %p85, %p86
      %p88 = scmp.ne.s32.totalorder %s80, %s82
      %p89 = scmp.eq.s32.totalorder %s16, 7
      %p90 = por %p88, %p89
      %p91 = scmp.ne.s32.totalorder %s82, %s83
      %p92 = scmp.eq.s32.totalorder %s16, 0
      %p93 = por %p91, %p92
      %p94 = scmp.ne.s32.totalorder %s82, %s83
      %p95 = scmp.eq.s32.totalorder %s17, 7
      %p96 = por %p94, %p95
      %p98 = scmp.ne.s32.totalorder %s83, %s97
      %p99 = scmp.eq.s32.totalorder %s17, 0
      %p100 = por %p98, %p99
      %s101 = ssub.s32 %s19, %s26
      %s102 = ssub.s32 %s18, %s30
      %s103 = sor.u32 %s101, %s102
      %p104 = scmp.eq.s32.totalorder %s103, 0
      %s106 = sadd.s32 %s105, 1
      %s107 = scalar_select %p104, %s105, %s106
      %p110 = pneg %p104
      %p111 = scmp.eq.s32.totalorder %s11, 7
      %p112 = por %p110, %p111
      %p113 = scmp.ne.s32.totalorder %s105, %s108
      %p114 = scmp.eq.s32.totalorder %s11, 0
      %p115 = por %p113, %p114
      %p116 = scmp.ne.s32.totalorder %s105, %s108
      %p117 = scmp.eq.s32.totalorder %s16, 7
      %p118 = por %p116, %p117
      %p119 = scmp.ne.s32.totalorder %s108, %s109
      %p120 = scmp.eq.s32.totalorder %s16, 0
      %p121 = por %p119, %p120
      %p122 = scmp.ne.s32.totalorder %s108, %s109
      %p123 = scmp.eq.s32.totalorder %s17, 7
      %p124 = por %p122, %p123
      %p126 = scmp.ne.s32.totalorder %s109, %s125
      %p127 = scmp.eq.s32.totalorder %s17, 0
      %p128 = por %p126, %p127
      %p129 = scmp.le.s32.totalorder 1, %s11
      %p130 = scmp.lt.s32.totalorder %s11, 9
      %p131 = pnand %p129, %p130
      %p132 = pneg %p131
      // Predicated region
      $region9: #{pixel_rnn_forward.3} parent=5 // pred_check
        _
      $region10: #{pixel_rnn_forward.3} parent=5 // pred_check_branch
        %134 = sbr.rel (%p131) target = $region12
      $region11: #{pixel_rnn_forward.3} parent=5 // pred_region
        %s135 = ssub.s32 %s11, 1
        // Predicated region
        $region13: #{pixel_rnn_forward.3} parent=11 // pred_check
          %p136 = pneg %p72
        $region14: #{pixel_rnn_forward.3} parent=11 // pred_check_branch
          %138 = sbr.rel (%p136) target = $region16
        $region15: #{pixel_rnn_forward.3} parent=11 // pred_region
          %s140 = ssub.s32 20480, 20480
          %141 = vsyncadd [#allocation7], %s140
          %s142 = sshll.u32 [#allocation6], 4
          %s143 = int_to_ptr.vmem [resolvable:$true] %s142
          %148 = dma.hbm_to_vmem [thread:$0]  %s1, 20480, %s143, [#allocation7], 256, 256, 16
        $region16: #{pixel_rnn_forward.3} parent=11 // pred_fallthru
          _
        // Predicated region
        $region17: #{pixel_rnn_forward.3} parent=11 // pred_check
          %p149 = pneg %p93
        $region18: #{pixel_rnn_forward.3} parent=11 // pred_check_branch
          %151 = sbr.rel (%p149) target = $region20
        $region19: #{pixel_rnn_forward.3} parent=11 // pred_region
          %s153 = ssub.s32 64, 64
          %154 = vsyncadd [#allocation9], %s153
          %s156 = sshll.u32 [#allocation8], 4
          %s157 = int_to_ptr.vmem [resolvable:$true] %s156
          %159 = dma.hbm_to_vmem [thread:$0]  %s2, 64, %s157, [#allocation9]
        $region20: #{pixel_rnn_forward.3} parent=11 // pred_fallthru
          _
      $region12: #{pixel_rnn_forward.3} parent=5 // pred_fallthru
        _
      %p160 = scmp.lt.s32.totalorder %s11, 8
      // Predicated region
      $region21: #{pixel_rnn_forward.3} parent=5 // pred_check
        %p161 = pneg %p160
      $region22: #{pixel_rnn_forward.3} parent=5 // pred_check_branch
        %163 = sbr.rel (%p161) target = $region24
      $region23: #{pixel_rnn_forward.3} parent=5 // pred_region
        // Predicated region
        $region25: #{pixel_rnn_forward.3} parent=23 // pred_check
          %p164 = pneg %p45
        $region26: #{pixel_rnn_forward.3} parent=23 // pred_check_branch
          %166 = sbr.rel (%p164) target = $region28
        $region27: #{pixel_rnn_forward.3} parent=23 // pred_region
          %s167 = smul.u32 2, %s18
          %p168 = scmp.lt.s32.totalorder %s19, 7
          %s169 = scalar_select %p168, %s19, 7
          %p170 = scmp.lt.s32.totalorder %s167, 1
          %s171 = scalar_select %p170, %s167, 1
          %s172 = smul.addr %s169, 2
          %s173 = sadd.s32 %s171, %s172
          %s174 = smul.addr %s173, 4
          %s175 = scalar_lea.vmem %s0, %s174
          %s176 = smul.u32 2, %s18
        $region28: #{pixel_rnn_forward.3} parent=23 // pred_fallthru
          _
      $region24: #{pixel_rnn_forward.3} parent=5 // pred_fallthru
        _
      %p177 = scmp.le.s32.totalorder 1, %s11
      %p178 = scmp.lt.s32.totalorder %s11, 9
      %p179 = pnand %p177, %p178
      %p180 = pneg %p179
      // Predicated region
      $region29: #{pixel_rnn_forward.3} parent=5 // pred_check
        _
      $region30: #{pixel_rnn_forward.3} parent=5 // pred_check_branch
        %182 = sbr.rel (%p179) target = $region32
      $region31: #{pixel_rnn_forward.3} parent=5 // pred_region
        %s183 = ssub.s32 %s11, 1
        // Predicated region
        $region33: #{pixel_rnn_forward.3} parent=31 // pred_check
          %p184 = pneg %p72
        $region34: #{pixel_rnn_forward.3} parent=31 // pred_check_branch
          %186 = sbr.rel (%p184) target = $region36
        $region35: #{pixel_rnn_forward.3} parent=31 // pred_region
          %187 = dma.done [#allocation7], 20480
        $region36: #{pixel_rnn_forward.3} parent=31 // pred_fallthru
          _
        // Predicated region
        $region37: #{pixel_rnn_forward.3} parent=31 // pred_check
          %p188 = pneg %p93
        $region38: #{pixel_rnn_forward.3} parent=31 // pred_check_branch
          %190 = sbr.rel (%p188) target = $region40
        $region39: #{pixel_rnn_forward.3} parent=31 // pred_region
          %191 = dma.done [#allocation9], 64
        $region40: #{pixel_rnn_forward.3} parent=31 // pred_fallthru
          _
        %s192 = smul.u32 2, %s20
        %p193 = scmp.lt.s32.totalorder %s21, 7
        %s194 = scalar_select %p193, %s21, 7
        %p195 = scmp.lt.s32.totalorder %s192, 1
        %s196 = scalar_select %p195, %s192, 1
        %s197 = smul.addr %s194, 2
        %s198 = sadd.s32 %s196, %s197
        %s199 = smul.addr %s198, 4
        %s200 = scalar_lea.vmem %s0, %s199
        %p201 = pneg %p51
        %p202 = pneg %p48
        %p203 = pneg %p72
        %p204 = pneg %p69
        %p205 = pneg %p93
        %p206 = pneg %p90
        %p207 = pneg %p121
        %p208 = pneg %p118
        %s209 = smul.u32 2, %s20
        %p210 = scmp.lt.s32.totalorder %s21, 7
        %s211 = scalar_select %p210, %s21, 7
        %p212 = scmp.lt.s32.totalorder %s209, 1
        %s213 = scalar_select %p212, %s209, 1
        %s214 = smul.addr %s211, 2
        %s215 = sadd.s32 %s213, %s214
        %s216 = smul.addr %s215, 4
        %s217 = scalar_lea.vmem %s3, %s216
        %s218 = smul.u32 2, %s20
        %p219 = scmp.lt.s32.totalorder %s21, 7
        %s220 = scalar_select %p219, %s21, 7
        %p221 = scmp.lt.s32.totalorder %s218, 1
        %s222 = scalar_select %p221, %s218, 1
        %s223 = smul.addr %s220, 2
        %s224 = sadd.s32 %s222, %s223
        %s225 = smul.addr %s224, 4
        %s226 = scalar_lea.vmem %s0, %s225
        %s227 = smul.u32 2, %s20
        %s228 = smul.u32 2, %s20
        %p229 = scmp.lt.s32.totalorder %s21, 7
        %s230 = scalar_select %p229, %s21, 7
        %p231 = scmp.lt.s32.totalorder %s228, 1
        %s232 = scalar_select %p231, %s228, 1
        %s233 = smul.addr %s230, 2
        %s234 = sadd.s32 %s232, %s233
        %s235 = smul.addr %s234, 4
        %s236 = scalar_lea.vmem %s3, %s235
        %s237 = smul.u32 2, %s20
        %p239 = scmp.eq.s32.totalorder %s21, 0
        // Predicated region
        $region41: #{pixel_rnn_forward.3} parent=31 // pred_check
          %p240 = pneg %p239
        $region42: #{pixel_rnn_forward.3} parent=31 // pred_check_branch
          %242 = sbr.rel (%p240) target = $region44
        $region43: #{pixel_rnn_forward.3} parent=31 // pred_region
          %243 = vst [vmem:[#allocation2] sm:$0xff] 0.0
          %244 = vst [vmem:[#allocation2 + $0x8] sm:$0xff] 0.0
          %245 = vst [vmem:[#allocation3] sm:$0xff] 0.0
          %246 = vst [vmem:[#allocation3 + $0x8] sm:$0xff] 0.0
          %v247 = vlaneseq
          %v248 = vshrl.u32 %v247, 7
          %v249 = vadd.s32 %v248, 8
          %vm250 = vcmp.eq.s32.totalorder %v248, 0
          %vm251 = vcmp.eq.s32.totalorder %v249, 0
          %vm252 = vcmp.eq.s32.totalorder %v248, 7
          %vm253 = vcmp.eq.s32.totalorder %v249, 7
          %vm254 = vcmp.eq.s32.totalorder %v248, 8
          %vm255 = vcmp.eq.s32.totalorder %v249, 8
          %vm256 = vmor %vm250, %vm254
          %vm257 = vmor %vm251, %vm255
          %vm258 = vcmp.eq.s32.totalorder %v248, 15
          %vm259 = vcmp.eq.s32.totalorder %v249, 15
          %vm260 = vmor %vm252, %vm258
          %vm261 = vmor %vm253, %vm259
          %v262 = vsel %vm256, 0.0, 1.0
          %v263 = vsel %vm257, 0.0, 1.0
          %264 = vst [vmem:[#allocation4] sm:$0xff] %v262
          %265 = vst [vmem:[#allocation4 + $0x8] sm:$0xff] %v263
          %v266 = vsel %vm260, 0.0, 1.0
          %v267 = vsel %vm261, 0.0, 1.0
          %268 = vst [vmem:[#allocation5] sm:$0xff] %v266
          %269 = vst [vmem:[#allocation5 + $0x8] sm:$0xff] %v267
        $region44: #{pixel_rnn_forward.3} parent=31 // pred_fallthru
          _
        %v270 = vld [vmem:[%s226] sm:$0xf]
        %v271 = vld [vmem:[%s226 + $0x4] sm:$0xf]
        %v272 = vunpack.c.l.bf16 %v270
        %v273 = vunpack.c.l.bf16 %v271
        %v274 = vld [vmem:[#allocation2] sm:$0xff]
        %v275 = vld [vmem:[#allocation2 + $0x8] sm:$0xff]
        %v276 = vld [vmem:[#allocation4] sm:$0xff]
        %v277 = vld [vmem:[#allocation4 + $0x8] sm:$0xff]
        %v278 = vld [vmem:[#allocation5] sm:$0xff]
        %v279 = vld [vmem:[#allocation5 + $0x8] sm:$0xff]
        %v280 = vrot.slane %v272, 7
        %v281 = vrot.slane %v273, 7
        %v282 = vlaneseq
        %v283 = vshrl.u32 %v282, 7
        %vm284 = vcmp.lt.s32.totalorder %v283, 1
        %v285 = vsel %vm284, %v280, %v281
        %v286 = vsel %vm284, %v281, %v280
        %v287 = vmul.f32 %v286, %v276
        %v288 = vmul.f32 %v285, %v277
        %v289 = vpack.c.bf16 %v288, %v287
        %v290 = vrot.slane %v274, 7
        %v291 = vrot.slane %v275, 7
        %v292 = vsel %vm284, %v290, %v291
        %v293 = vsel %vm284, %v291, %v290
        %v294 = vmul.f32 %v293, %v276
        %v295 = vmul.f32 %v292, %v277
        %v296 = vpack.c.bf16 %v295, %v294
        %v297 = vrot.slane %v274, 1
        %v298 = vrot.slane %v275, 1
        %vm299 = vcmp.lt.s32.totalorder %v283, 7
        %v300 = vsel %vm299, %v297, %v298
        %v301 = vsel %vm299, %v298, %v297
        %v302 = vmul.f32 %v300, %v278
        %v303 = vmul.f32 %v301, %v279
        %v304 = vpack.c.bf16 %v303, %v302
        %v305 = vpack.c.bf16 %v275, %v274
        %v308 = vunpack.c.l.b16 %v270
        %v309 = vunpack.c.l.b16 %v271
        %v310 = vpack.c.b16 %v309, %v308
        %v312 = vld [vmem:[#allocation6] sm:$0xff]
        %v313 = vld [vmem:[#allocation6 + $0x8] sm:$0xff]
        %v314 = vld [vmem:[#allocation6 + $0x10] sm:$0xff]
        %v315 = vld [vmem:[#allocation6 + $0x18] sm:$0xff]
        %v316 = vld [vmem:[#allocation6 + $0x20] sm:$0xff]
        %v317 = vld [vmem:[#allocation6 + $0x28] sm:$0xff]
        %v318 = vld [vmem:[#allocation6 + $0x30] sm:$0xff]
        %v319 = vld [vmem:[#allocation6 + $0x38] sm:$0xff]
        %v320 = vld [vmem:[#allocation6 + $0x40] sm:$0xff]
        %v321 = vld [vmem:[#allocation6 + $0x48] sm:$0xff]
        %v322 = vld [vmem:[#allocation6 + $0x50] sm:$0xff]
        %v323 = vld [vmem:[#allocation6 + $0x58] sm:$0xff]
        %v324 = vld [vmem:[#allocation6 + $0x60] sm:$0xff]
        %v325 = vld [vmem:[#allocation6 + $0x68] sm:$0xff]
        %v326 = vld [vmem:[#allocation6 + $0x70] sm:$0xff]
        %v327 = vld [vmem:[#allocation6 + $0x78] sm:$0xff]
        %v328 = vld [vmem:[#allocation6 + $0x80] sm:$0xff]
        %v329 = vld [vmem:[#allocation6 + $0x88] sm:$0xff]
        %v330 = vld [vmem:[#allocation6 + $0x90] sm:$0xff]
        %v331 = vld [vmem:[#allocation6 + $0x98] sm:$0xff]
        %v332 = vld [vmem:[#allocation6 + $0xa0] sm:$0xff]
        %v333 = vld [vmem:[#allocation6 + $0xa8] sm:$0xff]
        %v334 = vld [vmem:[#allocation6 + $0xb0] sm:$0xff]
        %v335 = vld [vmem:[#allocation6 + $0xb8] sm:$0xff]
        %v336 = vld [vmem:[#allocation6 + $0xc0] sm:$0xff]
        %v337 = vld [vmem:[#allocation6 + $0xc8] sm:$0xff]
        %v338 = vld [vmem:[#allocation6 + $0xd0] sm:$0xff]
        %v339 = vld [vmem:[#allocation6 + $0xd8] sm:$0xff]
        %v340 = vld [vmem:[#allocation6 + $0xe0] sm:$0xff]
        %v341 = vld [vmem:[#allocation6 + $0xe8] sm:$0xff]
        %v342 = vld [vmem:[#allocation6 + $0xf0] sm:$0xff]
        %v343 = vld [vmem:[#allocation6 + $0xf8] sm:$0xff]
        %v344 = vld [vmem:[#allocation6 + $0x100] sm:$0xff]
        %v345 = vld [vmem:[#allocation6 + $0x108] sm:$0xff]
        %v346 = vld [vmem:[#allocation6 + $0x110] sm:$0xff]
        %v347 = vld [vmem:[#allocation6 + $0x118] sm:$0xff]
        %v348 = vld [vmem:[#allocation6 + $0x120] sm:$0xff]
        %v349 = vld [vmem:[#allocation6 + $0x128] sm:$0xff]
        %v350 = vld [vmem:[#allocation6 + $0x130] sm:$0xff]
        %v351 = vld [vmem:[#allocation6 + $0x138] sm:$0xff]
        %v352 = vld [vmem:[#allocation6 + $0x140] sm:$0xff]
        %v353 = vld [vmem:[#allocation6 + $0x148] sm:$0xff]
        %v354 = vld [vmem:[#allocation6 + $0x150] sm:$0xff]
        %v355 = vld [vmem:[#allocation6 + $0x158] sm:$0xff]
        %v356 = vld [vmem:[#allocation6 + $0x160] sm:$0xff]
        %v357 = vld [vmem:[#allocation6 + $0x168] sm:$0xff]
        %v358 = vld [vmem:[#allocation6 + $0x170] sm:$0xff]
        %v359 = vld [vmem:[#allocation6 + $0x178] sm:$0xff]
        %v360 = vld [vmem:[#allocation6 + $0x180] sm:$0xff]
        %v361 = vld [vmem:[#allocation6 + $0x188] sm:$0xff]
        %v362 = vld [vmem:[#allocation6 + $0x190] sm:$0xff]
        %v363 = vld [vmem:[#allocation6 + $0x198] sm:$0xff]
        %v364 = vld [vmem:[#allocation6 + $0x1a0] sm:$0xff]
        %v365 = vld [vmem:[#allocation6 + $0x1a8] sm:$0xff]
        %v366 = vld [vmem:[#allocation6 + $0x1b0] sm:$0xff]
        %v367 = vld [vmem:[#allocation6 + $0x1b8] sm:$0xff]
        %v368 = vld [vmem:[#allocation6 + $0x1c0] sm:$0xff]
        %v369 = vld [vmem:[#allocation6 + $0x1c8] sm:$0xff]
        %v370 = vld [vmem:[#allocation6 + $0x1d0] sm:$0xff]
        %v371 = vld [vmem:[#allocation6 + $0x1d8] sm:$0xff]
        %v372 = vld [vmem:[#allocation6 + $0x1e0] sm:$0xff]
        %v373 = vld [vmem:[#allocation6 + $0x1e8] sm:$0xff]
        %v374 = vld [vmem:[#allocation6 + $0x1f0] sm:$0xff]
        %v375 = vld [vmem:[#allocation6 + $0x1f8] sm:$0xff]
        %v376 = vld [vmem:[#allocation6 + $0x200] sm:$0xff]
        %v377 = vld [vmem:[#allocation6 + $0x208] sm:$0xff]
        %v378 = vld [vmem:[#allocation6 + $0x210] sm:$0xff]
        %v379 = vld [vmem:[#allocation6 + $0x218] sm:$0xff]
        %v380 = vld [vmem:[#allocation6 + $0x220] sm:$0xff]
        %v381 = vld [vmem:[#allocation6 + $0x228] sm:$0xff]
        %v382 = vld [vmem:[#allocation6 + $0x230] sm:$0xff]
        %v383 = vld [vmem:[#allocation6 + $0x238] sm:$0xff]
        %v384 = vld [vmem:[#allocation6 + $0x240] sm:$0xff]
        %v385 = vld [vmem:[#allocation6 + $0x248] sm:$0xff]
        %v386 = vld [vmem:[#allocation6 + $0x250] sm:$0xff]
        %v387 = vld [vmem:[#allocation6 + $0x258] sm:$0xff]
        %v388 = vld [vmem:[#allocation6 + $0x260] sm:$0xff]
        %v389 = vld [vmem:[#allocation6 + $0x268] sm:$0xff]
        %v390 = vld [vmem:[#allocation6 + $0x270] sm:$0xff]
        %v391 = vld [vmem:[#allocation6 + $0x278] sm:$0xff]
        %v392 = vld [vmem:[#allocation6 + $0x280] sm:$0xff]
        %v393 = vld [vmem:[#allocation6 + $0x288] sm:$0xff]
        %v394 = vld [vmem:[#allocation6 + $0x290] sm:$0xff]
        %v395 = vld [vmem:[#allocation6 + $0x298] sm:$0xff]
        %v396 = vld [vmem:[#allocation6 + $0x2a0] sm:$0xff]
        %v397 = vld [vmem:[#allocation6 + $0x2a8] sm:$0xff]
        %v398 = vld [vmem:[#allocation6 + $0x2b0] sm:$0xff]
        %v399 = vld [vmem:[#allocation6 + $0x2b8] sm:$0xff]
        %v400 = vld [vmem:[#allocation6 + $0x2c0] sm:$0xff]
        %v401 = vld [vmem:[#allocation6 + $0x2c8] sm:$0xff]
        %v402 = vld [vmem:[#allocation6 + $0x2d0] sm:$0xff]
        %v403 = vld [vmem:[#allocation6 + $0x2d8] sm:$0xff]
        %v404 = vld [vmem:[#allocation6 + $0x2e0] sm:$0xff]
        %v405 = vld [vmem:[#allocation6 + $0x2e8] sm:$0xff]
        %v406 = vld [vmem:[#allocation6 + $0x2f0] sm:$0xff]
        %v407 = vld [vmem:[#allocation6 + $0x2f8] sm:$0xff]
        %v408 = vld [vmem:[#allocation6 + $0x300] sm:$0xff]
        %v409 = vld [vmem:[#allocation6 + $0x308] sm:$0xff]
        %v410 = vld [vmem:[#allocation6 + $0x310] sm:$0xff]
        %v411 = vld [vmem:[#allocation6 + $0x318] sm:$0xff]
        %v412 = vld [vmem:[#allocation6 + $0x320] sm:$0xff]
        %v413 = vld [vmem:[#allocation6 + $0x328] sm:$0xff]
        %v414 = vld [vmem:[#allocation6 + $0x330] sm:$0xff]
        %v415 = vld [vmem:[#allocation6 + $0x338] sm:$0xff]
        %v416 = vld [vmem:[#allocation6 + $0x340] sm:$0xff]
        %v417 = vld [vmem:[#allocation6 + $0x348] sm:$0xff]
        %v418 = vld [vmem:[#allocation6 + $0x350] sm:$0xff]
        %v419 = vld [vmem:[#allocation6 + $0x358] sm:$0xff]
        %v420 = vld [vmem:[#allocation6 + $0x360] sm:$0xff]
        %v421 = vld [vmem:[#allocation6 + $0x368] sm:$0xff]
        %v422 = vld [vmem:[#allocation6 + $0x370] sm:$0xff]
        %v423 = vld [vmem:[#allocation6 + $0x378] sm:$0xff]
        %v424 = vld [vmem:[#allocation6 + $0x380] sm:$0xff]
        %v425 = vld [vmem:[#allocation6 + $0x388] sm:$0xff]
        %v426 = vld [vmem:[#allocation6 + $0x390] sm:$0xff]
        %v427 = vld [vmem:[#allocation6 + $0x398] sm:$0xff]
        %v428 = vld [vmem:[#allocation6 + $0x3a0] sm:$0xff]
        %v429 = vld [vmem:[#allocation6 + $0x3a8] sm:$0xff]
        %v430 = vld [vmem:[#allocation6 + $0x3b0] sm:$0xff]
        %v431 = vld [vmem:[#allocation6 + $0x3b8] sm:$0xff]
        %v432 = vld [vmem:[#allocation6 + $0x3c0] sm:$0xff]
        %v433 = vld [vmem:[#allocation6 + $0x3c8] sm:$0xff]
        %v434 = vld [vmem:[#allocation6 + $0x3d0] sm:$0xff]
        %v435 = vld [vmem:[#allocation6 + $0x3d8] sm:$0xff]
        %v436 = vld [vmem:[#allocation6 + $0x3e0] sm:$0xff]
        %v437 = vld [vmem:[#allocation6 + $0x3e8] sm:$0xff]
        %v438 = vld [vmem:[#allocation6 + $0x3f0] sm:$0xff]
        %v439 = vld [vmem:[#allocation6 + $0x3f8] sm:$0xff]
        %v440 = vld [vmem:[#allocation6 + $0x400] sm:$0xff]
        %v441 = vld [vmem:[#allocation6 + $0x408] sm:$0xff]
        %v442 = vld [vmem:[#allocation6 + $0x410] sm:$0xff]
        %v443 = vld [vmem:[#allocation6 + $0x418] sm:$0xff]
        %v444 = vld [vmem:[#allocation6 + $0x420] sm:$0xff]
        %v445 = vld [vmem:[#allocation6 + $0x428] sm:$0xff]
        %v446 = vld [vmem:[#allocation6 + $0x430] sm:$0xff]
        %v447 = vld [vmem:[#allocation6 + $0x438] sm:$0xff]
        %v448 = vld [vmem:[#allocation6 + $0x440] sm:$0xff]
        %v449 = vld [vmem:[#allocation6 + $0x448] sm:$0xff]
        %v450 = vld [vmem:[#allocation6 + $0x450] sm:$0xff]
        %v451 = vld [vmem:[#allocation6 + $0x458] sm:$0xff]
        %v452 = vld [vmem:[#allocation6 + $0x460] sm:$0xff]
        %v453 = vld [vmem:[#allocation6 + $0x468] sm:$0xff]
        %v454 = vld [vmem:[#allocation6 + $0x470] sm:$0xff]
        %v455 = vld [vmem:[#allocation6 + $0x478] sm:$0xff]
        %v456 = vld [vmem:[#allocation6 + $0x480] sm:$0xff]
        %v457 = vld [vmem:[#allocation6 + $0x488] sm:$0xff]
        %v458 = vld [vmem:[#allocation6 + $0x490] sm:$0xff]
        %v459 = vld [vmem:[#allocation6 + $0x498] sm:$0xff]
        %v460 = vld [vmem:[#allocation6 + $0x4a0] sm:$0xff]
        %v461 = vld [vmem:[#allocation6 + $0x4a8] sm:$0xff]
        %v462 = vld [vmem:[#allocation6 + $0x4b0] sm:$0xff]
        %v463 = vld [vmem:[#allocation6 + $0x4b8] sm:$0xff]
        %v464 = vld [vmem:[#allocation6 + $0x4c0] sm:$0xff]
        %v465 = vld [vmem:[#allocation6 + $0x4c8] sm:$0xff]
        %v466 = vld [vmem:[#allocation6 + $0x4d0] sm:$0xff]
        %v467 = vld [vmem:[#allocation6 + $0x4d8] sm:$0xff]
        %v468 = vld [vmem:[#allocation6 + $0x4e0] sm:$0xff]
        %v469 = vld [vmem:[#allocation6 + $0x4e8] sm:$0xff]
        %v470 = vld [vmem:[#allocation6 + $0x4f0] sm:$0xff]
        %v471 = vld [vmem:[#allocation6 + $0x4f8] sm:$0xff]
        %v472 = vld [vmem:[#allocation8] sm:$0xf]
        %v474 = vlaneseq
        %v475 = vshrl.u32 %v474, 7
        %v476 = vsub.s32 0, %v475
        %v477 = vrot.slane %v472, %v476
        %v478 = vlaneseq
        %v479 = vshrl.u32 %v478, 7
        %v480 = vsub.s32 1, %v479
        %v481 = vrot.slane %v472, %v480
        %v482 = vlaneseq
        %v483 = vshrl.u32 %v482, 7
        %v484 = vsub.s32 2, %v483
        %v485 = vrot.slane %v472, %v484
        %v486 = vlaneseq
        %v487 = vshrl.u32 %v486, 7
        %v488 = vsub.s32 3, %v487
        %v489 = vrot.slane %v472, %v488
        %v654 = vunpack.c.l.b16 %v312
        %v655 = vunpack.c.h.b16 %v312
        %v656 = vunpack.c.l.b16 %v313
        %v657 = vunpack.c.h.b16 %v313
        %v658 = vunpack.c.l.b16 %v314
        %v659 = vunpack.c.h.b16 %v314
        %v660 = vunpack.c.l.b16 %v315
        %v661 = vunpack.c.h.b16 %v315
        %v662 = vunpack.c.l.b16 %v316
        %v663 = vunpack.c.h.b16 %v316
        %v664 = vunpack.c.l.b16 %v317
        %v665 = vunpack.c.h.b16 %v317
        %v666 = vunpack.c.l.b16 %v318
        %v667 = vunpack.c.h.b16 %v318
        %v668 = vunpack.c.l.b16 %v319
        %v669 = vunpack.c.h.b16 %v319
        %v670 = vunpack.c.l.b16 %v320
        %v671 = vunpack.c.h.b16 %v320
        %v672 = vunpack.c.l.b16 %v321
        %v673 = vunpack.c.h.b16 %v321
        %v674 = vunpack.c.l.b16 %v322
        %v675 = vunpack.c.h.b16 %v322
        %v676 = vunpack.c.l.b16 %v323
        %v677 = vunpack.c.h.b16 %v323
        %v678 = vunpack.c.l.b16 %v324
        %v679 = vunpack.c.h.b16 %v324
        %v680 = vunpack.c.l.b16 %v325
        %v681 = vunpack.c.h.b16 %v325
        %v682 = vunpack.c.l.b16 %v326
        %v683 = vunpack.c.h.b16 %v326
        %v684 = vunpack.c.l.b16 %v327
        %v685 = vunpack.c.h.b16 %v327
        %v686 = vunpack.c.l.b16 %v328
        %v687 = vunpack.c.h.b16 %v328
        %v688 = vunpack.c.l.b16 %v329
        %v689 = vunpack.c.h.b16 %v329
        %v690 = vunpack.c.l.b16 %v330
        %v691 = vunpack.c.h.b16 %v330
        %v692 = vunpack.c.l.b16 %v331
        %v693 = vunpack.c.h.b16 %v331
        %v694 = vunpack.c.l.b16 %v332
        %v695 = vunpack.c.h.b16 %v332
        %v696 = vunpack.c.l.b16 %v333
        %v697 = vunpack.c.h.b16 %v333
        %v698 = vunpack.c.l.b16 %v334
        %v699 = vunpack.c.h.b16 %v334
        %v700 = vunpack.c.l.b16 %v335
        %v701 = vunpack.c.h.b16 %v335
        %v702 = vunpack.c.l.b16 %v336
        %v703 = vunpack.c.h.b16 %v336
        %v704 = vunpack.c.l.b16 %v337
        %v705 = vunpack.c.h.b16 %v337
        %v706 = vunpack.c.l.b16 %v338
        %v707 = vunpack.c.h.b16 %v338
        %v708 = vunpack.c.l.b16 %v339
        %v709 = vunpack.c.h.b16 %v339
        %v710 = vunpack.c.l.b16 %v340
        %v711 = vunpack.c.h.b16 %v340
        %v712 = vunpack.c.l.b16 %v341
        %v713 = vunpack.c.h.b16 %v341
        %v714 = vunpack.c.l.b16 %v342
        %v715 = vunpack.c.h.b16 %v342
        %v716 = vunpack.c.l.b16 %v343
        %v717 = vunpack.c.h.b16 %v343
        %v718 = vunpack.c.l.b16 %v344
        %v719 = vunpack.c.h.b16 %v344
        %v720 = vunpack.c.l.b16 %v345
        %v721 = vunpack.c.h.b16 %v345
        %v722 = vunpack.c.l.b16 %v346
        %v723 = vunpack.c.h.b16 %v346
        %v724 = vunpack.c.l.b16 %v347
        %v725 = vunpack.c.h.b16 %v347
        %v726 = vunpack.c.l.b16 %v348
        %v727 = vunpack.c.h.b16 %v348
        %v728 = vunpack.c.l.b16 %v349
        %v729 = vunpack.c.h.b16 %v349
        %v730 = vunpack.c.l.b16 %v350
        %v731 = vunpack.c.h.b16 %v350
        %v732 = vunpack.c.l.b16 %v351
        %v733 = vunpack.c.h.b16 %v351
        %v734 = vunpack.c.l.b16 %v352
        %v735 = vunpack.c.h.b16 %v352
        %v736 = vunpack.c.l.b16 %v353
        %v737 = vunpack.c.h.b16 %v353
        %v738 = vunpack.c.l.b16 %v354
        %v739 = vunpack.c.h.b16 %v354
        %v740 = vunpack.c.l.b16 %v355
        %v741 = vunpack.c.h.b16 %v355
        %v742 = vunpack.c.l.b16 %v356
        %v743 = vunpack.c.h.b16 %v356
        %v744 = vunpack.c.l.b16 %v357
        %v745 = vunpack.c.h.b16 %v357
        %v746 = vunpack.c.l.b16 %v358
        %v747 = vunpack.c.h.b16 %v358
        %v748 = vunpack.c.l.b16 %v359
        %v749 = vunpack.c.h.b16 %v359
        %v750 = vunpack.c.l.b16 %v360
        %v751 = vunpack.c.h.b16 %v360
        %v752 = vunpack.c.l.b16 %v361
        %v753 = vunpack.c.h.b16 %v361
        %v754 = vunpack.c.l.b16 %v362
        %v755 = vunpack.c.h.b16 %v362
        %v756 = vunpack.c.l.b16 %v363
        %v757 = vunpack.c.h.b16 %v363
        %v758 = vunpack.c.l.b16 %v364
        %v759 = vunpack.c.h.b16 %v364
        %v760 = vunpack.c.l.b16 %v365
        %v761 = vunpack.c.h.b16 %v365
        %v762 = vunpack.c.l.b16 %v366
        %v763 = vunpack.c.h.b16 %v366
        %v764 = vunpack.c.l.b16 %v367
        %v765 = vunpack.c.h.b16 %v367
        %v766 = vunpack.c.l.b16 %v368
        %v767 = vunpack.c.h.b16 %v368
        %v768 = vunpack.c.l.b16 %v369
        %v769 = vunpack.c.h.b16 %v369
        %v770 = vunpack.c.l.b16 %v370
        %v771 = vunpack.c.h.b16 %v370
        %v772 = vunpack.c.l.b16 %v371
        %v773 = vunpack.c.h.b16 %v371
        %v774 = vunpack.c.l.b16 %v372
        %v775 = vunpack.c.h.b16 %v372
        %v776 = vunpack.c.l.b16 %v373
        %v777 = vunpack.c.h.b16 %v373
        %v778 = vunpack.c.l.b16 %v374
        %v779 = vunpack.c.h.b16 %v374
        %v780 = vunpack.c.l.b16 %v375
        %v781 = vunpack.c.h.b16 %v375
        %v782 = vunpack.c.l.b16 %v376
        %v783 = vunpack.c.h.b16 %v376
        %v784 = vunpack.c.l.b16 %v377
        %v785 = vunpack.c.h.b16 %v377
        %v786 = vunpack.c.l.b16 %v378
        %v787 = vunpack.c.h.b16 %v378
        %v788 = vunpack.c.l.b16 %v379
        %v789 = vunpack.c.h.b16 %v379
        %v790 = vunpack.c.l.b16 %v380
        %v791 = vunpack.c.h.b16 %v380
        %v792 = vunpack.c.l.b16 %v381
        %v793 = vunpack.c.h.b16 %v381
        %v794 = vunpack.c.l.b16 %v382
        %v795 = vunpack.c.h.b16 %v382
        %v796 = vunpack.c.l.b16 %v383
        %v797 = vunpack.c.h.b16 %v383
        %v798 = vunpack.c.l.b16 %v384
        %v799 = vunpack.c.h.b16 %v384
        %v800 = vunpack.c.l.b16 %v385
        %v801 = vunpack.c.h.b16 %v385
        %v802 = vunpack.c.l.b16 %v386
        %v803 = vunpack.c.h.b16 %v386
        %v804 = vunpack.c.l.b16 %v387
        %v805 = vunpack.c.h.b16 %v387
        %v806 = vunpack.c.l.b16 %v388
        %v807 = vunpack.c.h.b16 %v388
        %v808 = vunpack.c.l.b16 %v389
        %v809 = vunpack.c.h.b16 %v389
        %v810 = vunpack.c.l.b16 %v390
        %v811 = vunpack.c.h.b16 %v390
        %v812 = vunpack.c.l.b16 %v391
        %v813 = vunpack.c.h.b16 %v391
        %v814 = vunpack.c.l.b16 %v392
        %v815 = vunpack.c.h.b16 %v392
        %v816 = vunpack.c.l.b16 %v393
        %v817 = vunpack.c.h.b16 %v393
        %v818 = vunpack.c.l.b16 %v394
        %v819 = vunpack.c.h.b16 %v394
        %v820 = vunpack.c.l.b16 %v395
        %v821 = vunpack.c.h.b16 %v395
        %v822 = vunpack.c.l.b16 %v396
        %v823 = vunpack.c.h.b16 %v396
        %v824 = vunpack.c.l.b16 %v397
        %v825 = vunpack.c.h.b16 %v397
        %v826 = vunpack.c.l.b16 %v398
        %v827 = vunpack.c.h.b16 %v398
        %v828 = vunpack.c.l.b16 %v399
        %v829 = vunpack.c.h.b16 %v399
        %v830 = vunpack.c.l.b16 %v400
        %v831 = vunpack.c.h.b16 %v400
        %v832 = vunpack.c.l.b16 %v401
        %v833 = vunpack.c.h.b16 %v401
        %v834 = vunpack.c.l.b16 %v402
        %v835 = vunpack.c.h.b16 %v402
        %v836 = vunpack.c.l.b16 %v403
        %v837 = vunpack.c.h.b16 %v403
        %v838 = vunpack.c.l.b16 %v404
        %v839 = vunpack.c.h.b16 %v404
        %v840 = vunpack.c.l.b16 %v405
        %v841 = vunpack.c.h.b16 %v405
        %v842 = vunpack.c.l.b16 %v406
        %v843 = vunpack.c.h.b16 %v406
        %v844 = vunpack.c.l.b16 %v407
        %v845 = vunpack.c.h.b16 %v407
        %v846 = vunpack.c.l.b16 %v408
        %v847 = vunpack.c.h.b16 %v408
        %v848 = vunpack.c.l.b16 %v409
        %v849 = vunpack.c.h.b16 %v409
        %v850 = vunpack.c.l.b16 %v410
        %v851 = vunpack.c.h.b16 %v410
        %v852 = vunpack.c.l.b16 %v411
        %v853 = vunpack.c.h.b16 %v411
        %v854 = vunpack.c.l.b16 %v412
        %v855 = vunpack.c.h.b16 %v412
        %v856 = vunpack.c.l.b16 %v413
        %v857 = vunpack.c.h.b16 %v413
        %v858 = vunpack.c.l.b16 %v414
        %v859 = vunpack.c.h.b16 %v414
        %v860 = vunpack.c.l.b16 %v415
        %v861 = vunpack.c.h.b16 %v415
        %v862 = vunpack.c.l.b16 %v416
        %v863 = vunpack.c.h.b16 %v416
        %v864 = vunpack.c.l.b16 %v417
        %v865 = vunpack.c.h.b16 %v417
        %v866 = vunpack.c.l.b16 %v418
        %v867 = vunpack.c.h.b16 %v418
        %v868 = vunpack.c.l.b16 %v419
        %v869 = vunpack.c.h.b16 %v419
        %v870 = vunpack.c.l.b16 %v420
        %v871 = vunpack.c.h.b16 %v420
        %v872 = vunpack.c.l.b16 %v421
        %v873 = vunpack.c.h.b16 %v421
        %v874 = vunpack.c.l.b16 %v422
        %v875 = vunpack.c.h.b16 %v422
        %v876 = vunpack.c.l.b16 %v423
        %v877 = vunpack.c.h.b16 %v423
        %v878 = vunpack.c.l.b16 %v424
        %v879 = vunpack.c.h.b16 %v424
        %v880 = vunpack.c.l.b16 %v425
        %v881 = vunpack.c.h.b16 %v425
        %v882 = vunpack.c.l.b16 %v426
        %v883 = vunpack.c.h.b16 %v426
        %v884 = vunpack.c.l.b16 %v427
        %v885 = vunpack.c.h.b16 %v427
        %v886 = vunpack.c.l.b16 %v428
        %v887 = vunpack.c.h.b16 %v428
        %v888 = vunpack.c.l.b16 %v429
        %v889 = vunpack.c.h.b16 %v429
        %v890 = vunpack.c.l.b16 %v430
        %v891 = vunpack.c.h.b16 %v430
        %v892 = vunpack.c.l.b16 %v431
        %v893 = vunpack.c.h.b16 %v431
        %v894 = vunpack.c.l.b16 %v432
        %v895 = vunpack.c.h.b16 %v432
        %v896 = vunpack.c.l.b16 %v433
        %v897 = vunpack.c.h.b16 %v433
        %v898 = vunpack.c.l.b16 %v434
        %v899 = vunpack.c.h.b16 %v434
        %v900 = vunpack.c.l.b16 %v435
        %v901 = vunpack.c.h.b16 %v435
        %v902 = vunpack.c.l.b16 %v436
        %v903 = vunpack.c.h.b16 %v436
        %v904 = vunpack.c.l.b16 %v437
        %v905 = vunpack.c.h.b16 %v437
        %v906 = vunpack.c.l.b16 %v438
        %v907 = vunpack.c.h.b16 %v438
        %v908 = vunpack.c.l.b16 %v439
        %v909 = vunpack.c.h.b16 %v439
        %v910 = vunpack.c.l.b16 %v440
        %v911 = vunpack.c.h.b16 %v440
        %v912 = vunpack.c.l.b16 %v441
        %v913 = vunpack.c.h.b16 %v441
        %v914 = vunpack.c.l.b16 %v442
        %v915 = vunpack.c.h.b16 %v442
        %v916 = vunpack.c.l.b16 %v443
        %v917 = vunpack.c.h.b16 %v443
        %v918 = vunpack.c.l.b16 %v444
        %v919 = vunpack.c.h.b16 %v444
        %v920 = vunpack.c.l.b16 %v445
        %v921 = vunpack.c.h.b16 %v445
        %v922 = vunpack.c.l.b16 %v446
        %v923 = vunpack.c.h.b16 %v446
        %v924 = vunpack.c.l.b16 %v447
        %v925 = vunpack.c.h.b16 %v447
        %v926 = vunpack.c.l.b16 %v448
        %v927 = vunpack.c.h.b16 %v448
        %v928 = vunpack.c.l.b16 %v449
        %v929 = vunpack.c.h.b16 %v449
        %v930 = vunpack.c.l.b16 %v450
        %v931 = vunpack.c.h.b16 %v450
        %v932 = vunpack.c.l.b16 %v451
        %v933 = vunpack.c.h.b16 %v451
        %v934 = vunpack.c.l.b16 %v452
        %v935 = vunpack.c.h.b16 %v452
        %v936 = vunpack.c.l.b16 %v453
        %v937 = vunpack.c.h.b16 %v453
        %v938 = vunpack.c.l.b16 %v454
        %v939 = vunpack.c.h.b16 %v454
        %v940 = vunpack.c.l.b16 %v455
        %v941 = vunpack.c.h.b16 %v455
        %v942 = vunpack.c.l.b16 %v456
        %v943 = vunpack.c.h.b16 %v456
        %v944 = vunpack.c.l.b16 %v457
        %v945 = vunpack.c.h.b16 %v457
        %v946 = vunpack.c.l.b16 %v458
        %v947 = vunpack.c.h.b16 %v458
        %v948 = vunpack.c.l.b16 %v459
        %v949 = vunpack.c.h.b16 %v459
        %v950 = vunpack.c.l.b16 %v460
        %v951 = vunpack.c.h.b16 %v460
        %v952 = vunpack.c.l.b16 %v461
        %v953 = vunpack.c.h.b16 %v461
        %v954 = vunpack.c.l.b16 %v462
        %v955 = vunpack.c.h.b16 %v462
        %v956 = vunpack.c.l.b16 %v463
        %v957 = vunpack.c.h.b16 %v463
        %v958 = vunpack.c.l.b16 %v464
        %v959 = vunpack.c.h.b16 %v464
        %v960 = vunpack.c.l.b16 %v465
        %v961 = vunpack.c.h.b16 %v465
        %v962 = vunpack.c.l.b16 %v466
        %v963 = vunpack.c.h.b16 %v466
        %v964 = vunpack.c.l.b16 %v467
        %v965 = vunpack.c.h.b16 %v467
        %v966 = vunpack.c.l.b16 %v468
        %v967 = vunpack.c.h.b16 %v468
        %v968 = vunpack.c.l.b16 %v469
        %v969 = vunpack.c.h.b16 %v469
        %v970 = vunpack.c.l.b16 %v470
        %v971 = vunpack.c.h.b16 %v470
        %v972 = vunpack.c.l.b16 %v471
        %v973 = vunpack.c.h.b16 %v471
        %v974 = vpack.c.b16 %v658, %v654
        %v975 = vpack.c.b16 %v659, %v655
        %v976 = vpack.c.b16 %v660, %v656
        %v977 = vpack.c.b16 %v661, %v657
        %v978 = vpack.c.b16 %v666, %v662
        %v979 = vpack.c.b16 %v667, %v663
        %v980 = vpack.c.b16 %v668, %v664
        %v981 = vpack.c.b16 %v669, %v665
        %v982 = vpack.c.b16 %v674, %v670
        %v983 = vpack.c.b16 %v675, %v671
        %v984 = vpack.c.b16 %v676, %v672
        %v985 = vpack.c.b16 %v677, %v673
        %v986 = vpack.c.b16 %v682, %v678
        %v987 = vpack.c.b16 %v683, %v679
        %v988 = vpack.c.b16 %v684, %v680
        %v989 = vpack.c.b16 %v685, %v681
        %v990 = vpack.c.b16 %v690, %v686
        %v991 = vpack.c.b16 %v691, %v687
        %v992 = vpack.c.b16 %v692, %v688
        %v993 = vpack.c.b16 %v693, %v689
        %v994 = vpack.c.b16 %v698, %v694
        %v995 = vpack.c.b16 %v699, %v695
        %v996 = vpack.c.b16 %v700, %v696
        %v997 = vpack.c.b16 %v701, %v697
        %v998 = vpack.c.b16 %v706, %v702
        %v999 = vpack.c.b16 %v707, %v703
        %v1000 = vpack.c.b16 %v708, %v704
        %v1001 = vpack.c.b16 %v709, %v705
        %v1002 = vpack.c.b16 %v714, %v710
        %v1003 = vpack.c.b16 %v715, %v711
        %v1004 = vpack.c.b16 %v716, %v712
        %v1005 = vpack.c.b16 %v717, %v713
        %v1006 = vpack.c.b16 %v722, %v718
        %v1007 = vpack.c.b16 %v723, %v719
        %v1008 = vpack.c.b16 %v724, %v720
        %v1009 = vpack.c.b16 %v725, %v721
        %v1010 = vpack.c.b16 %v730, %v726
        %v1011 = vpack.c.b16 %v731, %v727
        %v1012 = vpack.c.b16 %v732, %v728
        %v1013 = vpack.c.b16 %v733, %v729
        %v1014 = vpack.c.b16 %v738, %v734
        %v1015 = vpack.c.b16 %v739, %v735
        %v1016 = vpack.c.b16 %v740, %v736
        %v1017 = vpack.c.b16 %v741, %v737
        %v1018 = vpack.c.b16 %v746, %v742
        %v1019 = vpack.c.b16 %v747, %v743
        %v1020 = vpack.c.b16 %v748, %v744
        %v1021 = vpack.c.b16 %v749, %v745
        %v1022 = vpack.c.b16 %v754, %v750
        %v1023 = vpack.c.b16 %v755, %v751
        %v1024 = vpack.c.b16 %v756, %v752
        %v1025 = vpack.c.b16 %v757, %v753
        %v1026 = vpack.c.b16 %v762, %v758
        %v1027 = vpack.c.b16 %v763, %v759
        %v1028 = vpack.c.b16 %v764, %v760
        %v1029 = vpack.c.b16 %v765, %v761
        %v1030 = vpack.c.b16 %v770, %v766
        %v1031 = vpack.c.b16 %v771, %v767
        %v1032 = vpack.c.b16 %v772, %v768
        %v1033 = vpack.c.b16 %v773, %v769
        %v1034 = vpack.c.b16 %v778, %v774
        %v1035 = vpack.c.b16 %v779, %v775
        %v1036 = vpack.c.b16 %v780, %v776
        %v1037 = vpack.c.b16 %v781, %v777
        %v1038 = vpack.c.b16 %v786, %v782
        %v1039 = vpack.c.b16 %v787, %v783
        %v1040 = vpack.c.b16 %v788, %v784
        %v1041 = vpack.c.b16 %v789, %v785
        %v1042 = vpack.c.b16 %v794, %v790
        %v1043 = vpack.c.b16 %v795, %v791
        %v1044 = vpack.c.b16 %v796, %v792
        %v1045 = vpack.c.b16 %v797, %v793
        %v1046 = vpack.c.b16 %v802, %v798
        %v1047 = vpack.c.b16 %v803, %v799
        %v1048 = vpack.c.b16 %v804, %v800
        %v1049 = vpack.c.b16 %v805, %v801
        %v1050 = vpack.c.b16 %v810, %v806
        %v1051 = vpack.c.b16 %v811, %v807
        %v1052 = vpack.c.b16 %v812, %v808
        %v1053 = vpack.c.b16 %v813, %v809
        %v1054 = vpack.c.b16 %v818, %v814
        %v1055 = vpack.c.b16 %v819, %v815
        %v1056 = vpack.c.b16 %v820, %v816
        %v1057 = vpack.c.b16 %v821, %v817
        %v1058 = vpack.c.b16 %v826, %v822
        %v1059 = vpack.c.b16 %v827, %v823
        %v1060 = vpack.c.b16 %v828, %v824
        %v1061 = vpack.c.b16 %v829, %v825
        %v1062 = vpack.c.b16 %v834, %v830
        %v1063 = vpack.c.b16 %v835, %v831
        %v1064 = vpack.c.b16 %v836, %v832
        %v1065 = vpack.c.b16 %v837, %v833
        %v1066 = vpack.c.b16 %v842, %v838
        %v1067 = vpack.c.b16 %v843, %v839
        %v1068 = vpack.c.b16 %v844, %v840
        %v1069 = vpack.c.b16 %v845, %v841
        %v1070 = vpack.c.b16 %v850, %v846
        %v1071 = vpack.c.b16 %v851, %v847
        %v1072 = vpack.c.b16 %v852, %v848
        %v1073 = vpack.c.b16 %v853, %v849
        %v1074 = vpack.c.b16 %v858, %v854
        %v1075 = vpack.c.b16 %v859, %v855
        %v1076 = vpack.c.b16 %v860, %v856
        %v1077 = vpack.c.b16 %v861, %v857
        %v1078 = vpack.c.b16 %v866, %v862
        %v1079 = vpack.c.b16 %v867, %v863
        %v1080 = vpack.c.b16 %v868, %v864
        %v1081 = vpack.c.b16 %v869, %v865
        %v1082 = vpack.c.b16 %v874, %v870
        %v1083 = vpack.c.b16 %v875, %v871
        %v1084 = vpack.c.b16 %v876, %v872
        %v1085 = vpack.c.b16 %v877, %v873
        %v1086 = vpack.c.b16 %v882, %v878
        %v1087 = vpack.c.b16 %v883, %v879
        %v1088 = vpack.c.b16 %v884, %v880
        %v1089 = vpack.c.b16 %v885, %v881
        %v1090 = vpack.c.b16 %v890, %v886
        %v1091 = vpack.c.b16 %v891, %v887
        %v1092 = vpack.c.b16 %v892, %v888
        %v1093 = vpack.c.b16 %v893, %v889
        %v1094 = vpack.c.b16 %v898, %v894
        %v1095 = vpack.c.b16 %v899, %v895
        %v1096 = vpack.c.b16 %v900, %v896
        %v1097 = vpack.c.b16 %v901, %v897
        %v1098 = vpack.c.b16 %v906, %v902
        %v1099 = vpack.c.b16 %v907, %v903
        %v1100 = vpack.c.b16 %v908, %v904
        %v1101 = vpack.c.b16 %v909, %v905
        %v1102 = vpack.c.b16 %v914, %v910
        %v1103 = vpack.c.b16 %v915, %v911
        %v1104 = vpack.c.b16 %v916, %v912
        %v1105 = vpack.c.b16 %v917, %v913
        %v1106 = vpack.c.b16 %v922, %v918
        %v1107 = vpack.c.b16 %v923, %v919
        %v1108 = vpack.c.b16 %v924, %v920
        %v1109 = vpack.c.b16 %v925, %v921
        %v1110 = vpack.c.b16 %v930, %v926
        %v1111 = vpack.c.b16 %v931, %v927
        %v1112 = vpack.c.b16 %v932, %v928
        %v1113 = vpack.c.b16 %v933, %v929
        %v1114 = vpack.c.b16 %v938, %v934
        %v1115 = vpack.c.b16 %v939, %v935
        %v1116 = vpack.c.b16 %v940, %v936
        %v1117 = vpack.c.b16 %v941, %v937
        %v1118 = vpack.c.b16 %v946, %v942
        %v1119 = vpack.c.b16 %v947, %v943
        %v1120 = vpack.c.b16 %v948, %v944
        %v1121 = vpack.c.b16 %v949, %v945
        %v1122 = vpack.c.b16 %v954, %v950
        %v1123 = vpack.c.b16 %v955, %v951
        %v1124 = vpack.c.b16 %v956, %v952
        %v1125 = vpack.c.b16 %v957, %v953
        %v1126 = vpack.c.b16 %v962, %v958
        %v1127 = vpack.c.b16 %v963, %v959
        %v1128 = vpack.c.b16 %v964, %v960
        %v1129 = vpack.c.b16 %v965, %v961
        %v1130 = vpack.c.b16 %v970, %v966
        %v1131 = vpack.c.b16 %v971, %v967
        %v1132 = vpack.c.b16 %v972, %v968
        %v1133 = vpack.c.b16 %v973, %v969
        %1294 = vmatprep.subr.bf16.mxu0 %v975
        %1295 = vmatpush1.bf16.msra.mxu0 %v974
        %1296 = vmatprep.subr.bf16.mxu0 %v979
        %1297 = vmatpush1.bf16.msra.mxu0 %v978
        %1298 = vmatprep.subr.bf16.mxu0 %v983
        %1299 = vmatpush1.bf16.msra.mxu0 %v982
        %1300 = vmatprep.subr.bf16.mxu0 %v987
        %1301 = vmatpush1.bf16.msra.mxu0 %v986
        %1302 = vmatprep.subr.bf16.mxu0 %v991
        %1303 = vmatpush1.bf16.msra.mxu0 %v990
        %1304 = vmatprep.subr.bf16.mxu0 %v995
        %1305 = vmatpush1.bf16.msra.mxu0 %v994
        %1306 = vmatprep.subr.bf16.mxu0 %v999
        %1307 = vmatpush1.bf16.msra.mxu0 %v998
        %1308 = vmatprep.subr.bf16.mxu0 %v1003
        %1309 = vmatpush1.bf16.msra.mxu0 %v1002
        %1310 = vmatprep.subr.bf16.mxu0 %v1007
        %1311 = vmatpush1.bf16.msra.mxu0 %v1006
        %1312 = vmatprep.subr.bf16.mxu0 %v1011
        %1313 = vmatpush1.bf16.msra.mxu0 %v1010
        %1314 = vmatprep.subr.bf16.mxu0 %v1015
        %1315 = vmatpush1.bf16.msra.mxu0 %v1014
        %1316 = vmatprep.subr.bf16.mxu0 %v1019
        %1317 = vmatpush1.bf16.msra.mxu0 %v1018
        %1318 = vmatprep.subr.bf16.mxu0 %v1023
        %1319 = vmatpush1.bf16.msra.mxu0 %v1022
        %1320 = vmatprep.subr.bf16.mxu0 %v1027
        %1321 = vmatpush1.bf16.msra.mxu0 %v1026
        %1322 = vmatprep.subr.bf16.mxu0 %v1031
        %1323 = vmatpush1.bf16.msra.mxu0 %v1030
        %1324 = vmatprep.subr.bf16.mxu0 %v1035
        %1325 = vmatpush1.bf16.msra.mxu0 %v1034
        %1326 = vmatprep.mubr.bf16.mxu0 %v310
        %1327 = vmatmul.mubr.bf16.gmra.mrb[0].mxu0 %v289
        %v1328 = vpop.f32.mrb[0].mxu0
        %v1329 = vadd.f32 %v477, %v1328
        %v1330 = vpop.f32.mrb[0].mxu0
        %v1331 = vadd.f32 %v481, %v1330
        %v1332 = vpop.f32.mrb[0].mxu0
        %v1333 = vadd.f32 %v477, %v1332
        %v1334 = vpop.f32.mrb[0].mxu0
        %v1335 = vadd.f32 %v481, %v1334
        %1336 = vdwg.mxu0
        %1337 = vmatprep.subr.bf16.mxu0 %v1039
        %1338 = vmatpush1.bf16.msra.mxu0 %v1038
        %1339 = vmatprep.subr.bf16.mxu0 %v1043
        %1340 = vmatpush1.bf16.msra.mxu0 %v1042
        %1341 = vmatprep.subr.bf16.mxu0 %v1047
        %1342 = vmatpush1.bf16.msra.mxu0 %v1046
        %1343 = vmatprep.subr.bf16.mxu0 %v1051
        %1344 = vmatpush1.bf16.msra.mxu0 %v1050
        %1345 = vmatprep.subr.bf16.mxu0 %v1055
        %1346 = vmatpush1.bf16.msra.mxu0 %v1054
        %1347 = vmatprep.subr.bf16.mxu0 %v1059
        %1348 = vmatpush1.bf16.msra.mxu0 %v1058
        %1349 = vmatprep.subr.bf16.mxu0 %v1063
        %1350 = vmatpush1.bf16.msra.mxu0 %v1062
        %1351 = vmatprep.subr.bf16.mxu0 %v1067
        %1352 = vmatpush1.bf16.msra.mxu0 %v1066
        %1353 = vmatprep.subr.bf16.mxu0 %v1071
        %1354 = vmatpush1.bf16.msra.mxu0 %v1070
        %1355 = vmatprep.subr.bf16.mxu0 %v1075
        %1356 = vmatpush1.bf16.msra.mxu0 %v1074
        %1357 = vmatprep.subr.bf16.mxu0 %v1079
        %1358 = vmatpush1.bf16.msra.mxu0 %v1078
        %1359 = vmatprep.subr.bf16.mxu0 %v1083
        %1360 = vmatpush1.bf16.msra.mxu0 %v1082
        %1361 = vmatprep.subr.bf16.mxu0 %v1087
        %1362 = vmatpush1.bf16.msra.mxu0 %v1086
        %1363 = vmatprep.subr.bf16.mxu0 %v1091
        %1364 = vmatpush1.bf16.msra.mxu0 %v1090
        %1365 = vmatprep.subr.bf16.mxu0 %v1095
        %1366 = vmatpush1.bf16.msra.mxu0 %v1094
        %1367 = vmatprep.subr.bf16.mxu0 %v1099
        %1368 = vmatpush1.bf16.msra.mxu0 %v1098
        %1369 = vmatprep.mubr.bf16.mxu0 %v305
        %1370 = vmatmul.mubr.bf16.gmra.mrb[0].mxu0 %v296
        %v1371 = vpop.f32.mrb[0].mxu0
        %v1372 = vadd.f32 %v1329, %v1371
        %v1373 = vpop.f32.mrb[0].mxu0
        %v1374 = vadd.f32 %v1331, %v1373
        %v1375 = vpop.f32.mrb[0].mxu0
        %v1376 = vadd.f32 %v1333, %v1375
        %v1377 = vpop.f32.mrb[0].mxu0
        %v1378 = vadd.f32 %v1335, %v1377
        %1379 = vdwg.mxu0
        %1380 = vmatprep.subr.bf16.mxu0 %v1103
        %1381 = vmatpush1.bf16.msra.mxu0 %v1102
        %1382 = vmatprep.subr.bf16.mxu0 %v1107
        %1383 = vmatpush1.bf16.msra.mxu0 %v1106
        %1384 = vmatprep.subr.bf16.mxu0 %v1111
        %1385 = vmatpush1.bf16.msra.mxu0 %v1110
        %1386 = vmatprep.subr.bf16.mxu0 %v1115
        %1387 = vmatpush1.bf16.msra.mxu0 %v1114
        %1388 = vmatprep.subr.bf16.mxu0 %v1119
        %1389 = vmatpush1.bf16.msra.mxu0 %v1118
        %1390 = vmatprep.subr.bf16.mxu0 %v1123
        %1391 = vmatpush1.bf16.msra.mxu0 %v1122
        %1392 = vmatprep.subr.bf16.mxu0 %v1127
        %1393 = vmatpush1.bf16.msra.mxu0 %v1126
        %1394 = vmatprep.subr.bf16.mxu0 %v1131
        %1395 = vmatpush1.bf16.msra.mxu0 %v1130
        %1396 = vmatprep.subr.bf16.mxu0 0
        %1397 = vmatpush1.bf16.msra.mxu0 0
        %1398 = vmatprep.subr.bf16.mxu0 0
        %1399 = vmatpush1.bf16.msra.mxu0 0
        %1400 = vmatprep.subr.bf16.mxu0 0
        %1401 = vmatpush1.bf16.msra.mxu0 0
        %1402 = vmatprep.subr.bf16.mxu0 0
        %1403 = vmatpush1.bf16.msra.mxu0 0
        %1404 = vmatprep.subr.bf16.mxu0 0
        %1405 = vmatpush1.bf16.msra.mxu0 0
        %1406 = vmatprep.subr.bf16.mxu0 0
        %1407 = vmatpush1.bf16.msra.mxu0 0
        %1408 = vmatprep.subr.bf16.mxu0 0
        %1409 = vmatpush1.bf16.msra.mxu0 0
        %1410 = vmatprep.subr.bf16.mxu0 0
        %1411 = vmatpush1.bf16.msra.mxu0 0
        %1412 = vmatprep.mubr.bf16.mxu0 0
        %1413 = vmatmul.mubr.bf16.gmra.mrb[0].mxu0 %v304
        %v1414 = vpop.f32.mrb[0].mxu0
        %v1415 = vadd.f32 %v1372, %v1414
        %v1416 = vpop.f32.mrb[0].mxu0
        %v1417 = vadd.f32 %v1374, %v1416
        %v1418 = vpop.f32.mrb[0].mxu0
        %v1419 = vadd.f32 %v1376, %v1418
        %v1420 = vpop.f32.mrb[0].mxu0
        %v1421 = vadd.f32 %v1378, %v1420
        %1422 = vdwg.mxu0
        %1423 = vmatprep.subr.bf16.mxu0 %v977
        %1424 = vmatpush1.bf16.msra.mxu0 %v976
        %1425 = vmatprep.subr.bf16.mxu0 %v981
        %1426 = vmatpush1.bf16.msra.mxu0 %v980
        %1427 = vmatprep.subr.bf16.mxu0 %v985
        %1428 = vmatpush1.bf16.msra.mxu0 %v984
        %1429 = vmatprep.subr.bf16.mxu0 %v989
        %1430 = vmatpush1.bf16.msra.mxu0 %v988
        %1431 = vmatprep.subr.bf16.mxu0 %v993
        %1432 = vmatpush1.bf16.msra.mxu0 %v992
        %1433 = vmatprep.subr.bf16.mxu0 %v997
        %1434 = vmatpush1.bf16.msra.mxu0 %v996
        %1435 = vmatprep.subr.bf16.mxu0 %v1001
        %1436 = vmatpush1.bf16.msra.mxu0 %v1000
        %1437 = vmatprep.subr.bf16.mxu0 %v1005
        %1438 = vmatpush1.bf16.msra.mxu0 %v1004
        %1439 = vmatprep.subr.bf16.mxu0 %v1009
        %1440 = vmatpush1.bf16.msra.mxu0 %v1008
        %1441 = vmatprep.subr.bf16.mxu0 %v1013
        %1442 = vmatpush1.bf16.msra.mxu0 %v1012
        %1443 = vmatprep.subr.bf16.mxu0 %v1017
        %1444 = vmatpush1.bf16.msra.mxu0 %v1016
        %1445 = vmatprep.subr.bf16.mxu0 %v1021
        %1446 = vmatpush1.bf16.msra.mxu0 %v1020
        %1447 = vmatprep.subr.bf16.mxu0 %v1025
        %1448 = vmatpush1.bf16.msra.mxu0 %v1024
        %1449 = vmatprep.subr.bf16.mxu0 %v1029
        %1450 = vmatpush1.bf16.msra.mxu0 %v1028
        %1451 = vmatprep.subr.bf16.mxu0 %v1033
        %1452 = vmatpush1.bf16.msra.mxu0 %v1032
        %1453 = vmatprep.subr.bf16.mxu0 %v1037
        %1454 = vmatpush1.bf16.msra.mxu0 %v1036
        %1455 = vmatprep.mubr.bf16.mxu0 %v310
        %1456 = vmatmul.mubr.bf16.gmra.mrb[0].mxu0 %v289
        %v1457 = vpop.f32.mrb[0].mxu0
        %v1458 = vadd.f32 %v485, %v1457
        %v1459 = vpop.f32.mrb[0].mxu0
        %v1460 = vadd.f32 %v489, %v1459
        %v1461 = vpop.f32.mrb[0].mxu0
        %v1462 = vadd.f32 %v485, %v1461
        %v1463 = vpop.f32.mrb[0].mxu0
        %v1464 = vadd.f32 %v489, %v1463
        %1465 = vdwg.mxu0
        %1466 = vmatprep.subr.bf16.mxu0 %v1041
        %1467 = vmatpush1.bf16.msra.mxu0 %v1040
        %1468 = vmatprep.subr.bf16.mxu0 %v1045
        %1469 = vmatpush1.bf16.msra.mxu0 %v1044
        %1470 = vmatprep.subr.bf16.mxu0 %v1049
        %1471 = vmatpush1.bf16.msra.mxu0 %v1048
        %1472 = vmatprep.subr.bf16.mxu0 %v1053
        %1473 = vmatpush1.bf16.msra.mxu0 %v1052
        %1474 = vmatprep.subr.bf16.mxu0 %v1057
        %1475 = vmatpush1.bf16.msra.mxu0 %v1056
        %1476 = vmatprep.subr.bf16.mxu0 %v1061
        %1477 = vmatpush1.bf16.msra.mxu0 %v1060
        %1478 = vmatprep.subr.bf16.mxu0 %v1065
        %1479 = vmatpush1.bf16.msra.mxu0 %v1064
        %1480 = vmatprep.subr.bf16.mxu0 %v1069
        %1481 = vmatpush1.bf16.msra.mxu0 %v1068
        %1482 = vmatprep.subr.bf16.mxu0 %v1073
        %1483 = vmatpush1.bf16.msra.mxu0 %v1072
        %1484 = vmatprep.subr.bf16.mxu0 %v1077
        %1485 = vmatpush1.bf16.msra.mxu0 %v1076
        %1486 = vmatprep.subr.bf16.mxu0 %v1081
        %1487 = vmatpush1.bf16.msra.mxu0 %v1080
        %1488 = vmatprep.subr.bf16.mxu0 %v1085
        %1489 = vmatpush1.bf16.msra.mxu0 %v1084
        %1490 = vmatprep.subr.bf16.mxu0 %v1089
        %1491 = vmatpush1.bf16.msra.mxu0 %v1088
        %1492 = vmatprep.subr.bf16.mxu0 %v1093
        %1493 = vmatpush1.bf16.msra.mxu0 %v1092
        %1494 = vmatprep.subr.bf16.mxu0 %v1097
        %1495 = vmatpush1.bf16.msra.mxu0 %v1096
        %1496 = vmatprep.subr.bf16.mxu0 %v1101
        %1497 = vmatpush1.bf16.msra.mxu0 %v1100
        %1498 = vmatprep.mubr.bf16.mxu0 %v305
        %1499 = vmatmul.mubr.bf16.gmra.mrb[0].mxu0 %v296
        %v1500 = vpop.f32.mrb[0].mxu0
        %v1501 = vadd.f32 %v1458, %v1500
        %v1502 = vpop.f32.mrb[0].mxu0
        %v1503 = vadd.f32 %v1460, %v1502
        %v1504 = vpop.f32.mrb[0].mxu0
        %v1505 = vadd.f32 %v1462, %v1504
        %v1506 = vpop.f32.mrb[0].mxu0
        %v1507 = vadd.f32 %v1464, %v1506
        %1508 = vdwg.mxu0
        %1509 = vmatprep.subr.bf16.mxu0 %v1105
        %1510 = vmatpush1.bf16.msra.mxu0 %v1104
        %1511 = vmatprep.subr.bf16.mxu0 %v1109
        %1512 = vmatpush1.bf16.msra.mxu0 %v1108
        %1513 = vmatprep.subr.bf16.mxu0 %v1113
        %1514 = vmatpush1.bf16.msra.mxu0 %v1112
        %1515 = vmatprep.subr.bf16.mxu0 %v1117
        %1516 = vmatpush1.bf16.msra.mxu0 %v1116
        %1517 = vmatprep.subr.bf16.mxu0 %v1121
        %1518 = vmatpush1.bf16.msra.mxu0 %v1120
        %1519 = vmatprep.subr.bf16.mxu0 %v1125
        %1520 = vmatpush1.bf16.msra.mxu0 %v1124
        %1521 = vmatprep.subr.bf16.mxu0 %v1129
        %1522 = vmatpush1.bf16.msra.mxu0 %v1128
        %1523 = vmatprep.subr.bf16.mxu0 %v1133
        %1524 = vmatpush1.bf16.msra.mxu0 %v1132
        %1525 = vmatprep.subr.bf16.mxu0 0
        %1526 = vmatpush1.bf16.msra.mxu0 0
        %1527 = vmatprep.subr.bf16.mxu0 0
        %1528 = vmatpush1.bf16.msra.mxu0 0
        %1529 = vmatprep.subr.bf16.mxu0 0
        %1530 = vmatpush1.bf16.msra.mxu0 0
        %1531 = vmatprep.subr.bf16.mxu0 0
        %1532 = vmatpush1.bf16.msra.mxu0 0
        %1533 = vmatprep.subr.bf16.mxu0 0
        %1534 = vmatpush1.bf16.msra.mxu0 0
        %1535 = vmatprep.subr.bf16.mxu0 0
        %1536 = vmatpush1.bf16.msra.mxu0 0
        %1537 = vmatprep.subr.bf16.mxu0 0
        %1538 = vmatpush1.bf16.msra.mxu0 0
        %1539 = vmatprep.subr.bf16.mxu0 0
        %1540 = vmatpush1.bf16.msra.mxu0 0
        %1541 = vmatprep.mubr.bf16.mxu0 0
        %1542 = vmatmul.mubr.bf16.gmra.mrb[0].mxu0 %v304
        %v1543 = vpop.f32.mrb[0].mxu0
        %v1544 = vadd.f32 %v1501, %v1543
        %v1545 = vpop.f32.mrb[0].mxu0
        %v1546 = vadd.f32 %v1503, %v1545
        %v1547 = vpop.f32.mrb[0].mxu0
        %v1548 = vadd.f32 %v1505, %v1547
        %v1549 = vpop.f32.mrb[0].mxu0
        %v1550 = vadd.f32 %v1507, %v1549
        %1551 = vdwg.mxu0
        %v1552 = vmul.f32 %v1415, 0.5
        %v1553 = vmul.f32 %v1419, 0.5
        %v1554 = vtanh.pop %v1552
        %v1555 = vtanh.pop %v1553
        %v1556 = vadd.f32 %v1554, 1.0
        %v1557 = vadd.f32 %v1555, 1.0
        %v1558 = vmul.f32 %v1556, 0.5
        %v1559 = vmul.f32 %v1557, 0.5
        %v1560 = vmul.f32 %v1417, 0.5
        %v1561 = vmul.f32 %v1421, 0.5
        %v1562 = vtanh.pop %v1560
        %v1563 = vtanh.pop %v1561
        %v1564 = vadd.f32 %v1562, 1.0
        %v1565 = vadd.f32 %v1563, 1.0
        %v1566 = vmul.f32 %v1564, 0.5
        %v1567 = vmul.f32 %v1565, 0.5
        %v1568 = vmul.f32 %v1544, 0.5
        %v1569 = vmul.f32 %v1548, 0.5
        %v1570 = vtanh.pop %v1568
        %v1571 = vtanh.pop %v1569
        %v1572 = vadd.f32 %v1570, 1.0
        %v1573 = vadd.f32 %v1571, 1.0
        %v1574 = vmul.f32 %v1572, 0.5
        %v1575 = vmul.f32 %v1573, 0.5
        %v1576 = vtanh.pop %v1546
        %v1577 = vtanh.pop %v1550
        %v1578 = vld [vmem:[#allocation3] sm:$0xff]
        %v1579 = vld [vmem:[#allocation3 + $0x8] sm:$0xff]
        %v1580 = vmul.f32 %v1558, %v1578
        %v1581 = vmul.f32 %v1559, %v1579
        %v1582 = vmul.f32 %v1566, %v1576
        %v1583 = vmul.f32 %v1567, %v1577
        %v1584 = vadd.f32 %v1580, %v1582
        %v1585 = vadd.f32 %v1581, %v1583
        %v1586 = vtanh.pop %v1584
        %v1587 = vtanh.pop %v1585
        %v1588 = vmul.f32 %v1574, %v1586
        %v1589 = vmul.f32 %v1575, %v1587
        %1590 = vst [vmem:[#allocation3] sm:$0xff] %v1584
        %1591 = vst [vmem:[#allocation3 + $0x8] sm:$0xff] %v1585
        %1592 = vst [vmem:[#allocation2] sm:$0xff] %v1588
        %1593 = vst [vmem:[#allocation2 + $0x8] sm:$0xff] %v1589
        %v1594 = vadd.f32 %v1588, %v272
        %v1595 = vadd.f32 %v1589, %v273
        %v1596 = vpack.c.bf16 %v1595, %v1594
        %v1598 = vunpack.c.l.b16 %v1596
        %v1599 = vunpack.c.h.b16 %v1596
        %v1600 = vpack.c.b16 %v1598, %v1598
        %v1601 = vpack.c.b16 %v1599, %v1599
        %1604 = vst [vmem:[%s236] sm:$0xf] %v1600
        %1605 = vst [vmem:[%s236 + $0x4] sm:$0xf] %v1601
        %s1606 = smul.u32 2, %s20
        %p1607 = scmp.lt.s32.totalorder %s21, 7
        %s1608 = scalar_select %p1607, %s21, 7
        %p1609 = scmp.lt.s32.totalorder %s1606, 1
        %s1610 = scalar_select %p1609, %s1606, 1
        %s1611 = smul.addr %s1608, 2
        %s1612 = sadd.s32 %s1610, %s1611
        %s1613 = smul.addr %s1612, 4
        %s1614 = scalar_lea.vmem %s3, %s1613
        // Predicated region
        $region45: #{pixel_rnn_forward.3} parent=31 // pred_check
          %p1615 = pneg %p118
        $region46: #{pixel_rnn_forward.3} parent=31 // pred_check_branch
          %1617 = sbr.rel (%p1615) target = $region48
        $region47: #{pixel_rnn_forward.3} parent=31 // pred_region
          %s1618 = smul.u32 2, %s20
        $region48: #{pixel_rnn_forward.3} parent=31 // pred_fallthru
          _
      $region32: #{pixel_rnn_forward.3} parent=5 // pred_fallthru
        _
      %p1619 = scmp.le.s32.totalorder 2, %s11
      // Predicated region
      $region49: #{pixel_rnn_forward.3} parent=5 // pred_check
        %p1620 = pneg %p1619
      $region50: #{pixel_rnn_forward.3} parent=5 // pred_check_branch
        %1622 = sbr.rel (%p1620) target = $region52
      $region51: #{pixel_rnn_forward.3} parent=5 // pred_region
        %s1623 = ssub.s32 %s11, 2
        // Predicated region
        $region53: #{pixel_rnn_forward.3} parent=51 // pred_check
          %p1624 = pneg %p124
        $region54: #{pixel_rnn_forward.3} parent=51 // pred_check_branch
          %1626 = sbr.rel (%p1624) target = $region56
        $region55: #{pixel_rnn_forward.3} parent=51 // pred_region
          %s1627 = smul.u32 2, %s22
          %p1628 = scmp.lt.s32.totalorder %s23, 7
          %s1629 = scalar_select %p1628, %s23, 7
          %p1630 = scmp.lt.s32.totalorder %s1627, 1
          %s1631 = scalar_select %p1630, %s1627, 1
          %s1632 = smul.addr %s1629, 2
          %s1633 = sadd.s32 %s1631, %s1632
          %s1634 = smul.addr %s1633, 4
          %s1635 = scalar_lea.vmem %s3, %s1634
        $region56: #{pixel_rnn_forward.3} parent=51 // pred_fallthru
          _
      $region52: #{pixel_rnn_forward.3} parent=5 // pred_fallthru
        _
    $region6: #{pixel_rnn_forward.3} parent=1 // loop_footer
      %s15 = sadd.s32 1, %s11
    $region7: #{pixel_rnn_forward.3} parent=1 // loop_footer_branch
      %10 = sbr.rel target = $region3
    $region8: #{pixel_rnn_forward.3} parent=1 // loop_exit
      _
    %1636 = vsyncpa [#allocation7], 1
    %s1637 = scalar_lea.sflag [#allocation7], 1
    %1638 = vsyncpa %s1637, 1
    %1639 = vsyncpa [#allocation9], 1

// kernel: pixel_rnn_forward.4
$region0: #{pixel_rnn_forward.4}
  #allocation0 [shape = 'u32[]', space=smem, size = 0x4, offset = 0x4, fixed_abs, tag = 'smem constant byte address 0x4 - core index']
  #allocation1 [shape = 'u32[144,128]{1,0:T(1,128)}', space=vmem, size = 0x12000, scoped, tag = 'internal scratch']
  #allocation2 [shape = 'f32[16,128]{1,0:T(8,128)}', space=vmem, size = 0x2000, scoped, tag = 'scratch operand']
  #allocation3 [shape = 'f32[16,128]{1,0:T(8,128)}', space=vmem, size = 0x2000, scoped, tag = 'scratch operand']
  #allocation4 [shape = 'f32[16,128]{1,0:T(8,128)}', space=vmem, size = 0x2000, scoped, tag = 'scratch operand']
  #allocation5 [shape = 'f32[16,128]{1,0:T(8,128)}', space=vmem, size = 0x2000, scoped, tag = 'scratch operand']
  %s0 = inlined_call_operand.vmem [shape: bf16[8,16,128], index: 0, kind: input, shape index: {}]
  %s1 = inlined_call_operand.vmem [shape: bf16[640,512], index: 1, kind: input, shape index: {}]
  %s2 = inlined_call_operand.vmem [shape: f32[1,512], index: 2, kind: input, shape index: {}]
  %s3 = inlined_call_operand.vmem [shape: bf16[8,16,128], index: 3, kind: output, shape index: {}]
  %s4 = sld [smem:[#allocation0]]
  $region49: #{pixel_rnn_forward.4} parent=0
    _
  %s6 = ssub.s32 1, %s4
  %s7 = scalar_select 0, %s6, %s4
  loop: start=0, step=1, limit=10
  $region2: #{pixel_rnn_forward.4} parent=0 // loop_pre_header
    _
  $region3: #{pixel_rnn_forward.4} parent=0 // loop_header
    %s9 = sphi 0, %s13
    %p10 = scmp.ge.s32.totalorder %s9, 10
    %s16 = sphi 0, %s28
    %s17 = sphi 0, %s24
    %s18 = sphi 0, %s16
    %s19 = sphi 0, %s17
    %s20 = sphi 0, %s18
    %s21 = sphi 0, %s19
    %s33 = sphi 0, %s35
    %s36 = sphi 0, %s33
    %s37 = sphi 0, %s36
    %s53 = sphi 0, %s37
    %s57 = sphi 0, %s57
    %s59 = sphi 0, %s57
    %s60 = sphi 0, %s59
    %s74 = sphi 0, %s60
    %s78 = sphi 0, %s78
    %s80 = sphi 0, %s78
    %s81 = sphi 0, %s80
    %s95 = sphi 0, %s81
    %s103 = sphi 0, %s105
    %s106 = sphi 0, %s103
    %s107 = sphi 0, %s106
    %s123 = sphi 0, %s107
  $region4: #{pixel_rnn_forward.4} parent=0 // loop_header_branch
    %12 = sbr.rel (%p10) target = $region8
  $region5: #{pixel_rnn_forward.4} parent=0 // loop_body
    %s14 = ssub.s32 %s9, 1
    %s15 = ssub.s32 %s9, 2
    %s22 = sadd.s32 1, %s17
    %p23 = scmp.ge.s32.totalorder %s22, 8
    %s24 = scalar_select %p23, 0, %s22
    %s25 = sadd.s32 1, %s16
    %s26 = scalar_select %p23, %s25, %s16
    %p27 = scmp.ge.s32.totalorder %s26, 1
    %s28 = scalar_select %p27, 0, %s26
    %s29 = ssub.s32 %s17, %s24
    %s30 = ssub.s32 %s16, %s28
    %s31 = sor.u32 %s29, %s30
    %p32 = scmp.eq.s32.totalorder %s31, 0
    %s34 = sadd.s32 %s33, 1
    %s35 = scalar_select %p32, %s33, %s34
    %p38 = pneg %p32
    %p39 = scmp.eq.s32.totalorder %s9, 7
    %p40 = por %p38, %p39
    %p41 = scmp.ne.s32.totalorder %s33, %s36
    %p42 = scmp.eq.s32.totalorder %s9, 0
    %p43 = por %p41, %p42
    %p44 = scmp.ne.s32.totalorder %s33, %s36
    %p45 = scmp.eq.s32.totalorder %s14, 7
    %p46 = por %p44, %p45
    %p47 = scmp.ne.s32.totalorder %s36, %s37
    %p48 = scmp.eq.s32.totalorder %s14, 0
    %p49 = por %p47, %p48
    %p50 = scmp.ne.s32.totalorder %s36, %s37
    %p51 = scmp.eq.s32.totalorder %s15, 7
    %p52 = por %p50, %p51
    %p54 = scmp.ne.s32.totalorder %s37, %s53
    %p55 = scmp.eq.s32.totalorder %s15, 0
    %p56 = por %p54, %p55
    %s58 = sadd.s32 %s57, 1
    %p61 = scmp.eq.s32.totalorder %s9, 7
    %p62 = scmp.ne.s32.totalorder %s57, %s59
    %p63 = scmp.eq.s32.totalorder %s9, 0
    %p64 = por %p62, %p63
    %p65 = scmp.ne.s32.totalorder %s57, %s59
    %p66 = scmp.eq.s32.totalorder %s14, 7
    %p67 = por %p65, %p66
    %p68 = scmp.ne.s32.totalorder %s59, %s60
    %p69 = scmp.eq.s32.totalorder %s14, 0
    %p70 = por %p68, %p69
    %p71 = scmp.ne.s32.totalorder %s59, %s60
    %p72 = scmp.eq.s32.totalorder %s15, 7
    %p73 = por %p71, %p72
    %p75 = scmp.ne.s32.totalorder %s60, %s74
    %p76 = scmp.eq.s32.totalorder %s15, 0
    %p77 = por %p75, %p76
    %s79 = sadd.s32 %s78, 1
    %p82 = scmp.eq.s32.totalorder %s9, 7
    %p83 = scmp.ne.s32.totalorder %s78, %s80
    %p84 = scmp.eq.s32.totalorder %s9, 0
    %p85 = por %p83, %p84
    %p86 = scmp.ne.s32.totalorder %s78, %s80
    %p87 = scmp.eq.s32.totalorder %s14, 7
    %p88 = por %p86, %p87
    %p89 = scmp.ne.s32.totalorder %s80, %s81
    %p90 = scmp.eq.s32.totalorder %s14, 0
    %p91 = por %p89, %p90
    %p92 = scmp.ne.s32.totalorder %s80, %s81
    %p93 = scmp.eq.s32.totalorder %s15, 7
    %p94 = por %p92, %p93
    %p96 = scmp.ne.s32.totalorder %s81, %s95
    %p97 = scmp.eq.s32.totalorder %s15, 0
    %p98 = por %p96, %p97
    %s99 = ssub.s32 %s17, %s24
    %s100 = ssub.s32 %s16, %s28
    %s101 = sor.u32 %s99, %s100
    %p102 = scmp.eq.s32.totalorder %s101, 0
    %s104 = sadd.s32 %s103, 1
    %s105 = scalar_select %p102, %s103, %s104
    %p108 = pneg %p102
    %p109 = scmp.eq.s32.totalorder %s9, 7
    %p110 = por %p108, %p109
    %p111 = scmp.ne.s32.totalorder %s103, %s106
    %p112 = scmp.eq.s32.totalorder %s9, 0
    %p113 = por %p111, %p112
    %p114 = scmp.ne.s32.totalorder %s103, %s106
    %p115 = scmp.eq.s32.totalorder %s14, 7
    %p116 = por %p114, %p115
    %p117 = scmp.ne.s32.totalorder %s106, %s107
    %p118 = scmp.eq.s32.totalorder %s14, 0
    %p119 = por %p117, %p118
    %p120 = scmp.ne.s32.totalorder %s106, %s107
    %p121 = scmp.eq.s32.totalorder %s15, 7
    %p122 = por %p120, %p121
    %p124 = scmp.ne.s32.totalorder %s107, %s123
    %p125 = scmp.eq.s32.totalorder %s15, 0
    %p126 = por %p124, %p125
    %p127 = scmp.le.s32.totalorder 1, %s9
    %p128 = scmp.lt.s32.totalorder %s9, 9
    %p129 = pnand %p127, %p128
    %p130 = pneg %p129
    // Predicated region
    $region9: #{pixel_rnn_forward.4} parent=5 // pred_check
      _
    $region10: #{pixel_rnn_forward.4} parent=5 // pred_check_branch
      %132 = sbr.rel (%p129) target = $region12
    $region11: #{pixel_rnn_forward.4} parent=5 // pred_region
      %s133 = ssub.s32 %s9, 1
      // Predicated region
      $region13: #{pixel_rnn_forward.4} parent=11 // pred_check
        %p134 = pneg %p70
      $region14: #{pixel_rnn_forward.4} parent=11 // pred_check_branch
        %136 = sbr.rel (%p134) target = $region16
      $region15: #{pixel_rnn_forward.4} parent=11 // pred_region
        _
      $region16: #{pixel_rnn_forward.4} parent=11 // pred_fallthru
        _
      // Predicated region
      $region17: #{pixel_rnn_forward.4} parent=11 // pred_check
        %p137 = pneg %p91
      $region18: #{pixel_rnn_forward.4} parent=11 // pred_check_branch
        %139 = sbr.rel (%p137) target = $region20
      $region19: #{pixel_rnn_forward.4} parent=11 // pred_region
        _
      $region20: #{pixel_rnn_forward.4} parent=11 // pred_fallthru
        _
    $region12: #{pixel_rnn_forward.4} parent=5 // pred_fallthru
      _
    %p140 = scmp.lt.s32.totalorder %s9, 8
    // Predicated region
    $region21: #{pixel_rnn_forward.4} parent=5 // pred_check
      %p141 = pneg %p140
    $region22: #{pixel_rnn_forward.4} parent=5 // pred_check_branch
      %143 = sbr.rel (%p141) target = $region24
    $region23: #{pixel_rnn_forward.4} parent=5 // pred_region
      // Predicated region
      $region25: #{pixel_rnn_forward.4} parent=23 // pred_check
        %p144 = pneg %p43
      $region26: #{pixel_rnn_forward.4} parent=23 // pred_check_branch
        %146 = sbr.rel (%p144) target = $region28
      $region27: #{pixel_rnn_forward.4} parent=23 // pred_region
        %s147 = smul.u32 2, %s16
        %p148 = scmp.lt.s32.totalorder %s17, 7
        %s149 = scalar_select %p148, %s17, 7
        %p150 = scmp.lt.s32.totalorder %s147, 1
        %s151 = scalar_select %p150, %s147, 1
        %s152 = smul.addr %s149, 2
        %s153 = sadd.s32 %s151, %s152
        %s154 = smul.addr %s153, 4
        %s155 = scalar_lea.vmem %s0, %s154
        %s156 = smul.u32 2, %s16
      $region28: #{pixel_rnn_forward.4} parent=23 // pred_fallthru
        _
    $region24: #{pixel_rnn_forward.4} parent=5 // pred_fallthru
      _
    %p157 = scmp.le.s32.totalorder 1, %s9
    %p158 = scmp.lt.s32.totalorder %s9, 9
    %p159 = pnand %p157, %p158
    %p160 = pneg %p159
    // Predicated region
    $region29: #{pixel_rnn_forward.4} parent=5 // pred_check
      _
    $region30: #{pixel_rnn_forward.4} parent=5 // pred_check_branch
      %162 = sbr.rel (%p159) target = $region32
    $region31: #{pixel_rnn_forward.4} parent=5 // pred_region
      %s163 = ssub.s32 %s9, 1
      %s164 = smul.u32 2, %s18
      %p165 = scmp.lt.s32.totalorder %s19, 7
      %s166 = scalar_select %p165, %s19, 7
      %p167 = scmp.lt.s32.totalorder %s164, 1
      %s168 = scalar_select %p167, %s164, 1
      %s169 = smul.addr %s166, 2
      %s170 = sadd.s32 %s168, %s169
      %s171 = smul.addr %s170, 4
      %s172 = scalar_lea.vmem %s0, %s171
      %p173 = pneg %p49
      %p174 = pneg %p46
      %p175 = pneg %p70
      %p176 = pneg %p67
      %p177 = pneg %p91
      %p178 = pneg %p88
      %p179 = pneg %p119
      %p180 = pneg %p116
      %s181 = smul.u32 2, %s18
      %p182 = scmp.lt.s32.totalorder %s19, 7
      %s183 = scalar_select %p182, %s19, 7
      %p184 = scmp.lt.s32.totalorder %s181, 1
      %s185 = scalar_select %p184, %s181, 1
      %s186 = smul.addr %s183, 2
      %s187 = sadd.s32 %s185, %s186
      %s188 = smul.addr %s187, 4
      %s189 = scalar_lea.vmem %s3, %s188
      %s190 = smul.u32 2, %s18
      %p191 = scmp.lt.s32.totalorder %s19, 7
      %s192 = scalar_select %p191, %s19, 7
      %p193 = scmp.lt.s32.totalorder %s190, 1
      %s194 = scalar_select %p193, %s190, 1
      %s195 = smul.addr %s192, 2
      %s196 = sadd.s32 %s194, %s195
      %s197 = smul.addr %s196, 4
      %s198 = scalar_lea.vmem %s0, %s197
      %s199 = smul.u32 2, %s18
      %s200 = smul.u32 2, %s18
      %p201 = scmp.lt.s32.totalorder %s19, 7
      %s202 = scalar_select %p201, %s19, 7
      %p203 = scmp.lt.s32.totalorder %s200, 1
      %s204 = scalar_select %p203, %s200, 1
      %s205 = smul.addr %s202, 2
      %s206 = sadd.s32 %s204, %s205
      %s207 = smul.addr %s206, 4
      %s208 = scalar_lea.vmem %s3, %s207
      %s209 = smul.u32 2, %s18
      %p211 = scmp.eq.s32.totalorder %s19, 0
      // Predicated region
      $region33: #{pixel_rnn_forward.4} parent=31 // pred_check
        %p212 = pneg %p211
      $region34: #{pixel_rnn_forward.4} parent=31 // pred_check_branch
        %214 = sbr.rel (%p212) target = $region36
      $region35: #{pixel_rnn_forward.4} parent=31 // pred_region
        %215 = vst [vmem:[#allocation2] sm:$0xff] 0.0
        %216 = vst [vmem:[#allocation2 + $0x8] sm:$0xff] 0.0
        %217 = vst [vmem:[#allocation3] sm:$0xff] 0.0
        %218 = vst [vmem:[#allocation3 + $0x8] sm:$0xff] 0.0
        %v219 = vlaneseq
        %v220 = vshrl.u32 %v219, 7
        %v221 = vadd.s32 %v220, 8
        %vm222 = vcmp.eq.s32.totalorder %v220, 0
        %vm223 = vcmp.eq.s32.totalorder %v221, 0
        %vm224 = vcmp.eq.s32.totalorder %v220, 7
        %vm225 = vcmp.eq.s32.totalorder %v221, 7
        %vm226 = vcmp.eq.s32.totalorder %v220, 8
        %vm227 = vcmp.eq.s32.totalorder %v221, 8
        %vm228 = vmor %vm222, %vm226
        %vm229 = vmor %vm223, %vm227
        %vm230 = vcmp.eq.s32.totalorder %v220, 15
        %vm231 = vcmp.eq.s32.totalorder %v221, 15
        %vm232 = vmor %vm224, %vm230
        %vm233 = vmor %vm225, %vm231
        %v234 = vsel %vm228, 0.0, 1.0
        %v235 = vsel %vm229, 0.0, 1.0
        %236 = vst [vmem:[#allocation4] sm:$0xff] %v234
        %237 = vst [vmem:[#allocation4 + $0x8] sm:$0xff] %v235
        %v238 = vsel %vm232, 0.0, 1.0
        %v239 = vsel %vm233, 0.0, 1.0
        %240 = vst [vmem:[#allocation5] sm:$0xff] %v238
        %241 = vst [vmem:[#allocation5 + $0x8] sm:$0xff] %v239
      $region36: #{pixel_rnn_forward.4} parent=31 // pred_fallthru
        _
      %v242 = vld [vmem:[%s198] sm:$0xf]
      %v243 = vld [vmem:[%s198 + $0x4] sm:$0xf]
      %v244 = vunpack.c.l.bf16 %v242
      %v245 = vunpack.c.l.bf16 %v243
      %v246 = vld [vmem:[#allocation2] sm:$0xff]
      %v247 = vld [vmem:[#allocation2 + $0x8] sm:$0xff]
      %v248 = vld [vmem:[#allocation4] sm:$0xff]
      %v249 = vld [vmem:[#allocation4 + $0x8] sm:$0xff]
      %v250 = vld [vmem:[#allocation5] sm:$0xff]
      %v251 = vld [vmem:[#allocation5 + $0x8] sm:$0xff]
      %v252 = vrot.slane %v244, 7
      %v253 = vrot.slane %v245, 7
      %v254 = vlaneseq
      %v255 = vshrl.u32 %v254, 7
      %vm256 = vcmp.lt.s32.totalorder %v255, 1
      %v257 = vsel %vm256, %v252, %v253
      %v258 = vsel %vm256, %v253, %v252
      %v259 = vmul.f32 %v258, %v248
      %v260 = vmul.f32 %v257, %v249
      %v261 = vpack.c.bf16 %v260, %v259
      %v262 = vrot.slane %v246, 7
      %v263 = vrot.slane %v247, 7
      %v264 = vsel %vm256, %v262, %v263
      %v265 = vsel %vm256, %v263, %v262
      %v266 = vmul.f32 %v265, %v248
      %v267 = vmul.f32 %v264, %v249
      %v268 = vpack.c.bf16 %v267, %v266
      %v269 = vrot.slane %v246, 1
      %v270 = vrot.slane %v247, 1
      %vm271 = vcmp.lt.s32.totalorder %v255, 7
      %v272 = vsel %vm271, %v269, %v270
      %v273 = vsel %vm271, %v270, %v269
      %v274 = vmul.f32 %v272, %v250
      %v275 = vmul.f32 %v273, %v251
      %v276 = vpack.c.bf16 %v275, %v274
      %v277 = vpack.c.bf16 %v247, %v246
      %v280 = vunpack.c.l.b16 %v242
      %v281 = vunpack.c.l.b16 %v243
      %v282 = vpack.c.b16 %v281, %v280
      %v284 = vld [vmem:[%s1] sm:$0xff]
      %v285 = vld [vmem:[%s1 + $0x8] sm:$0xff]
      %v286 = vld [vmem:[%s1 + $0x10] sm:$0xff]
      %v287 = vld [vmem:[%s1 + $0x18] sm:$0xff]
      %v288 = vld [vmem:[%s1 + $0x20] sm:$0xff]
      %v289 = vld [vmem:[%s1 + $0x28] sm:$0xff]
      %v290 = vld [vmem:[%s1 + $0x30] sm:$0xff]
      %v291 = vld [vmem:[%s1 + $0x38] sm:$0xff]
      %v292 = vld [vmem:[%s1 + $0x40] sm:$0xff]
      %v293 = vld [vmem:[%s1 + $0x48] sm:$0xff]
      %v294 = vld [vmem:[%s1 + $0x50] sm:$0xff]
      %v295 = vld [vmem:[%s1 + $0x58] sm:$0xff]
      %v296 = vld [vmem:[%s1 + $0x60] sm:$0xff]
      %v297 = vld [vmem:[%s1 + $0x68] sm:$0xff]
      %v298 = vld [vmem:[%s1 + $0x70] sm:$0xff]
      %v299 = vld [vmem:[%s1 + $0x78] sm:$0xff]
      %v300 = vld [vmem:[%s1 + $0x80] sm:$0xff]
      %v301 = vld [vmem:[%s1 + $0x88] sm:$0xff]
      %v302 = vld [vmem:[%s1 + $0x90] sm:$0xff]
      %v303 = vld [vmem:[%s1 + $0x98] sm:$0xff]
      %v304 = vld [vmem:[%s1 + $0xa0] sm:$0xff]
      %v305 = vld [vmem:[%s1 + $0xa8] sm:$0xff]
      %v306 = vld [vmem:[%s1 + $0xb0] sm:$0xff]
      %v307 = vld [vmem:[%s1 + $0xb8] sm:$0xff]
      %v308 = vld [vmem:[%s1 + $0xc0] sm:$0xff]
      %v309 = vld [vmem:[%s1 + $0xc8] sm:$0xff]
      %v310 = vld [vmem:[%s1 + $0xd0] sm:$0xff]
      %v311 = vld [vmem:[%s1 + $0xd8] sm:$0xff]
      %v312 = vld [vmem:[%s1 + $0xe0] sm:$0xff]
      %v313 = vld [vmem:[%s1 + $0xe8] sm:$0xff]
      %v314 = vld [vmem:[%s1 + $0xf0] sm:$0xff]
      %v315 = vld [vmem:[%s1 + $0xf8] sm:$0xff]
      %v316 = vld [vmem:[%s1 + $0x100] sm:$0xff]
      %v317 = vld [vmem:[%s1 + $0x108] sm:$0xff]
      %v318 = vld [vmem:[%s1 + $0x110] sm:$0xff]
      %v319 = vld [vmem:[%s1 + $0x118] sm:$0xff]
      %v320 = vld [vmem:[%s1 + $0x120] sm:$0xff]
      %v321 = vld [vmem:[%s1 + $0x128] sm:$0xff]
      %v322 = vld [vmem:[%s1 + $0x130] sm:$0xff]
      %v323 = vld [vmem:[%s1 + $0x138] sm:$0xff]
      %v324 = vld [vmem:[%s1 + $0x140] sm:$0xff]
      %v325 = vld [vmem:[%s1 + $0x148] sm:$0xff]
      %v326 = vld [vmem:[%s1 + $0x150] sm:$0xff]
      %v327 = vld [vmem:[%s1 + $0x158] sm:$0xff]
      %v328 = vld [vmem:[%s1 + $0x160] sm:$0xff]
      %v329 = vld [vmem:[%s1 + $0x168] sm:$0xff]
      %v330 = vld [vmem:[%s1 + $0x170] sm:$0xff]
      %v331 = vld [vmem:[%s1 + $0x178] sm:$0xff]
      %v332 = vld [vmem:[%s1 + $0x180] sm:$0xff]
      %v333 = vld [vmem:[%s1 + $0x188] sm:$0xff]
      %v334 = vld [vmem:[%s1 + $0x190] sm:$0xff]
      %v335 = vld [vmem:[%s1 + $0x198] sm:$0xff]
      %v336 = vld [vmem:[%s1 + $0x1a0] sm:$0xff]
      %v337 = vld [vmem:[%s1 + $0x1a8] sm:$0xff]
      %v338 = vld [vmem:[%s1 + $0x1b0] sm:$0xff]
      %v339 = vld [vmem:[%s1 + $0x1b8] sm:$0xff]
      %v340 = vld [vmem:[%s1 + $0x1c0] sm:$0xff]
      %v341 = vld [vmem:[%s1 + $0x1c8] sm:$0xff]
      %v342 = vld [vmem:[%s1 + $0x1d0] sm:$0xff]
      %v343 = vld [vmem:[%s1 + $0x1d8] sm:$0xff]
      %v344 = vld [vmem:[%s1 + $0x1e0] sm:$0xff]
      %v345 = vld [vmem:[%s1 + $0x1e8] sm:$0xff]
      %v346 = vld [vmem:[%s1 + $0x1f0] sm:$0xff]
      %v347 = vld [vmem:[%s1 + $0x1f8] sm:$0xff]
      %v348 = vld [vmem:[%s1 + $0x200] sm:$0xff]
      %v349 = vld [vmem:[%s1 + $0x208] sm:$0xff]
      %v350 = vld [vmem:[%s1 + $0x210] sm:$0xff]
      %v351 = vld [vmem:[%s1 + $0x218] sm:$0xff]
      %v352 = vld [vmem:[%s1 + $0x220] sm:$0xff]
      %v353 = vld [vmem:[%s1 + $0x228] sm:$0xff]
      %v354 = vld [vmem:[%s1 + $0x230] sm:$0xff]
      %v355 = vld [vmem:[%s1 + $0x238] sm:$0xff]
      %v356 = vld [vmem:[%s1 + $0x240] sm:$0xff]
      %v357 = vld [vmem:[%s1 + $0x248] sm:$0xff]
      %v358 = vld [vmem:[%s1 + $0x250] sm:$0xff]
      %v359 = vld [vmem:[%s1 + $0x258] sm:$0xff]
      %v360 = vld [vmem:[%s1 + $0x260] sm:$0xff]
      %v361 = vld [vmem:[%s1 + $0x268] sm:$0xff]
      %v362 = vld [vmem:[%s1 + $0x270] sm:$0xff]
      %v363 = vld [vmem:[%s1 + $0x278] sm:$0xff]
      %v364 = vld [vmem:[%s1 + $0x280] sm:$0xff]
      %v365 = vld [vmem:[%s1 + $0x288] sm:$0xff]
      %v366 = vld [vmem:[%s1 + $0x290] sm:$0xff]
      %v367 = vld [vmem:[%s1 + $0x298] sm:$0xff]
      %v368 = vld [vmem:[%s1 + $0x2a0] sm:$0xff]
      %v369 = vld [vmem:[%s1 + $0x2a8] sm:$0xff]
      %v370 = vld [vmem:[%s1 + $0x2b0] sm:$0xff]
      %v371 = vld [vmem:[%s1 + $0x2b8] sm:$0xff]
      %v372 = vld [vmem:[%s1 + $0x2c0] sm:$0xff]
      %v373 = vld [vmem:[%s1 + $0x2c8] sm:$0xff]
      %v374 = vld [vmem:[%s1 + $0x2d0] sm:$0xff]
      %v375 = vld [vmem:[%s1 + $0x2d8] sm:$0xff]
      %v376 = vld [vmem:[%s1 + $0x2e0] sm:$0xff]
      %v377 = vld [vmem:[%s1 + $0x2e8] sm:$0xff]
      %v378 = vld [vmem:[%s1 + $0x2f0] sm:$0xff]
      %v379 = vld [vmem:[%s1 + $0x2f8] sm:$0xff]
      %v380 = vld [vmem:[%s1 + $0x300] sm:$0xff]
      %v381 = vld [vmem:[%s1 + $0x308] sm:$0xff]
      %v382 = vld [vmem:[%s1 + $0x310] sm:$0xff]
      %v383 = vld [vmem:[%s1 + $0x318] sm:$0xff]
      %v384 = vld [vmem:[%s1 + $0x320] sm:$0xff]
      %v385 = vld [vmem:[%s1 + $0x328] sm:$0xff]
      %v386 = vld [vmem:[%s1 + $0x330] sm:$0xff]
      %v387 = vld [vmem:[%s1 + $0x338] sm:$0xff]
      %v388 = vld [vmem:[%s1 + $0x340] sm:$0xff]
      %v389 = vld [vmem:[%s1 + $0x348] sm:$0xff]
      %v390 = vld [vmem:[%s1 + $0x350] sm:$0xff]
      %v391 = vld [vmem:[%s1 + $0x358] sm:$0xff]
      %v392 = vld [vmem:[%s1 + $0x360] sm:$0xff]
      %v393 = vld [vmem:[%s1 + $0x368] sm:$0xff]
      %v394 = vld [vmem:[%s1 + $0x370] sm:$0xff]
      %v395 = vld [vmem:[%s1 + $0x378] sm:$0xff]
      %v396 = vld [vmem:[%s1 + $0x380] sm:$0xff]
      %v397 = vld [vmem:[%s1 + $0x388] sm:$0xff]
      %v398 = vld [vmem:[%s1 + $0x390] sm:$0xff]
      %v399 = vld [vmem:[%s1 + $0x398] sm:$0xff]
      %v400 = vld [vmem:[%s1 + $0x3a0] sm:$0xff]
      %v401 = vld [vmem:[%s1 + $0x3a8] sm:$0xff]
      %v402 = vld [vmem:[%s1 + $0x3b0] sm:$0xff]
      %v403 = vld [vmem:[%s1 + $0x3b8] sm:$0xff]
      %v404 = vld [vmem:[%s1 + $0x3c0] sm:$0xff]
      %v405 = vld [vmem:[%s1 + $0x3c8] sm:$0xff]
      %v406 = vld [vmem:[%s1 + $0x3d0] sm:$0xff]
      %v407 = vld [vmem:[%s1 + $0x3d8] sm:$0xff]
      %v408 = vld [vmem:[%s1 + $0x3e0] sm:$0xff]
      %v409 = vld [vmem:[%s1 + $0x3e8] sm:$0xff]
      %v410 = vld [vmem:[%s1 + $0x3f0] sm:$0xff]
      %v411 = vld [vmem:[%s1 + $0x3f8] sm:$0xff]
      %v412 = vld [vmem:[%s1 + $0x400] sm:$0xff]
      %v413 = vld [vmem:[%s1 + $0x408] sm:$0xff]
      %v414 = vld [vmem:[%s1 + $0x410] sm:$0xff]
      %v415 = vld [vmem:[%s1 + $0x418] sm:$0xff]
      %v416 = vld [vmem:[%s1 + $0x420] sm:$0xff]
      %v417 = vld [vmem:[%s1 + $0x428] sm:$0xff]
      %v418 = vld [vmem:[%s1 + $0x430] sm:$0xff]
      %v419 = vld [vmem:[%s1 + $0x438] sm:$0xff]
      %v420 = vld [vmem:[%s1 + $0x440] sm:$0xff]
      %v421 = vld [vmem:[%s1 + $0x448] sm:$0xff]
      %v422 = vld [vmem:[%s1 + $0x450] sm:$0xff]
      %v423 = vld [vmem:[%s1 + $0x458] sm:$0xff]
      %v424 = vld [vmem:[%s1 + $0x460] sm:$0xff]
      %v425 = vld [vmem:[%s1 + $0x468] sm:$0xff]
      %v426 = vld [vmem:[%s1 + $0x470] sm:$0xff]
      %v427 = vld [vmem:[%s1 + $0x478] sm:$0xff]
      %v428 = vld [vmem:[%s1 + $0x480] sm:$0xff]
      %v429 = vld [vmem:[%s1 + $0x488] sm:$0xff]
      %v430 = vld [vmem:[%s1 + $0x490] sm:$0xff]
      %v431 = vld [vmem:[%s1 + $0x498] sm:$0xff]
      %v432 = vld [vmem:[%s1 + $0x4a0] sm:$0xff]
      %v433 = vld [vmem:[%s1 + $0x4a8] sm:$0xff]
      %v434 = vld [vmem:[%s1 + $0x4b0] sm:$0xff]
      %v435 = vld [vmem:[%s1 + $0x4b8] sm:$0xff]
      %v436 = vld [vmem:[%s1 + $0x4c0] sm:$0xff]
      %v437 = vld [vmem:[%s1 + $0x4c8] sm:$0xff]
      %v438 = vld [vmem:[%s1 + $0x4d0] sm:$0xff]
      %v439 = vld [vmem:[%s1 + $0x4d8] sm:$0xff]
      %v440 = vld [vmem:[%s1 + $0x4e0] sm:$0xff]
      %v441 = vld [vmem:[%s1 + $0x4e8] sm:$0xff]
      %v442 = vld [vmem:[%s1 + $0x4f0] sm:$0xff]
      %v443 = vld [vmem:[%s1 + $0x4f8] sm:$0xff]
      %v444 = vld [vmem:[%s2] sm:$0xf]
      %v446 = vlaneseq
      %v447 = vshrl.u32 %v446, 7
      %v448 = vsub.s32 0, %v447
      %v449 = vrot.slane %v444, %v448
      %v450 = vlaneseq
      %v451 = vshrl.u32 %v450, 7
      %v452 = vsub.s32 1, %v451
      %v453 = vrot.slane %v444, %v452
      %v454 = vlaneseq
      %v455 = vshrl.u32 %v454, 7
      %v456 = vsub.s32 2, %v455
      %v457 = vrot.slane %v444, %v456
      %v458 = vlaneseq
      %v459 = vshrl.u32 %v458, 7
      %v460 = vsub.s32 3, %v459
      %v461 = vrot.slane %v444, %v460
      %v626 = vunpack.c.l.b16 %v284
      %v627 = vunpack.c.h.b16 %v284
      %v628 = vunpack.c.l.b16 %v285
      %v629 = vunpack.c.h.b16 %v285
      %v630 = vunpack.c.l.b16 %v286
      %v631 = vunpack.c.h.b16 %v286
      %v632 = vunpack.c.l.b16 %v287
      %v633 = vunpack.c.h.b16 %v287
      %v634 = vunpack.c.l.b16 %v288
      %v635 = vunpack.c.h.b16 %v288
      %v636 = vunpack.c.l.b16 %v289
      %v637 = vunpack.c.h.b16 %v289
      %v638 = vunpack.c.l.b16 %v290
      %v639 = vunpack.c.h.b16 %v290
      %v640 = vunpack.c.l.b16 %v291
      %v641 = vunpack.c.h.b16 %v291
      %v642 = vunpack.c.l.b16 %v292
      %v643 = vunpack.c.h.b16 %v292
      %v644 = vunpack.c.l.b16 %v293
      %v645 = vunpack.c.h.b16 %v293
      %v646 = vunpack.c.l.b16 %v294
      %v647 = vunpack.c.h.b16 %v294
      %v648 = vunpack.c.l.b16 %v295
      %v649 = vunpack.c.h.b16 %v295
      %v650 = vunpack.c.l.b16 %v296
      %v651 = vunpack.c.h.b16 %v296
      %v652 = vunpack.c.l.b16 %v297
      %v653 = vunpack.c.h.b16 %v297
      %v654 = vunpack.c.l.b16 %v298
      %v655 = vunpack.c.h.b16 %v298
      %v656 = vunpack.c.l.b16 %v299
      %v657 = vunpack.c.h.b16 %v299
      %v658 = vunpack.c.l.b16 %v300
      %v659 = vunpack.c.h.b16 %v300
      %v660 = vunpack.c.l.b16 %v301
      %v661 = vunpack.c.h.b16 %v301
      %v662 = vunpack.c.l.b16 %v302
      %v663 = vunpack.c.h.b16 %v302
      %v664 = vunpack.c.l.b16 %v303
      %v665 = vunpack.c.h.b16 %v303
      %v666 = vunpack.c.l.b16 %v304
      %v667 = vunpack.c.h.b16 %v304
      %v668 = vunpack.c.l.b16 %v305
      %v669 = vunpack.c.h.b16 %v305
      %v670 = vunpack.c.l.b16 %v306
      %v671 = vunpack.c.h.b16 %v306
      %v672 = vunpack.c.l.b16 %v307
      %v673 = vunpack.c.h.b16 %v307
      %v674 = vunpack.c.l.b16 %v308
      %v675 = vunpack.c.h.b16 %v308
      %v676 = vunpack.c.l.b16 %v309
      %v677 = vunpack.c.h.b16 %v309
      %v678 = vunpack.c.l.b16 %v310
      %v679 = vunpack.c.h.b16 %v310
      %v680 = vunpack.c.l.b16 %v311
      %v681 = vunpack.c.h.b16 %v311
      %v682 = vunpack.c.l.b16 %v312
      %v683 = vunpack.c.h.b16 %v312
      %v684 = vunpack.c.l.b16 %v313
      %v685 = vunpack.c.h.b16 %v313
      %v686 = vunpack.c.l.b16 %v314
      %v687 = vunpack.c.h.b16 %v314
      %v688 = vunpack.c.l.b16 %v315
      %v689 = vunpack.c.h.b16 %v315
      %v690 = vunpack.c.l.b16 %v316
      %v691 = vunpack.c.h.b16 %v316
      %v692 = vunpack.c.l.b16 %v317
      %v693 = vunpack.c.h.b16 %v317
      %v694 = vunpack.c.l.b16 %v318
      %v695 = vunpack.c.h.b16 %v318
      %v696 = vunpack.c.l.b16 %v319
      %v697 = vunpack.c.h.b16 %v319
      %v698 = vunpack.c.l.b16 %v320
      %v699 = vunpack.c.h.b16 %v320
      %v700 = vunpack.c.l.b16 %v321
      %v701 = vunpack.c.h.b16 %v321
      %v702 = vunpack.c.l.b16 %v322
      %v703 = vunpack.c.h.b16 %v322
      %v704 = vunpack.c.l.b16 %v323
      %v705 = vunpack.c.h.b16 %v323
      %v706 = vunpack.c.l.b16 %v324
      %v707 = vunpack.c.h.b16 %v324
      %v708 = vunpack.c.l.b16 %v325
      %v709 = vunpack.c.h.b16 %v325
      %v710 = vunpack.c.l.b16 %v326
      %v711 = vunpack.c.h.b16 %v326
      %v712 = vunpack.c.l.b16 %v327
      %v713 = vunpack.c.h.b16 %v327
      %v714 = vunpack.c.l.b16 %v328
      %v715 = vunpack.c.h.b16 %v328
      %v716 = vunpack.c.l.b16 %v329
      %v717 = vunpack.c.h.b16 %v329
      %v718 = vunpack.c.l.b16 %v330
      %v719 = vunpack.c.h.b16 %v330
      %v720 = vunpack.c.l.b16 %v331
      %v721 = vunpack.c.h.b16 %v331
      %v722 = vunpack.c.l.b16 %v332
      %v723 = vunpack.c.h.b16 %v332
      %v724 = vunpack.c.l.b16 %v333
      %v725 = vunpack.c.h.b16 %v333
      %v726 = vunpack.c.l.b16 %v334
      %v727 = vunpack.c.h.b16 %v334
      %v728 = vunpack.c.l.b16 %v335
      %v729 = vunpack.c.h.b16 %v335
      %v730 = vunpack.c.l.b16 %v336
      %v731 = vunpack.c.h.b16 %v336
      %v732 = vunpack.c.l.b16 %v337
      %v733 = vunpack.c.h.b16 %v337
      %v734 = vunpack.c.l.b16 %v338
      %v735 = vunpack.c.h.b16 %v338
      %v736 = vunpack.c.l.b16 %v339
      %v737 = vunpack.c.h.b16 %v339
      %v738 = vunpack.c.l.b16 %v340
      %v739 = vunpack.c.h.b16 %v340
      %v740 = vunpack.c.l.b16 %v341
      %v741 = vunpack.c.h.b16 %v341
      %v742 = vunpack.c.l.b16 %v342
      %v743 = vunpack.c.h.b16 %v342
      %v744 = vunpack.c.l.b16 %v343
      %v745 = vunpack.c.h.b16 %v343
      %v746 = vunpack.c.l.b16 %v344
      %v747 = vunpack.c.h.b16 %v344
      %v748 = vunpack.c.l.b16 %v345
      %v749 = vunpack.c.h.b16 %v345
      %v750 = vunpack.c.l.b16 %v346
      %v751 = vunpack.c.h.b16 %v346
      %v752 = vunpack.c.l.b16 %v347
      %v753 = vunpack.c.h.b16 %v347
      %v754 = vunpack.c.l.b16 %v348
      %v755 = vunpack.c.h.b16 %v348
      %v756 = vunpack.c.l.b16 %v349
      %v757 = vunpack.c.h.b16 %v349
      %v758 = vunpack.c.l.b16 %v350
      %v759 = vunpack.c.h.b16 %v350
      %v760 = vunpack.c.l.b16 %v351
      %v761 = vunpack.c.h.b16 %v351
      %v762 = vunpack.c.l.b16 %v352
      %v763 = vunpack.c.h.b16 %v352
      %v764 = vunpack.c.l.b16 %v353
      %v765 = vunpack.c.h.b16 %v353
      %v766 = vunpack.c.l.b16 %v354
      %v767 = vunpack.c.h.b16 %v354
      %v768 = vunpack.c.l.b16 %v355
      %v769 = vunpack.c.h.b16 %v355
      %v770 = vunpack.c.l.b16 %v356
      %v771 = vunpack.c.h.b16 %v356
      %v772 = vunpack.c.l.b16 %v357
      %v773 = vunpack.c.h.b16 %v357
      %v774 = vunpack.c.l.b16 %v358
      %v775 = vunpack.c.h.b16 %v358
      %v776 = vunpack.c.l.b16 %v359
      %v777 = vunpack.c.h.b16 %v359
      %v778 = vunpack.c.l.b16 %v360
      %v779 = vunpack.c.h.b16 %v360
      %v780 = vunpack.c.l.b16 %v361
      %v781 = vunpack.c.h.b16 %v361
      %v782 = vunpack.c.l.b16 %v362
      %v783 = vunpack.c.h.b16 %v362
      %v784 = vunpack.c.l.b16 %v363
      %v785 = vunpack.c.h.b16 %v363
      %v786 = vunpack.c.l.b16 %v364
      %v787 = vunpack.c.h.b16 %v364
      %v788 = vunpack.c.l.b16 %v365
      %v789 = vunpack.c.h.b16 %v365
      %v790 = vunpack.c.l.b16 %v366
      %v791 = vunpack.c.h.b16 %v366
      %v792 = vunpack.c.l.b16 %v367
      %v793 = vunpack.c.h.b16 %v367
      %v794 = vunpack.c.l.b16 %v368
      %v795 = vunpack.c.h.b16 %v368
      %v796 = vunpack.c.l.b16 %v369
      %v797 = vunpack.c.h.b16 %v369
      %v798 = vunpack.c.l.b16 %v370
      %v799 = vunpack.c.h.b16 %v370
      %v800 = vunpack.c.l.b16 %v371
      %v801 = vunpack.c.h.b16 %v371
      %v802 = vunpack.c.l.b16 %v372
      %v803 = vunpack.c.h.b16 %v372
      %v804 = vunpack.c.l.b16 %v373
      %v805 = vunpack.c.h.b16 %v373
      %v806 = vunpack.c.l.b16 %v374
      %v807 = vunpack.c.h.b16 %v374
      %v808 = vunpack.c.l.b16 %v375
      %v809 = vunpack.c.h.b16 %v375
      %v810 = vunpack.c.l.b16 %v376
      %v811 = vunpack.c.h.b16 %v376
      %v812 = vunpack.c.l.b16 %v377
      %v813 = vunpack.c.h.b16 %v377
      %v814 = vunpack.c.l.b16 %v378
      %v815 = vunpack.c.h.b16 %v378
      %v816 = vunpack.c.l.b16 %v379
      %v817 = vunpack.c.h.b16 %v379
      %v818 = vunpack.c.l.b16 %v380
      %v819 = vunpack.c.h.b16 %v380
      %v820 = vunpack.c.l.b16 %v381
      %v821 = vunpack.c.h.b16 %v381
      %v822 = vunpack.c.l.b16 %v382
      %v823 = vunpack.c.h.b16 %v382
      %v824 = vunpack.c.l.b16 %v383
      %v825 = vunpack.c.h.b16 %v383
      %v826 = vunpack.c.l.b16 %v384
      %v827 = vunpack.c.h.b16 %v384
      %v828 = vunpack.c.l.b16 %v385
      %v829 = vunpack.c.h.b16 %v385
      %v830 = vunpack.c.l.b16 %v386
      %v831 = vunpack.c.h.b16 %v386
      %v832 = vunpack.c.l.b16 %v387
      %v833 = vunpack.c.h.b16 %v387
      %v834 = vunpack.c.l.b16 %v388
      %v835 = vunpack.c.h.b16 %v388
      %v836 = vunpack.c.l.b16 %v389
      %v837 = vunpack.c.h.b16 %v389
      %v838 = vunpack.c.l.b16 %v390
      %v839 = vunpack.c.h.b16 %v390
      %v840 = vunpack.c.l.b16 %v391
      %v841 = vunpack.c.h.b16 %v391
      %v842 = vunpack.c.l.b16 %v392
      %v843 = vunpack.c.h.b16 %v392
      %v844 = vunpack.c.l.b16 %v393
      %v845 = vunpack.c.h.b16 %v393
      %v846 = vunpack.c.l.b16 %v394
      %v847 = vunpack.c.h.b16 %v394
      %v848 = vunpack.c.l.b16 %v395
      %v849 = vunpack.c.h.b16 %v395
      %v850 = vunpack.c.l.b16 %v396
      %v851 = vunpack.c.h.b16 %v396
      %v852 = vunpack.c.l.b16 %v397
      %v853 = vunpack.c.h.b16 %v397
      %v854 = vunpack.c.l.b16 %v398
      %v855 = vunpack.c.h.b16 %v398
      %v856 = vunpack.c.l.b16 %v399
      %v857 = vunpack.c.h.b16 %v399
      %v858 = vunpack.c.l.b16 %v400
      %v859 = vunpack.c.h.b16 %v400
      %v860 = vunpack.c.l.b16 %v401
      %v861 = vunpack.c.h.b16 %v401
      %v862 = vunpack.c.l.b16 %v402
      %v863 = vunpack.c.h.b16 %v402
      %v864 = vunpack.c.l.b16 %v403
      %v865 = vunpack.c.h.b16 %v403
      %v866 = vunpack.c.l.b16 %v404
      %v867 = vunpack.c.h.b16 %v404
      %v868 = vunpack.c.l.b16 %v405
      %v869 = vunpack.c.h.b16 %v405
      %v870 = vunpack.c.l.b16 %v406
      %v871 = vunpack.c.h.b16 %v406
      %v872 = vunpack.c.l.b16 %v407
      %v873 = vunpack.c.h.b16 %v407
      %v874 = vunpack.c.l.b16 %v408
      %v875 = vunpack.c.h.b16 %v408
      %v876 = vunpack.c.l.b16 %v409
      %v877 = vunpack.c.h.b16 %v409
      %v878 = vunpack.c.l.b16 %v410
      %v879 = vunpack.c.h.b16 %v410
      %v880 = vunpack.c.l.b16 %v411
      %v881 = vunpack.c.h.b16 %v411
      %v882 = vunpack.c.l.b16 %v412
      %v883 = vunpack.c.h.b16 %v412
      %v884 = vunpack.c.l.b16 %v413
      %v885 = vunpack.c.h.b16 %v413
      %v886 = vunpack.c.l.b16 %v414
      %v887 = vunpack.c.h.b16 %v414
      %v888 = vunpack.c.l.b16 %v415
      %v889 = vunpack.c.h.b16 %v415
      %v890 = vunpack.c.l.b16 %v416
      %v891 = vunpack.c.h.b16 %v416
      %v892 = vunpack.c.l.b16 %v417
      %v893 = vunpack.c.h.b16 %v417
      %v894 = vunpack.c.l.b16 %v418
      %v895 = vunpack.c.h.b16 %v418
      %v896 = vunpack.c.l.b16 %v419
      %v897 = vunpack.c.h.b16 %v419
      %v898 = vunpack.c.l.b16 %v420
      %v899 = vunpack.c.h.b16 %v420
      %v900 = vunpack.c.l.b16 %v421
      %v901 = vunpack.c.h.b16 %v421
      %v902 = vunpack.c.l.b16 %v422
      %v903 = vunpack.c.h.b16 %v422
      %v904 = vunpack.c.l.b16 %v423
      %v905 = vunpack.c.h.b16 %v423
      %v906 = vunpack.c.l.b16 %v424
      %v907 = vunpack.c.h.b16 %v424
      %v908 = vunpack.c.l.b16 %v425
      %v909 = vunpack.c.h.b16 %v425
      %v910 = vunpack.c.l.b16 %v426
      %v911 = vunpack.c.h.b16 %v426
      %v912 = vunpack.c.l.b16 %v427
      %v913 = vunpack.c.h.b16 %v427
      %v914 = vunpack.c.l.b16 %v428
      %v915 = vunpack.c.h.b16 %v428
      %v916 = vunpack.c.l.b16 %v429
      %v917 = vunpack.c.h.b16 %v429
      %v918 = vunpack.c.l.b16 %v430
      %v919 = vunpack.c.h.b16 %v430
      %v920 = vunpack.c.l.b16 %v431
      %v921 = vunpack.c.h.b16 %v431
      %v922 = vunpack.c.l.b16 %v432
      %v923 = vunpack.c.h.b16 %v432
      %v924 = vunpack.c.l.b16 %v433
      %v925 = vunpack.c.h.b16 %v433
      %v926 = vunpack.c.l.b16 %v434
      %v927 = vunpack.c.h.b16 %v434
      %v928 = vunpack.c.l.b16 %v435
      %v929 = vunpack.c.h.b16 %v435
      %v930 = vunpack.c.l.b16 %v436
      %v931 = vunpack.c.h.b16 %v436
      %v932 = vunpack.c.l.b16 %v437
      %v933 = vunpack.c.h.b16 %v437
      %v934 = vunpack.c.l.b16 %v438
      %v935 = vunpack.c.h.b16 %v438
      %v936 = vunpack.c.l.b16 %v439
      %v937 = vunpack.c.h.b16 %v439
      %v938 = vunpack.c.l.b16 %v440
      %v939 = vunpack.c.h.b16 %v440
      %v940 = vunpack.c.l.b16 %v441
      %v941 = vunpack.c.h.b16 %v441
      %v942 = vunpack.c.l.b16 %v442
      %v943 = vunpack.c.h.b16 %v442
      %v944 = vunpack.c.l.b16 %v443
      %v945 = vunpack.c.h.b16 %v443
      %v946 = vpack.c.b16 %v630, %v626
      %v947 = vpack.c.b16 %v631, %v627
      %v948 = vpack.c.b16 %v632, %v628
      %v949 = vpack.c.b16 %v633, %v629
      %v950 = vpack.c.b16 %v638, %v634
      %v951 = vpack.c.b16 %v639, %v635
      %v952 = vpack.c.b16 %v640, %v636
      %v953 = vpack.c.b16 %v641, %v637
      %v954 = vpack.c.b16 %v646, %v642
      %v955 = vpack.c.b16 %v647, %v643
      %v956 = vpack.c.b16 %v648, %v644
      %v957 = vpack.c.b16 %v649, %v645
      %v958 = vpack.c.b16 %v654, %v650
      %v959 = vpack.c.b16 %v655, %v651
      %v960 = vpack.c.b16 %v656, %v652
      %v961 = vpack.c.b16 %v657, %v653
      %v962 = vpack.c.b16 %v662, %v658
      %v963 = vpack.c.b16 %v663, %v659
      %v964 = vpack.c.b16 %v664, %v660
      %v965 = vpack.c.b16 %v665, %v661
      %v966 = vpack.c.b16 %v670, %v666
      %v967 = vpack.c.b16 %v671, %v667
      %v968 = vpack.c.b16 %v672, %v668
      %v969 = vpack.c.b16 %v673, %v669
      %v970 = vpack.c.b16 %v678, %v674
      %v971 = vpack.c.b16 %v679, %v675
      %v972 = vpack.c.b16 %v680, %v676
      %v973 = vpack.c.b16 %v681, %v677
      %v974 = vpack.c.b16 %v686, %v682
      %v975 = vpack.c.b16 %v687, %v683
      %v976 = vpack.c.b16 %v688, %v684
      %v977 = vpack.c.b16 %v689, %v685
      %v978 = vpack.c.b16 %v694, %v690
      %v979 = vpack.c.b16 %v695, %v691
      %v980 = vpack.c.b16 %v696, %v692
      %v981 = vpack.c.b16 %v697, %v693
      %v982 = vpack.c.b16 %v702, %v698
      %v983 = vpack.c.b16 %v703, %v699
      %v984 = vpack.c.b16 %v704, %v700
      %v985 = vpack.c.b16 %v705, %v701
      %v986 = vpack.c.b16 %v710, %v706
      %v987 = vpack.c.b16 %v711, %v707
      %v988 = vpack.c.b16 %v712, %v708
      %v989 = vpack.c.b16 %v713, %v709
      %v990 = vpack.c.b16 %v718, %v714
      %v991 = vpack.c.b16 %v719, %v715
      %v992 = vpack.c.b16 %v720, %v716
      %v993 = vpack.c.b16 %v721, %v717
      %v994 = vpack.c.b16 %v726, %v722
      %v995 = vpack.c.b16 %v727, %v723
      %v996 = vpack.c.b16 %v728, %v724
      %v997 = vpack.c.b16 %v729, %v725
      %v998 = vpack.c.b16 %v734, %v730
      %v999 = vpack.c.b16 %v735, %v731
      %v1000 = vpack.c.b16 %v736, %v732
      %v1001 = vpack.c.b16 %v737, %v733
      %v1002 = vpack.c.b16 %v742, %v738
      %v1003 = vpack.c.b16 %v743, %v739
      %v1004 = vpack.c.b16 %v744, %v740
      %v1005 = vpack.c.b16 %v745, %v741
      %v1006 = vpack.c.b16 %v750, %v746
      %v1007 = vpack.c.b16 %v751, %v747
      %v1008 = vpack.c.b16 %v752, %v748
      %v1009 = vpack.c.b16 %v753, %v749
      %v1010 = vpack.c.b16 %v758, %v754
      %v1011 = vpack.c.b16 %v759, %v755
      %v1012 = vpack.c.b16 %v760, %v756
      %v1013 = vpack.c.b16 %v761, %v757
      %v1014 = vpack.c.b16 %v766, %v762
      %v1015 = vpack.c.b16 %v767, %v763
      %v1016 = vpack.c.b16 %v768, %v764
      %v1017 = vpack.c.b16 %v769, %v765
      %v1018 = vpack.c.b16 %v774, %v770
      %v1019 = vpack.c.b16 %v775, %v771
      %v1020 = vpack.c.b16 %v776, %v772
      %v1021 = vpack.c.b16 %v777, %v773
      %v1022 = vpack.c.b16 %v782, %v778
      %v1023 = vpack.c.b16 %v783, %v779
      %v1024 = vpack.c.b16 %v784, %v780
      %v1025 = vpack.c.b16 %v785, %v781
      %v1026 = vpack.c.b16 %v790, %v786
      %v1027 = vpack.c.b16 %v791, %v787
      %v1028 = vpack.c.b16 %v792, %v788
      %v1029 = vpack.c.b16 %v793, %v789
      %v1030 = vpack.c.b16 %v798, %v794
      %v1031 = vpack.c.b16 %v799, %v795
      %v1032 = vpack.c.b16 %v800, %v796
      %v1033 = vpack.c.b16 %v801, %v797
      %v1034 = vpack.c.b16 %v806, %v802
      %v1035 = vpack.c.b16 %v807, %v803
      %v1036 = vpack.c.b16 %v808, %v804
      %v1037 = vpack.c.b16 %v809, %v805
      %v1038 = vpack.c.b16 %v814, %v810
      %v1039 = vpack.c.b16 %v815, %v811
      %v1040 = vpack.c.b16 %v816, %v812
      %v1041 = vpack.c.b16 %v817, %v813
      %v1042 = vpack.c.b16 %v822, %v818
      %v1043 = vpack.c.b16 %v823, %v819
      %v1044 = vpack.c.b16 %v824, %v820
      %v1045 = vpack.c.b16 %v825, %v821
      %v1046 = vpack.c.b16 %v830, %v826
      %v1047 = vpack.c.b16 %v831, %v827
      %v1048 = vpack.c.b16 %v832, %v828
      %v1049 = vpack.c.b16 %v833, %v829
      %v1050 = vpack.c.b16 %v838, %v834
      %v1051 = vpack.c.b16 %v839, %v835
      %v1052 = vpack.c.b16 %v840, %v836
      %v1053 = vpack.c.b16 %v841, %v837
      %v1054 = vpack.c.b16 %v846, %v842
      %v1055 = vpack.c.b16 %v847, %v843
      %v1056 = vpack.c.b16 %v848, %v844
      %v1057 = vpack.c.b16 %v849, %v845
      %v1058 = vpack.c.b16 %v854, %v850
      %v1059 = vpack.c.b16 %v855, %v851
      %v1060 = vpack.c.b16 %v856, %v852
      %v1061 = vpack.c.b16 %v857, %v853
      %v1062 = vpack.c.b16 %v862, %v858
      %v1063 = vpack.c.b16 %v863, %v859
      %v1064 = vpack.c.b16 %v864, %v860
      %v1065 = vpack.c.b16 %v865, %v861
      %v1066 = vpack.c.b16 %v870, %v866
      %v1067 = vpack.c.b16 %v871, %v867
      %v1068 = vpack.c.b16 %v872, %v868
      %v1069 = vpack.c.b16 %v873, %v869
      %v1070 = vpack.c.b16 %v878, %v874
      %v1071 = vpack.c.b16 %v879, %v875
      %v1072 = vpack.c.b16 %v880, %v876
      %v1073 = vpack.c.b16 %v881, %v877
      %v1074 = vpack.c.b16 %v886, %v882
      %v1075 = vpack.c.b16 %v887, %v883
      %v1076 = vpack.c.b16 %v888, %v884
      %v1077 = vpack.c.b16 %v889, %v885
      %v1078 = vpack.c.b16 %v894, %v890
      %v1079 = vpack.c.b16 %v895, %v891
      %v1080 = vpack.c.b16 %v896, %v892
      %v1081 = vpack.c.b16 %v897, %v893
      %v1082 = vpack.c.b16 %v902, %v898
      %v1083 = vpack.c.b16 %v903, %v899
      %v1084 = vpack.c.b16 %v904, %v900
      %v1085 = vpack.c.b16 %v905, %v901
      %v1086 = vpack.c.b16 %v910, %v906
      %v1087 = vpack.c.b16 %v911, %v907
      %v1088 = vpack.c.b16 %v912, %v908
      %v1089 = vpack.c.b16 %v913, %v909
      %v1090 = vpack.c.b16 %v918, %v914
      %v1091 = vpack.c.b16 %v919, %v915
      %v1092 = vpack.c.b16 %v920, %v916
      %v1093 = vpack.c.b16 %v921, %v917
      %v1094 = vpack.c.b16 %v926, %v922
      %v1095 = vpack.c.b16 %v927, %v923
      %v1096 = vpack.c.b16 %v928, %v924
      %v1097 = vpack.c.b16 %v929, %v925
      %v1098 = vpack.c.b16 %v934, %v930
      %v1099 = vpack.c.b16 %v935, %v931
      %v1100 = vpack.c.b16 %v936, %v932
      %v1101 = vpack.c.b16 %v937, %v933
      %v1102 = vpack.c.b16 %v942, %v938
      %v1103 = vpack.c.b16 %v943, %v939
      %v1104 = vpack.c.b16 %v944, %v940
      %v1105 = vpack.c.b16 %v945, %v941
      %1266 = vmatprep.subr.bf16.mxu0 %v947
      %1267 = vmatpush1.bf16.msra.mxu0 %v946
      %1268 = vmatprep.subr.bf16.mxu0 %v951
      %1269 = vmatpush1.bf16.msra.mxu0 %v950
      %1270 = vmatprep.subr.bf16.mxu0 %v955
      %1271 = vmatpush1.bf16.msra.mxu0 %v954
      %1272 = vmatprep.subr.bf16.mxu0 %v959
      %1273 = vmatpush1.bf16.msra.mxu0 %v958
      %1274 = vmatprep.subr.bf16.mxu0 %v963
      %1275 = vmatpush1.bf16.msra.mxu0 %v962
      %1276 = vmatprep.subr.bf16.mxu0 %v967
      %1277 = vmatpush1.bf16.msra.mxu0 %v966
      %1278 = vmatprep.subr.bf16.mxu0 %v971
      %1279 = vmatpush1.bf16.msra.mxu0 %v970
      %1280 = vmatprep.subr.bf16.mxu0 %v975
      %1281 = vmatpush1.bf16.msra.mxu0 %v974
      %1282 = vmatprep.subr.bf16.mxu0 %v979
      %1283 = vmatpush1.bf16.msra.mxu0 %v978
      %1284 = vmatprep.subr.bf16.mxu0 %v983
      %1285 = vmatpush1.bf16.msra.mxu0 %v982
      %1286 = vmatprep.subr.bf16.mxu0 %v987
      %1287 = vmatpush1.bf16.msra.mxu0 %v986
      %1288 = vmatprep.subr.bf16.mxu0 %v991
      %1289 = vmatpush1.bf16.msra.mxu0 %v990
      %1290 = vmatprep.subr.bf16.mxu0 %v995
      %1291 = vmatpush1.bf16.msra.mxu0 %v994
      %1292 = vmatprep.subr.bf16.mxu0 %v999
      %1293 = vmatpush1.bf16.msra.mxu0 %v998
      %1294 = vmatprep.subr.bf16.mxu0 %v1003
      %1295 = vmatpush1.bf16.msra.mxu0 %v1002
      %1296 = vmatprep.subr.bf16.mxu0 %v1007
      %1297 = vmatpush1.bf16.msra.mxu0 %v1006
      %1298 = vmatprep.mubr.bf16.mxu0 %v282
      %1299 = vmatmul.mubr.bf16.gmra.mrb[0].mxu0 %v261
      %v1300 = vpop.f32.mrb[0].mxu0
      %v1301 = vadd.f32 %v449, %v1300
      %v1302 = vpop.f32.mrb[0].mxu0
      %v1303 = vadd.f32 %v453, %v1302
      %v1304 = vpop.f32.mrb[0].mxu0
      %v1305 = vadd.f32 %v449, %v1304
      %v1306 = vpop.f32.mrb[0].mxu0
      %v1307 = vadd.f32 %v453, %v1306
      %1308 = vdwg.mxu0
      %1309 = vmatprep.subr.bf16.mxu0 %v1011
      %1310 = vmatpush1.bf16.msra.mxu0 %v1010
      %1311 = vmatprep.subr.bf16.mxu0 %v1015
      %1312 = vmatpush1.bf16.msra.mxu0 %v1014
      %1313 = vmatprep.subr.bf16.mxu0 %v1019
      %1314 = vmatpush1.bf16.msra.mxu0 %v1018
      %1315 = vmatprep.subr.bf16.mxu0 %v1023
      %1316 = vmatpush1.bf16.msra.mxu0 %v1022
      %1317 = vmatprep.subr.bf16.mxu0 %v1027
      %1318 = vmatpush1.bf16.msra.mxu0 %v1026
      %1319 = vmatprep.subr.bf16.mxu0 %v1031
      %1320 = vmatpush1.bf16.msra.mxu0 %v1030
      %1321 = vmatprep.subr.bf16.mxu0 %v1035
      %1322 = vmatpush1.bf16.msra.mxu0 %v1034
      %1323 = vmatprep.subr.bf16.mxu0 %v1039
      %1324 = vmatpush1.bf16.msra.mxu0 %v1038
      %1325 = vmatprep.subr.bf16.mxu0 %v1043
      %1326 = vmatpush1.bf16.msra.mxu0 %v1042
      %1327 = vmatprep.subr.bf16.mxu0 %v1047
      %1328 = vmatpush1.bf16.msra.mxu0 %v1046
      %1329 = vmatprep.subr.bf16.mxu0 %v1051
      %1330 = vmatpush1.bf16.msra.mxu0 %v1050
      %1331 = vmatprep.subr.bf16.mxu0 %v1055
      %1332 = vmatpush1.bf16.msra.mxu0 %v1054
      %1333 = vmatprep.subr.bf16.mxu0 %v1059
      %1334 = vmatpush1.bf16.msra.mxu0 %v1058
      %1335 = vmatprep.subr.bf16.mxu0 %v1063
      %1336 = vmatpush1.bf16.msra.mxu0 %v1062
      %1337 = vmatprep.subr.bf16.mxu0 %v1067
      %1338 = vmatpush1.bf16.msra.mxu0 %v1066
      %1339 = vmatprep.subr.bf16.mxu0 %v1071
      %1340 = vmatpush1.bf16.msra.mxu0 %v1070
      %1341 = vmatprep.mubr.bf16.mxu0 %v277
      %1342 = vmatmul.mubr.bf16.gmra.mrb[0].mxu0 %v268
      %v1343 = vpop.f32.mrb[0].mxu0
      %v1344 = vadd.f32 %v1301, %v1343
      %v1345 = vpop.f32.mrb[0].mxu0
      %v1346 = vadd.f32 %v1303, %v1345
      %v1347 = vpop.f32.mrb[0].mxu0
      %v1348 = vadd.f32 %v1305, %v1347
      %v1349 = vpop.f32.mrb[0].mxu0
      %v1350 = vadd.f32 %v1307, %v1349
      %1351 = vdwg.mxu0
      %1352 = vmatprep.subr.bf16.mxu0 %v1075
      %1353 = vmatpush1.bf16.msra.mxu0 %v1074
      %1354 = vmatprep.subr.bf16.mxu0 %v1079
      %1355 = vmatpush1.bf16.msra.mxu0 %v1078
      %1356 = vmatprep.subr.bf16.mxu0 %v1083
      %1357 = vmatpush1.bf16.msra.mxu0 %v1082
      %1358 = vmatprep.subr.bf16.mxu0 %v1087
      %1359 = vmatpush1.bf16.msra.mxu0 %v1086
      %1360 = vmatprep.subr.bf16.mxu0 %v1091
      %1361 = vmatpush1.bf16.msra.mxu0 %v1090
      %1362 = vmatprep.subr.bf16.mxu0 %v1095
      %1363 = vmatpush1.bf16.msra.mxu0 %v1094
      %1364 = vmatprep.subr.bf16.mxu0 %v1099
      %1365 = vmatpush1.bf16.msra.mxu0 %v1098
      %1366 = vmatprep.subr.bf16.mxu0 %v1103
      %1367 = vmatpush1.bf16.msra.mxu0 %v1102
      %1368 = vmatprep.subr.bf16.mxu0 0
      %1369 = vmatpush1.bf16.msra.mxu0 0
      %1370 = vmatprep.subr.bf16.mxu0 0
      %1371 = vmatpush1.bf16.msra.mxu0 0
      %1372 = vmatprep.subr.bf16.mxu0 0
      %1373 = vmatpush1.bf16.msra.mxu0 0
      %1374 = vmatprep.subr.bf16.mxu0 0
      %1375 = vmatpush1.bf16.msra.mxu0 0
      %1376 = vmatprep.subr.bf16.mxu0 0
      %1377 = vmatpush1.bf16.msra.mxu0 0
      %1378 = vmatprep.subr.bf16.mxu0 0
      %1379 = vmatpush1.bf16.msra.mxu0 0
      %1380 = vmatprep.subr.bf16.mxu0 0
      %1381 = vmatpush1.bf16.msra.mxu0 0
      %1382 = vmatprep.subr.bf16.mxu0 0
      %1383 = vmatpush1.bf16.msra.mxu0 0
      %1384 = vmatprep.mubr.bf16.mxu0 0
      %1385 = vmatmul.mubr.bf16.gmra.mrb[0].mxu0 %v276
      %v1386 = vpop.f32.mrb[0].mxu0
      %v1387 = vadd.f32 %v1344, %v1386
      %v1388 = vpop.f32.mrb[0].mxu0
      %v1389 = vadd.f32 %v1346, %v1388
      %v1390 = vpop.f32.mrb[0].mxu0
      %v1391 = vadd.f32 %v1348, %v1390
      %v1392 = vpop.f32.mrb[0].mxu0
      %v1393 = vadd.f32 %v1350, %v1392
      %1394 = vdwg.mxu0
      %1395 = vmatprep.subr.bf16.mxu0 %v949
      %1396 = vmatpush1.bf16.msra.mxu0 %v948
      %1397 = vmatprep.subr.bf16.mxu0 %v953
      %1398 = vmatpush1.bf16.msra.mxu0 %v952
      %1399 = vmatprep.subr.bf16.mxu0 %v957
      %1400 = vmatpush1.bf16.msra.mxu0 %v956
      %1401 = vmatprep.subr.bf16.mxu0 %v961
      %1402 = vmatpush1.bf16.msra.mxu0 %v960
      %1403 = vmatprep.subr.bf16.mxu0 %v965
      %1404 = vmatpush1.bf16.msra.mxu0 %v964
      %1405 = vmatprep.subr.bf16.mxu0 %v969
      %1406 = vmatpush1.bf16.msra.mxu0 %v968
      %1407 = vmatprep.subr.bf16.mxu0 %v973
      %1408 = vmatpush1.bf16.msra.mxu0 %v972
      %1409 = vmatprep.subr.bf16.mxu0 %v977
      %1410 = vmatpush1.bf16.msra.mxu0 %v976
      %1411 = vmatprep.subr.bf16.mxu0 %v981
      %1412 = vmatpush1.bf16.msra.mxu0 %v980
      %1413 = vmatprep.subr.bf16.mxu0 %v985
      %1414 = vmatpush1.bf16.msra.mxu0 %v984
      %1415 = vmatprep.subr.bf16.mxu0 %v989
      %1416 = vmatpush1.bf16.msra.mxu0 %v988
      %1417 = vmatprep.subr.bf16.mxu0 %v993
      %1418 = vmatpush1.bf16.msra.mxu0 %v992
      %1419 = vmatprep.subr.bf16.mxu0 %v997
      %1420 = vmatpush1.bf16.msra.mxu0 %v996
      %1421 = vmatprep.subr.bf16.mxu0 %v1001
      %1422 = vmatpush1.bf16.msra.mxu0 %v1000
      %1423 = vmatprep.subr.bf16.mxu0 %v1005
      %1424 = vmatpush1.bf16.msra.mxu0 %v1004
      %1425 = vmatprep.subr.bf16.mxu0 %v1009
      %1426 = vmatpush1.bf16.msra.mxu0 %v1008
      %1427 = vmatprep.mubr.bf16.mxu0 %v282
      %1428 = vmatmul.mubr.bf16.gmra.mrb[0].mxu0 %v261
      %v1429 = vpop.f32.mrb[0].mxu0
      %v1430 = vadd.f32 %v457, %v1429
      %v1431 = vpop.f32.mrb[0].mxu0
      %v1432 = vadd.f32 %v461, %v1431
      %v1433 = vpop.f32.mrb[0].mxu0
      %v1434 = vadd.f32 %v457, %v1433
      %v1435 = vpop.f32.mrb[0].mxu0
      %v1436 = vadd.f32 %v461, %v1435
      %1437 = vdwg.mxu0
      %1438 = vmatprep.subr.bf16.mxu0 %v1013
      %1439 = vmatpush1.bf16.msra.mxu0 %v1012
      %1440 = vmatprep.subr.bf16.mxu0 %v1017
      %1441 = vmatpush1.bf16.msra.mxu0 %v1016
      %1442 = vmatprep.subr.bf16.mxu0 %v1021
      %1443 = vmatpush1.bf16.msra.mxu0 %v1020
      %1444 = vmatprep.subr.bf16.mxu0 %v1025
      %1445 = vmatpush1.bf16.msra.mxu0 %v1024
      %1446 = vmatprep.subr.bf16.mxu0 %v1029
      %1447 = vmatpush1.bf16.msra.mxu0 %v1028
      %1448 = vmatprep.subr.bf16.mxu0 %v1033
      %1449 = vmatpush1.bf16.msra.mxu0 %v1032
      %1450 = vmatprep.subr.bf16.mxu0 %v1037
      %1451 = vmatpush1.bf16.msra.mxu0 %v1036
      %1452 = vmatprep.subr.bf16.mxu0 %v1041
      %1453 = vmatpush1.bf16.msra.mxu0 %v1040
      %1454 = vmatprep.subr.bf16.mxu0 %v1045
      %1455 = vmatpush1.bf16.msra.mxu0 %v1044
      %1456 = vmatprep.subr.bf16.mxu0 %v1049
      %1457 = vmatpush1.bf16.msra.mxu0 %v1048
      %1458 = vmatprep.subr.bf16.mxu0 %v1053
      %1459 = vmatpush1.bf16.msra.mxu0 %v1052
      %1460 = vmatprep.subr.bf16.mxu0 %v1057
      %1461 = vmatpush1.bf16.msra.mxu0 %v1056
      %1462 = vmatprep.subr.bf16.mxu0 %v1061
      %1463 = vmatpush1.bf16.msra.mxu0 %v1060
      %1464 = vmatprep.subr.bf16.mxu0 %v1065
      %1465 = vmatpush1.bf16.msra.mxu0 %v1064
      %1466 = vmatprep.subr.bf16.mxu0 %v1069
      %1467 = vmatpush1.bf16.msra.mxu0 %v1068
      %1468 = vmatprep.subr.bf16.mxu0 %v1073
      %1469 = vmatpush1.bf16.msra.mxu0 %v1072
      %1470 = vmatprep.mubr.bf16.mxu0 %v277
      %1471 = vmatmul.mubr.bf16.gmra.mrb[0].mxu0 %v268
      %v1472 = vpop.f32.mrb[0].mxu0
      %v1473 = vadd.f32 %v1430, %v1472
      %v1474 = vpop.f32.mrb[0].mxu0
      %v1475 = vadd.f32 %v1432, %v1474
      %v1476 = vpop.f32.mrb[0].mxu0
      %v1477 = vadd.f32 %v1434, %v1476
      %v1478 = vpop.f32.mrb[0].mxu0
      %v1479 = vadd.f32 %v1436, %v1478
      %1480 = vdwg.mxu0
      %1481 = vmatprep.subr.bf16.mxu0 %v1077
      %1482 = vmatpush1.bf16.msra.mxu0 %v1076
      %1483 = vmatprep.subr.bf16.mxu0 %v1081
      %1484 = vmatpush1.bf16.msra.mxu0 %v1080
      %1485 = vmatprep.subr.bf16.mxu0 %v1085
      %1486 = vmatpush1.bf16.msra.mxu0 %v1084
      %1487 = vmatprep.subr.bf16.mxu0 %v1089
      %1488 = vmatpush1.bf16.msra.mxu0 %v1088
      %1489 = vmatprep.subr.bf16.mxu0 %v1093
      %1490 = vmatpush1.bf16.msra.mxu0 %v1092
      %1491 = vmatprep.subr.bf16.mxu0 %v1097
      %1492 = vmatpush1.bf16.msra.mxu0 %v1096
      %1493 = vmatprep.subr.bf16.mxu0 %v1101
      %1494 = vmatpush1.bf16.msra.mxu0 %v1100
      %1495 = vmatprep.subr.bf16.mxu0 %v1105
      %1496 = vmatpush1.bf16.msra.mxu0 %v1104
      %1497 = vmatprep.subr.bf16.mxu0 0
      %1498 = vmatpush1.bf16.msra.mxu0 0
      %1499 = vmatprep.subr.bf16.mxu0 0
      %1500 = vmatpush1.bf16.msra.mxu0 0
      %1501 = vmatprep.subr.bf16.mxu0 0
      %1502 = vmatpush1.bf16.msra.mxu0 0
      %1503 = vmatprep.subr.bf16.mxu0 0
      %1504 = vmatpush1.bf16.msra.mxu0 0
      %1505 = vmatprep.subr.bf16.mxu0 0
      %1506 = vmatpush1.bf16.msra.mxu0 0
      %1507 = vmatprep.subr.bf16.mxu0 0
      %1508 = vmatpush1.bf16.msra.mxu0 0
      %1509 = vmatprep.subr.bf16.mxu0 0
      %1510 = vmatpush1.bf16.msra.mxu0 0
      %1511 = vmatprep.subr.bf16.mxu0 0
      %1512 = vmatpush1.bf16.msra.mxu0 0
      %1513 = vmatprep.mubr.bf16.mxu0 0
      %1514 = vmatmul.mubr.bf16.gmra.mrb[0].mxu0 %v276
      %v1515 = vpop.f32.mrb[0].mxu0
      %v1516 = vadd.f32 %v1473, %v1515
      %v1517 = vpop.f32.mrb[0].mxu0
      %v1518 = vadd.f32 %v1475, %v1517
      %v1519 = vpop.f32.mrb[0].mxu0
      %v1520 = vadd.f32 %v1477, %v1519
      %v1521 = vpop.f32.mrb[0].mxu0
      %v1522 = vadd.f32 %v1479, %v1521
      %1523 = vdwg.mxu0
      %v1524 = vmul.f32 %v1387, 0.5
      %v1525 = vmul.f32 %v1391, 0.5
      %v1526 = vtanh.pop %v1524
      %v1527 = vtanh.pop %v1525
      %v1528 = vadd.f32 %v1526, 1.0
      %v1529 = vadd.f32 %v1527, 1.0
      %v1530 = vmul.f32 %v1528, 0.5
      %v1531 = vmul.f32 %v1529, 0.5
      %v1532 = vmul.f32 %v1389, 0.5
      %v1533 = vmul.f32 %v1393, 0.5
      %v1534 = vtanh.pop %v1532
      %v1535 = vtanh.pop %v1533
      %v1536 = vadd.f32 %v1534, 1.0
      %v1537 = vadd.f32 %v1535, 1.0
      %v1538 = vmul.f32 %v1536, 0.5
      %v1539 = vmul.f32 %v1537, 0.5
      %v1540 = vmul.f32 %v1516, 0.5
      %v1541 = vmul.f32 %v1520, 0.5
      %v1542 = vtanh.pop %v1540
      %v1543 = vtanh.pop %v1541
      %v1544 = vadd.f32 %v1542, 1.0
      %v1545 = vadd.f32 %v1543, 1.0
      %v1546 = vmul.f32 %v1544, 0.5
      %v1547 = vmul.f32 %v1545, 0.5
      %v1548 = vtanh.pop %v1518
      %v1549 = vtanh.pop %v1522
      %v1550 = vld [vmem:[#allocation3] sm:$0xff]
      %v1551 = vld [vmem:[#allocation3 + $0x8] sm:$0xff]
      %v1552 = vmul.f32 %v1530, %v1550
      %v1553 = vmul.f32 %v1531, %v1551
      %v1554 = vmul.f32 %v1538, %v1548
      %v1555 = vmul.f32 %v1539, %v1549
      %v1556 = vadd.f32 %v1552, %v1554
      %v1557 = vadd.f32 %v1553, %v1555
      %v1558 = vtanh.pop %v1556
      %v1559 = vtanh.pop %v1557
      %v1560 = vmul.f32 %v1546, %v1558
      %v1561 = vmul.f32 %v1547, %v1559
      %1562 = vst [vmem:[#allocation3] sm:$0xff] %v1556
      %1563 = vst [vmem:[#allocation3 + $0x8] sm:$0xff] %v1557
      %1564 = vst [vmem:[#allocation2] sm:$0xff] %v1560
      %1565 = vst [vmem:[#allocation2 + $0x8] sm:$0xff] %v1561
      %v1566 = vadd.f32 %v1560, %v244
      %v1567 = vadd.f32 %v1561, %v245
      %v1568 = vpack.c.bf16 %v1567, %v1566
      %v1570 = vunpack.c.l.b16 %v1568
      %v1571 = vunpack.c.h.b16 %v1568
      %v1572 = vpack.c.b16 %v1570, %v1570
      %v1573 = vpack.c.b16 %v1571, %v1571
      %1576 = vst [vmem:[%s208] sm:$0xf] %v1572
      %1577 = vst [vmem:[%s208 + $0x4] sm:$0xf] %v1573
      %s1578 = smul.u32 2, %s18
      %p1579 = scmp.lt.s32.totalorder %s19, 7
      %s1580 = scalar_select %p1579, %s19, 7
      %p1581 = scmp.lt.s32.totalorder %s1578, 1
      %s1582 = scalar_select %p1581, %s1578, 1
      %s1583 = smul.addr %s1580, 2
      %s1584 = sadd.s32 %s1582, %s1583
      %s1585 = smul.addr %s1584, 4
      %s1586 = scalar_lea.vmem %s3, %s1585
      // Predicated region
      $region37: #{pixel_rnn_forward.4} parent=31 // pred_check
        %p1587 = pneg %p116
      $region38: #{pixel_rnn_forward.4} parent=31 // pred_check_branch
        %1589 = sbr.rel (%p1587) target = $region40
      $region39: #{pixel_rnn_forward.4} parent=31 // pred_region
        %s1590 = smul.u32 2, %s18
      $region40: #{pixel_rnn_forward.4} parent=31 // pred_fallthru
        _
    $region32: #{pixel_rnn_forward.4} parent=5 // pred_fallthru
      _
    %p1591 = scmp.le.s32.totalorder 2, %s9
    // Predicated region
    $region41: #{pixel_rnn_forward.4} parent=5 // pred_check
      %p1592 = pneg %p1591
    $region42: #{pixel_rnn_forward.4} parent=5 // pred_check_branch
      %1594 = sbr.rel (%p1592) target = $region44
    $region43: #{pixel_rnn_forward.4} parent=5 // pred_region
      %s1595 = ssub.s32 %s9, 2
      // Predicated region
      $region45: #{pixel_rnn_forward.4} parent=43 // pred_check
        %p1596 = pneg %p122
      $region46: #{pixel_rnn_forward.4} parent=43 // pred_check_branch
        %1598 = sbr.rel (%p1596) target = $region48
      $region47: #{pixel_rnn_forward.4} parent=43 // pred_region
        %s1599 = smul.u32 2, %s20
        %p1600 = scmp.lt.s32.totalorder %s21, 7
        %s1601 = scalar_select %p1600, %s21, 7
        %p1602 = scmp.lt.s32.totalorder %s1599, 1
        %s1603 = scalar_select %p1602, %s1599, 1
        %s1604 = smul.addr %s1601, 2
        %s1605 = sadd.s32 %s1603, %s1604
        %s1606 = smul.addr %s1605, 4
        %s1607 = scalar_lea.vmem %s3, %s1606
      $region48: #{pixel_rnn_forward.4} parent=43 // pred_fallthru
        _
    $region44: #{pixel_rnn_forward.4} parent=5 // pred_fallthru
      _
  $region6: #{pixel_rnn_forward.4} parent=0 // loop_footer
    %s13 = sadd.s32 1, %s9
  $region7: #{pixel_rnn_forward.4} parent=0 // loop_footer_branch
    %8 = sbr.rel target = $region3
  $region8: #{pixel_rnn_forward.4} parent=0 // loop_exit
    _

</llo_original>
